<compile_context>
chip_gen: v7x
topology: tpu7x:2x2x1
jax: 0.10.0
libtpu: 0.0.40
codegen_flags: <defaults>
</compile_context>

<pallas_src>
import jax
import jax.numpy as jnp
from jax.experimental import pallas as pl
from jax.experimental.pallas import tpu as pltpu


LANE = 128


def _round_up(x, m):
    return (x + m - 1) // m * m


# ----------------------------- Pallas kernel -------------------------------

def _conv_bn_relu_pool_kernel(a_ref, b_ref, shift_ref, o_ref):
    """Fused conv-as-matmul + folded-BN shift + ReLU + 2x2 max-pool epilogue.

    a_ref:     (1, 4, hh*wh, kpad)  bf16  im2col patches; axis 1 indexes the
                                          four 2x2-pool phases, rows are in
                                          (hh, wh) row-major order.
    b_ref:     (kpad, cpad)         bf16  BN-folded conv weights (resident).
    shift_ref: (1, cpad)            f32   BN-folded bias.
    o_ref:     (1, hh, wh, cpad)    bf16  pooled activations (lane-dense).
    """
    _, hh, wh, c = o_ref.shape
    b = b_ref[...]
    shift = shift_ref[...]
    best = None
    for p in range(4):  # static unroll over the four 2x2-pool phases
        acc = jnp.dot(a_ref[0, p], b, preferred_element_type=jnp.float32)
        y = jnp.maximum(acc + shift, 0.0)          # f32 epilogue (v5e-safe)
        best = y if best is None else jnp.maximum(best, y)
    o_ref[...] = best.reshape(1, hh, wh, c).astype(o_ref.dtype)


# ------------------------------ layer wrapper -------------------------------

def conv_bn_relu_pool(x, w_hwio, conv_b, gamma, beta, mean, var, eps=1e-5):
    """Conv2d(k=5, pad=2) + BatchNorm(eval) + ReLU + MaxPool(2), Pallas-fused.

    x: (N, H, W, Cin) NHWC.  Returns (N, H//2, W//2, 128) bf16 activations
    (channels zero-padded to a full lane) plus the real channel count; the
    caller slices the padding off.
    """
    n, h, w, cin = x.shape
    kh, kw, _, cout = w_hwio.shape
    assert h % 2 == 0 and w % 2 == 0, "2x2 pool fusion requires even H and W"
    hh, wh = h // 2, w // 2
    k = kh * kw * cin
    # Pad K to a lane multiple when it is at least one lane wide (layer2:
    # 400 -> 512 for aligned A loads); tiny K (layer1: 25) stays unpadded.
    kpad = _round_up(k, LANE) if k >= LANE else k
    cpad = _round_up(cout, LANE)

    # Fold eval-mode BatchNorm into the conv weights / bias.
    scale = gamma / jnp.sqrt(var + eps)
    w_folded = w_hwio.reshape(k, cout) * scale[None, :]
    shift = (conv_b - mean) * scale + beta
    w_folded = jnp.pad(w_folded, ((0, kpad - k), (0, cpad - cout)))
    w_folded = w_folded.astype(jnp.bfloat16)
    shift = jnp.pad(shift, (0, cpad - cout)).reshape(1, cpad).astype(jnp.float32)

    # im2col in XLA glue, split into the four 2x2-pool phases (bf16 operands).
    # TODO(synk): move this inside the kernel (haloed VMEM block + shifted
    # matmuls) to avoid the patch-matrix HBM expansion at large batch.
    xb = x.astype(jnp.bfloat16)
    pad = (kh - 1) // 2
    xp = jnp.pad(xb, ((0, 0), (pad, pad), (pad, pad), (0, 0)))
    cols = [xp[:, i:i + h, j:j + w, :] for i in range(kh) for j in range(kw)]
    patches = jnp.concatenate(cols, axis=-1)                 # (N, H, W, k)
    phases = jnp.stack(
        [patches[:, di::2, dj::2, :] for di in (0, 1) for dj in (0, 1)],
        axis=1)                                              # (N, 4, hh, wh, k)
    phases = phases.reshape(n, 4, hh * wh, k)
    if kpad != k:
        phases = jnp.pad(phases, ((0, 0), (0, 0), (0, 0), (0, kpad - k)))

    out = pl.pallas_call(
        _conv_bn_relu_pool_kernel,
        out_shape=jax.ShapeDtypeStruct((n, hh, wh, cpad), jnp.bfloat16),
        grid=(n,),
        in_specs=[
            pl.BlockSpec((1, 4, hh * wh, kpad), lambda i: (i, 0, 0, 0)),
            pl.BlockSpec((kpad, cpad), lambda i: (0, 0)),
            pl.BlockSpec((1, cpad), lambda i: (0, 0)),
        ],
        out_specs=pl.BlockSpec((1, hh, wh, cpad), lambda i: (i, 0, 0, 0)),
        compiler_params=pltpu.CompilerParams(
            dimension_semantics=("parallel",)),
    )(phases, w_folded, shift)
    return out, cout


# ------------------------------- forward pass -------------------------------

def cnn_fashion_mnist_forward(x_nchw, p):
    n = x_nchw.shape[0]
    x = jnp.transpose(x_nchw, (0, 2, 3, 1))                     # NCHW -> NHWC

    h1, c1 = conv_bn_relu_pool(x, p["w1"], p["b1"], p["g1"], p["be1"],
                               p["m1"], p["v1"])
    h1 = h1[..., :c1]                                           # (N,14,14,16)

    h2, c2 = conv_bn_relu_pool(h1, p["w2"], p["b2"], p["g2"], p["be2"],
                               p["m2"], p["v2"])
    h2 = h2[..., :c2]                                           # (N,7,7,32)

    # PyTorch flattens NCHW: (N, 32, 7, 7) -> (N, 1568).
    flat = jnp.transpose(h2, (0, 3, 1, 2)).reshape(n, -1).astype(jnp.float32)
    # FC in XLA: at small batch it is weight-DMA / overhead bound, so a
    # dedicated Pallas call only adds launch + pad/slice glue cost.
    # TODO(synk): at large batch fuse this into the layer-2 kernel tail.
    out = jnp.dot(flat, p["wfc"], precision=jax.lax.Precision.HIGHEST)
    return out + p["bfc"]                                       # (N, 10) f32


# --------------------------- pure-JAX reference ----------------------------

def reference_forward(x_nchw, p, eps=1e-5):
    hi = jax.lax.Precision.HIGHEST

    def layer(x, w, b, g, be, m, v):
        y = jax.lax.conv_general_dilated(
            x, w, (1, 1), "SAME",
            dimension_numbers=("NHWC", "HWIO", "NHWC"), precision=hi) + b
        scale = g / jnp.sqrt(v + eps)
        y = (y - m) * scale + be
        y = jnp.maximum(y, 0.0)
        return jax.lax.reduce_window(y, -jnp.inf, jax.lax.max,
                                     (1, 2, 2, 1), (1, 2, 2, 1), "VALID")

    x = jnp.transpose(x_nchw, (0, 2, 3, 1))
    h1 = layer(x, p["w1"], p["b1"], p["g1"], p["be1"], p["m1"], p["v1"])
    h2 = layer(h1, p["w2"], p["b2"], p["g2"], p["be2"], p["m2"], p["v2"])
    flat = jnp.transpose(h2, (0, 3, 1, 2)).reshape(x_nchw.shape[0], -1)
    return jnp.dot(flat, p["wfc"], precision=hi) + p["bfc"]


# ---------------------------------- main -----------------------------------

def make_params(key):
    ks = jax.random.split(key, 16)
    f32 = jnp.float32
    return {
        # layer1: Conv2d(1, 16, k=5, pad=2) + BatchNorm2d(16)
        "w1": 0.1 * jax.random.normal(ks[0], (5, 5, 1, 16), f32),
        "b1": 0.1 * jax.random.normal(ks[1], (16,), f32),
        "g1": 1.0 + 0.1 * jax.random.normal(ks[2], (16,), f32),
        "be1": 0.1 * jax.random.normal(ks[3], (16,), f32),
        "m1": 0.1 * jax.random.normal(ks[4], (16,), f32),
        "v1": 0.5 + jnp.abs(jax.random.normal(ks[5], (16,), f32)),
        # layer2: Conv2d(16, 32, k=5, pad=2) + BatchNorm2d(32)
        "w2": 0.05 * jax.random.normal(ks[6], (5, 5, 16, 32), f32),
        "b2": 0.1 * jax.random.normal(ks[7], (32,), f32),
        "g2": 1.0 + 0.1 * jax.random.normal(ks[8], (32,), f32),
        "be2": 0.1 * jax.random.normal(ks[9], (32,), f32),
        "m2": 0.1 * jax.random.normal(ks[10], (32,), f32),
        "v2": 0.5 + jnp.abs(jax.random.normal(ks[11], (32,), f32)),
        # fc: Linear(7*7*32, 10); stored already transposed (in_features, out)
        "wfc": 0.05 * jax.random.normal(ks[12], (7 * 7 * 32, 10), f32),
        "bfc": 0.1 * jax.random.normal(ks[13], (10,), f32),
    }


if __name__ == "__main__":
    key = jax.random.PRNGKey(0)
    k_params, k_x = jax.random.split(key)
    params = make_params(k_params)
    # Module hard-codes fc = Linear(7*7*32, 10) => spatial must be 28x28, cin=1.
    x = jax.random.normal(k_x, (2, 1, 28, 28), jnp.float32)

    out = jax.jit(cnn_fashion_mnist_forward)(x, params)
    out = jax.block_until_ready(out)
    assert out.shape == (2, 10) and out.dtype == jnp.float32

    ref = jax.block_until_ready(reference_forward(x, params))
    # Tolerance sized for bf16 conv operands / activations vs the f32 reference.
    assert jnp.allclose(out, ref, atol=1e-1, rtol=1e-1), (
        "Pallas output mismatch vs reference")

    print("KERNEL_OK")
</pallas_src>

<mosaic_0001>
module attributes {stable_mosaic.version = 11 : i64} {
  func.func @_conv_bn_relu_pool_kernel(%arg0: i32, %arg1: memref<1x4x196x25xbf16, #tpu.memory_space<vmem>>, %arg2: memref<25x128xbf16, #tpu.memory_space<vmem>>, %arg3: memref<1x128xf32, #tpu.memory_space<vmem>>, %arg4: memref<1x14x14x128xbf16, #tpu.memory_space<vmem>>) attributes {dimension_semantics = [#tpu.dimension_semantics<parallel>], iteration_bounds = array<i64: 2>, scalar_prefetch = 0 : i64, scratch_operands = 0 : i64, tpu.core_type = #tpu.core_type<tc>, window_params = [{transform_indices = @transform_0, window_bounds = array<i64: 1, 4, 196, 25>}, {pipeline_mode = #tpu.pipeline_mode<synchronous>, transform_indices = @transform_1, window_bounds = array<i64: 25, 128>}, {pipeline_mode = #tpu.pipeline_mode<synchronous>, transform_indices = @transform_2, window_bounds = array<i64: 1, 128>}, {transform_indices = @transform_3, window_bounds = array<i64: 1, 14, 14, 128>}]} {
    %c0 = arith.constant 0 : index
    %c0_0 = arith.constant 0 : index
    %0 = vector.load %arg2[%c0, %c0_0] : memref<25x128xbf16, #tpu.memory_space<vmem>>, vector<25x128xbf16>
    %c0_1 = arith.constant 0 : index
    %c0_2 = arith.constant 0 : index
    %1 = vector.load %arg3[%c0_1, %c0_2] : memref<1x128xf32, #tpu.memory_space<vmem>>, vector<1x128xf32>
    %c0_3 = arith.constant 0 : index
    %c0_4 = arith.constant 0 : index
    %c0_5 = arith.constant 0 : index
    %c0_6 = arith.constant 0 : index
    %2 = vector.load %arg1[%c0_3, %c0_4, %c0_5, %c0_6] : memref<1x4x196x25xbf16, #tpu.memory_space<vmem>>, vector<1x1x196x25xbf16>
    %3 = vector.shape_cast %2 : vector<1x1x196x25xbf16> to vector<196x25xbf16>
    %cst = arith.constant dense<0.000000e+00> : vector<196x128xf32>
    %4 = tpu.matmul %3, %0, %cst {dimension_numbers = #tpu.dot_dimension_numbers<[1], [0], [0], [1], [0, 0, 1, 1], [], []>} : vector<196x25xbf16>, vector<25x128xbf16>, vector<196x128xf32> -> vector<196x128xf32>
    %5 = vector.broadcast %1 : vector<1x128xf32> to vector<196x128xf32>
    %6 = arith.addf %4, %5 : vector<196x128xf32>
    %cst_7 = arith.constant 0.000000e+00 : f32
    %7 = vector.broadcast %cst_7 : f32 to vector<196x128xf32>
    %8 = arith.maximumf %6, %7 : vector<196x128xf32>
    %c0_8 = arith.constant 0 : index
    %c1 = arith.constant 1 : index
    %c0_9 = arith.constant 0 : index
    %c0_10 = arith.constant 0 : index
    %9 = vector.load %arg1[%c0_8, %c1, %c0_9, %c0_10] : memref<1x4x196x25xbf16, #tpu.memory_space<vmem>>, vector<1x1x196x25xbf16>
    %10 = vector.shape_cast %9 : vector<1x1x196x25xbf16> to vector<196x25xbf16>
    %cst_11 = arith.constant dense<0.000000e+00> : vector<196x128xf32>
    %11 = tpu.matmul %10, %0, %cst_11 {dimension_numbers = #tpu.dot_dimension_numbers<[1], [0], [0], [1], [0, 0, 1, 1], [], []>} : vector<196x25xbf16>, vector<25x128xbf16>, vector<196x128xf32> -> vector<196x128xf32>
    %12 = vector.broadcast %1 : vector<1x128xf32> to vector<196x128xf32>
    %13 = arith.addf %11, %12 : vector<196x128xf32>
    %cst_12 = arith.constant 0.000000e+00 : f32
    %14 = vector.broadcast %cst_12 : f32 to vector<196x128xf32>
    %15 = arith.maximumf %13, %14 : vector<196x128xf32>
    %16 = arith.maximumf %8, %15 : vector<196x128xf32>
    %c0_13 = arith.constant 0 : index
    %c2 = arith.constant 2 : index
    %c0_14 = arith.constant 0 : index
    %c0_15 = arith.constant 0 : index
    %17 = vector.load %arg1[%c0_13, %c2, %c0_14, %c0_15] : memref<1x4x196x25xbf16, #tpu.memory_space<vmem>>, vector<1x1x196x25xbf16>
    %18 = vector.shape_cast %17 : vector<1x1x196x25xbf16> to vector<196x25xbf16>
    %cst_16 = arith.constant dense<0.000000e+00> : vector<196x128xf32>
    %19 = tpu.matmul %18, %0, %cst_16 {dimension_numbers = #tpu.dot_dimension_numbers<[1], [0], [0], [1], [0, 0, 1, 1], [], []>} : vector<196x25xbf16>, vector<25x128xbf16>, vector<196x128xf32> -> vector<196x128xf32>
    %20 = vector.broadcast %1 : vector<1x128xf32> to vector<196x128xf32>
    %21 = arith.addf %19, %20 : vector<196x128xf32>
    %cst_17 = arith.constant 0.000000e+00 : f32
    %22 = vector.broadcast %cst_17 : f32 to vector<196x128xf32>
    %23 = arith.maximumf %21, %22 : vector<196x128xf32>
    %24 = arith.maximumf %16, %23 : vector<196x128xf32>
    %c0_18 = arith.constant 0 : index
    %c3 = arith.constant 3 : index
    %c0_19 = arith.constant 0 : index
    %c0_20 = arith.constant 0 : index
    %25 = vector.load %arg1[%c0_18, %c3, %c0_19, %c0_20] : memref<1x4x196x25xbf16, #tpu.memory_space<vmem>>, vector<1x1x196x25xbf16>
    %26 = vector.shape_cast %25 : vector<1x1x196x25xbf16> to vector<196x25xbf16>
    %cst_21 = arith.constant dense<0.000000e+00> : vector<196x128xf32>
    %27 = tpu.matmul %26, %0, %cst_21 {dimension_numbers = #tpu.dot_dimension_numbers<[1], [0], [0], [1], [0, 0, 1, 1], [], []>} : vector<196x25xbf16>, vector<25x128xbf16>, vector<196x128xf32> -> vector<196x128xf32>
    %28 = vector.broadcast %1 : vector<1x128xf32> to vector<196x128xf32>
    %29 = arith.addf %27, %28 : vector<196x128xf32>
    %cst_22 = arith.constant 0.000000e+00 : f32
    %30 = vector.broadcast %cst_22 : f32 to vector<196x128xf32>
    %31 = arith.maximumf %29, %30 : vector<196x128xf32>
    %32 = arith.maximumf %24, %31 : vector<196x128xf32>
    %33 = vector.shape_cast %32 : vector<196x128xf32> to vector<1x14x14x128xf32>
    %34 = arith.truncf %33 : vector<1x14x14x128xf32> to vector<1x14x14x128xbf16>
    %c0_23 = arith.constant 0 : index
    %c0_24 = arith.constant 0 : index
    %c0_25 = arith.constant 0 : index
    %c0_26 = arith.constant 0 : index
    %35 = vector.load %arg4[%c0_23, %c0_24, %c0_25, %c0_26] : memref<1x14x14x128xbf16, #tpu.memory_space<vmem>>, vector<1x14x14x128xbf16>
    tpu.vector_store %arg4[%c0_23, %c0_24, %c0_25, %c0_26], %34 {strides = array<i32>} : memref<1x14x14x128xbf16, #tpu.memory_space<vmem>>, vector<1x14x14x128xbf16>,
    return
  }
  func.func @transform_0(%arg0: i32) -> (i32, i32, i32, i32) {
    %c0_i32 = arith.constant 0 : i32
    %c0_i32_0 = arith.constant 0 : i32
    %c0_i32_1 = arith.constant 0 : i32
    %c0_i32_2 = arith.constant 0 : i32
    return %arg0, %c0_i32, %c0_i32_0, %c0_i32_1 : i32, i32, i32, i32
  }
  func.func @transform_1(%arg0: i32) -> (i32, i32) {
    %c0_i32 = arith.constant 0 : i32
    %c0_i32_0 = arith.constant 0 : i32
    %c0_i32_1 = arith.constant 0 : i32
    return %c0_i32, %c0_i32_0 : i32, i32
  }
  func.func @transform_2(%arg0: i32) -> (i32, i32) {
    %c0_i32 = arith.constant 0 : i32
    %c0_i32_0 = arith.constant 0 : i32
    %c0_i32_1 = arith.constant 0 : i32
    return %c0_i32, %c0_i32_0 : i32, i32
  }
  func.func @transform_3(%arg0: i32) -> (i32, i32, i32, i32) {
    %c0_i32 = arith.constant 0 : i32
    %c0_i32_0 = arith.constant 0 : i32
    %c0_i32_1 = arith.constant 0 : i32
    %c0_i32_2 = arith.constant 0 : i32
    return %arg0, %c0_i32, %c0_i32_0, %c0_i32_1 : i32, i32, i32, i32
  }
}

module attributes {stable_mosaic.version = 11 : i64} {
  func.func @_conv_bn_relu_pool_kernel(%arg0: i32, %arg1: memref<1x4x49x512xbf16, #tpu.memory_space<vmem>>, %arg2: memref<512x128xbf16, #tpu.memory_space<vmem>>, %arg3: memref<1x128xf32, #tpu.memory_space<vmem>>, %arg4: memref<1x7x7x128xbf16, #tpu.memory_space<vmem>>) attributes {dimension_semantics = [#tpu.dimension_semantics<parallel>], iteration_bounds = array<i64: 2>, scalar_prefetch = 0 : i64, scratch_operands = 0 : i64, tpu.core_type = #tpu.core_type<tc>, window_params = [{transform_indices = @transform_0, window_bounds = array<i64: 1, 4, 49, 512>}, {pipeline_mode = #tpu.pipeline_mode<synchronous>, transform_indices = @transform_1, window_bounds = array<i64: 512, 128>}, {pipeline_mode = #tpu.pipeline_mode<synchronous>, transform_indices = @transform_2, window_bounds = array<i64: 1, 128>}, {transform_indices = @transform_3, window_bounds = array<i64: 1, 7, 7, 128>}]} {
    %c0 = arith.constant 0 : index
    %c0_0 = arith.constant 0 : index
    %0 = vector.load %arg2[%c0, %c0_0] : memref<512x128xbf16, #tpu.memory_space<vmem>>, vector<512x128xbf16>
    %c0_1 = arith.constant 0 : index
    %c0_2 = arith.constant 0 : index
    %1 = vector.load %arg3[%c0_1, %c0_2] : memref<1x128xf32, #tpu.memory_space<vmem>>, vector<1x128xf32>
    %c0_3 = arith.constant 0 : index
    %c0_4 = arith.constant 0 : index
    %c0_5 = arith.constant 0 : index
    %c0_6 = arith.constant 0 : index
    %2 = vector.load %arg1[%c0_3, %c0_4, %c0_5, %c0_6] : memref<1x4x49x512xbf16, #tpu.memory_space<vmem>>, vector<1x1x49x512xbf16>
    %3 = vector.shape_cast %2 : vector<1x1x49x512xbf16> to vector<49x512xbf16>
    %cst = arith.constant dense<0.000000e+00> : vector<49x128xf32>
    %4 = tpu.matmul %3, %0, %cst {dimension_numbers = #tpu.dot_dimension_numbers<[1], [0], [0], [1], [0, 0, 1, 1], [], []>} : vector<49x512xbf16>, vector<512x128xbf16>, vector<49x128xf32> -> vector<49x128xf32>
    %5 = vector.broadcast %1 : vector<1x128xf32> to vector<49x128xf32>
    %6 = arith.addf %4, %5 : vector<49x128xf32>
    %cst_7 = arith.constant 0.000000e+00 : f32
    %7 = vector.broadcast %cst_7 : f32 to vector<49x128xf32>
    %8 = arith.maximumf %6, %7 : vector<49x128xf32>
    %c0_8 = arith.constant 0 : index
    %c1 = arith.constant 1 : index
    %c0_9 = arith.constant 0 : index
    %c0_10 = arith.constant 0 : index
    %9 = vector.load %arg1[%c0_8, %c1, %c0_9, %c0_10] : memref<1x4x49x512xbf16, #tpu.memory_space<vmem>>, vector<1x1x49x512xbf16>
    %10 = vector.shape_cast %9 : vector<1x1x49x512xbf16> to vector<49x512xbf16>
    %cst_11 = arith.constant dense<0.000000e+00> : vector<49x128xf32>
    %11 = tpu.matmul %10, %0, %cst_11 {dimension_numbers = #tpu.dot_dimension_numbers<[1], [0], [0], [1], [0, 0, 1, 1], [], []>} : vector<49x512xbf16>, vector<512x128xbf16>, vector<49x128xf32> -> vector<49x128xf32>
    %12 = vector.broadcast %1 : vector<1x128xf32> to vector<49x128xf32>
    %13 = arith.addf %11, %12 : vector<49x128xf32>
    %cst_12 = arith.constant 0.000000e+00 : f32
    %14 = vector.broadcast %cst_12 : f32 to vector<49x128xf32>
    %15 = arith.maximumf %13, %14 : vector<49x128xf32>
    %16 = arith.maximumf %8, %15 : vector<49x128xf32>
    %c0_13 = arith.constant 0 : index
    %c2 = arith.constant 2 : index
    %c0_14 = arith.constant 0 : index
    %c0_15 = arith.constant 0 : index
    %17 = vector.load %arg1[%c0_13, %c2, %c0_14, %c0_15] : memref<1x4x49x512xbf16, #tpu.memory_space<vmem>>, vector<1x1x49x512xbf16>
    %18 = vector.shape_cast %17 : vector<1x1x49x512xbf16> to vector<49x512xbf16>
    %cst_16 = arith.constant dense<0.000000e+00> : vector<49x128xf32>
    %19 = tpu.matmul %18, %0, %cst_16 {dimension_numbers = #tpu.dot_dimension_numbers<[1], [0], [0], [1], [0, 0, 1, 1], [], []>} : vector<49x512xbf16>, vector<512x128xbf16>, vector<49x128xf32> -> vector<49x128xf32>
    %20 = vector.broadcast %1 : vector<1x128xf32> to vector<49x128xf32>
    %21 = arith.addf %19, %20 : vector<49x128xf32>
    %cst_17 = arith.constant 0.000000e+00 : f32
    %22 = vector.broadcast %cst_17 : f32 to vector<49x128xf32>
    %23 = arith.maximumf %21, %22 : vector<49x128xf32>
    %24 = arith.maximumf %16, %23 : vector<49x128xf32>
    %c0_18 = arith.constant 0 : index
    %c3 = arith.constant 3 : index
    %c0_19 = arith.constant 0 : index
    %c0_20 = arith.constant 0 : index
    %25 = vector.load %arg1[%c0_18, %c3, %c0_19, %c0_20] : memref<1x4x49x512xbf16, #tpu.memory_space<vmem>>, vector<1x1x49x512xbf16>
    %26 = vector.shape_cast %25 : vector<1x1x49x512xbf16> to vector<49x512xbf16>
    %cst_21 = arith.constant dense<0.000000e+00> : vector<49x128xf32>
    %27 = tpu.matmul %26, %0, %cst_21 {dimension_numbers = #tpu.dot_dimension_numbers<[1], [0], [0], [1], [0, 0, 1, 1], [], []>} : vector<49x512xbf16>, vector<512x128xbf16>, vector<49x128xf32> -> vector<49x128xf32>
    %28 = vector.broadcast %1 : vector<1x128xf32> to vector<49x128xf32>
    %29 = arith.addf %27, %28 : vector<49x128xf32>
    %cst_22 = arith.constant 0.000000e+00 : f32
    %30 = vector.broadcast %cst_22 : f32 to vector<49x128xf32>
    %31 = arith.maximumf %29, %30 : vector<49x128xf32>
    %32 = arith.maximumf %24, %31 : vector<49x128xf32>
    %33 = vector.shape_cast %32 : vector<49x128xf32> to vector<1x7x7x128xf32>
    %34 = arith.truncf %33 : vector<1x7x7x128xf32> to vector<1x7x7x128xbf16>
    %c0_23 = arith.constant 0 : index
    %c0_24 = arith.constant 0 : index
    %c0_25 = arith.constant 0 : index
    %c0_26 = arith.constant 0 : index
    %35 = vector.load %arg4[%c0_23, %c0_24, %c0_25, %c0_26] : memref<1x7x7x128xbf16, #tpu.memory_space<vmem>>, vector<1x7x7x128xbf16>
    tpu.vector_store %arg4[%c0_23, %c0_24, %c0_25, %c0_26], %34 {strides = array<i32>} : memref<1x7x7x128xbf16, #tpu.memory_space<vmem>>, vector<1x7x7x128xbf16>,
    return
  }
  func.func @transform_0(%arg0: i32) -> (i32, i32, i32, i32) {
    %c0_i32 = arith.constant 0 : i32
    %c0_i32_0 = arith.constant 0 : i32
    %c0_i32_1 = arith.constant 0 : i32
    %c0_i32_2 = arith.constant 0 : i32
    return %arg0, %c0_i32, %c0_i32_0, %c0_i32_1 : i32, i32, i32, i32
  }
  func.func @transform_1(%arg0: i32) -> (i32, i32) {
    %c0_i32 = arith.constant 0 : i32
    %c0_i32_0 = arith.constant 0 : i32
    %c0_i32_1 = arith.constant 0 : i32
    return %c0_i32, %c0_i32_0 : i32, i32
  }
  func.func @transform_2(%arg0: i32) -> (i32, i32) {
    %c0_i32 = arith.constant 0 : i32
    %c0_i32_0 = arith.constant 0 : i32
    %c0_i32_1 = arith.constant 0 : i32
    return %c0_i32, %c0_i32_0 : i32, i32
  }
  func.func @transform_3(%arg0: i32) -> (i32, i32, i32, i32) {
    %c0_i32 = arith.constant 0 : i32
    %c0_i32_0 = arith.constant 0 : i32
    %c0_i32_1 = arith.constant 0 : i32
    %c0_i32_2 = arith.constant 0 : i32
    return %arg0, %c0_i32, %c0_i32_0, %c0_i32_1 : i32, i32, i32, i32
  }
}

</mosaic_0001>

<llo_original>
// kernel: cnn_fashion_mnist_forward.2
$region0: #{cnn_fashion_mnist_forward.2}
  #allocation0 [shape = 'u32[]', space=smem, size = 0x4, offset = 0x4, fixed_abs, tag = 'smem constant byte address 0x4 - core index']
  #allocation1 [shape = 'u32[144,128]{1,0:T(1,128)}', space=vmem, size = 0x12000, scoped, tag = 'internal scratch']
  %s0 = inlined_call_operand.vmem [shape: bf16[2,4,196,25], index: 0, kind: input, shape index: {}]
  %s1 = inlined_call_operand.vmem [shape: bf16[25,128], index: 1, kind: input, shape index: {}]
  %s2 = inlined_call_operand.vmem [shape: f32[1,128], index: 2, kind: input, shape index: {}]
  %s3 = inlined_call_operand.vmem [shape: bf16[2,14,14,128], index: 3, kind: output, shape index: {}]
  %s4 = sld [smem:[#allocation0]]
  $region45: #{cnn_fashion_mnist_forward.2} parent=0
    _
  %s6 = ssub.s32 1, %s4
  %s7 = scalar_select 0, %s6, %s4
  loop: start=0, step=1, limit=4
  $region2: #{cnn_fashion_mnist_forward.2} parent=0 // loop_pre_header
    _
  $region3: #{cnn_fashion_mnist_forward.2} parent=0 // loop_header
    %s9 = sphi 0, %s13
    %p10 = scmp.ge.s32.totalorder %s9, 4
    %s19 = sphi 0, %s21
    %s22 = sphi 0, %s19
    %s23 = sphi 0, %s22
    %s39 = sphi 0, %s23
    %s43 = sphi 0, %s43
    %s45 = sphi 0, %s43
    %s46 = sphi 0, %s45
    %s60 = sphi 0, %s46
    %s64 = sphi 0, %s64
    %s66 = sphi 0, %s64
    %s67 = sphi 0, %s66
    %s81 = sphi 0, %s67
    %s87 = sphi 0, %s89
    %s90 = sphi 0, %s87
    %s91 = sphi 0, %s90
    %s107 = sphi 0, %s91
  $region4: #{cnn_fashion_mnist_forward.2} parent=0 // loop_header_branch
    %12 = sbr.rel (%p10) target = $region8
  $region5: #{cnn_fashion_mnist_forward.2} parent=0 // loop_body
    %s14 = ssub.s32 %s9, 1
    %s15 = ssub.s32 %s9, 2
    %s16 = sadd.s32 %s9, 1
    %s17 = ssub.s32 %s9, %s16
    %p18 = scmp.eq.s32.totalorder %s17, 0
    %s20 = sadd.s32 %s19, 1
    %s21 = scalar_select %p18, %s19, %s20
    %p24 = pneg %p18
    %p25 = scmp.eq.s32.totalorder %s9, 1
    %p26 = por %p24, %p25
    %p27 = scmp.ne.s32.totalorder %s19, %s22
    %p28 = scmp.eq.s32.totalorder %s9, 0
    %p29 = por %p27, %p28
    %p30 = scmp.ne.s32.totalorder %s19, %s22
    %p31 = scmp.eq.s32.totalorder %s14, 1
    %p32 = por %p30, %p31
    %p33 = scmp.ne.s32.totalorder %s22, %s23
    %p34 = scmp.eq.s32.totalorder %s14, 0
    %p35 = por %p33, %p34
    %p36 = scmp.ne.s32.totalorder %s22, %s23
    %p37 = scmp.eq.s32.totalorder %s15, 1
    %p38 = por %p36, %p37
    %p40 = scmp.ne.s32.totalorder %s23, %s39
    %p41 = scmp.eq.s32.totalorder %s15, 0
    %p42 = por %p40, %p41
    %s44 = sadd.s32 %s43, 1
    %p47 = scmp.eq.s32.totalorder %s9, 1
    %p48 = scmp.ne.s32.totalorder %s43, %s45
    %p49 = scmp.eq.s32.totalorder %s9, 0
    %p50 = por %p48, %p49
    %p51 = scmp.ne.s32.totalorder %s43, %s45
    %p52 = scmp.eq.s32.totalorder %s14, 1
    %p53 = por %p51, %p52
    %p54 = scmp.ne.s32.totalorder %s45, %s46
    %p55 = scmp.eq.s32.totalorder %s14, 0
    %p56 = por %p54, %p55
    %p57 = scmp.ne.s32.totalorder %s45, %s46
    %p58 = scmp.eq.s32.totalorder %s15, 1
    %p59 = por %p57, %p58
    %p61 = scmp.ne.s32.totalorder %s46, %s60
    %p62 = scmp.eq.s32.totalorder %s15, 0
    %p63 = por %p61, %p62
    %s65 = sadd.s32 %s64, 1
    %p68 = scmp.eq.s32.totalorder %s9, 1
    %p69 = scmp.ne.s32.totalorder %s64, %s66
    %p70 = scmp.eq.s32.totalorder %s9, 0
    %p71 = por %p69, %p70
    %p72 = scmp.ne.s32.totalorder %s64, %s66
    %p73 = scmp.eq.s32.totalorder %s14, 1
    %p74 = por %p72, %p73
    %p75 = scmp.ne.s32.totalorder %s66, %s67
    %p76 = scmp.eq.s32.totalorder %s14, 0
    %p77 = por %p75, %p76
    %p78 = scmp.ne.s32.totalorder %s66, %s67
    %p79 = scmp.eq.s32.totalorder %s15, 1
    %p80 = por %p78, %p79
    %p82 = scmp.ne.s32.totalorder %s67, %s81
    %p83 = scmp.eq.s32.totalorder %s15, 0
    %p84 = por %p82, %p83
    %s85 = ssub.s32 %s9, %s16
    %p86 = scmp.eq.s32.totalorder %s85, 0
    %s88 = sadd.s32 %s87, 1
    %s89 = scalar_select %p86, %s87, %s88
    %p92 = pneg %p86
    %p93 = scmp.eq.s32.totalorder %s9, 1
    %p94 = por %p92, %p93
    %p95 = scmp.ne.s32.totalorder %s87, %s90
    %p96 = scmp.eq.s32.totalorder %s9, 0
    %p97 = por %p95, %p96
    %p98 = scmp.ne.s32.totalorder %s87, %s90
    %p99 = scmp.eq.s32.totalorder %s14, 1
    %p100 = por %p98, %p99
    %p101 = scmp.ne.s32.totalorder %s90, %s91
    %p102 = scmp.eq.s32.totalorder %s14, 0
    %p103 = por %p101, %p102
    %p104 = scmp.ne.s32.totalorder %s90, %s91
    %p105 = scmp.eq.s32.totalorder %s15, 1
    %p106 = por %p104, %p105
    %p108 = scmp.ne.s32.totalorder %s91, %s107
    %p109 = scmp.eq.s32.totalorder %s15, 0
    %p110 = por %p108, %p109
    %p111 = scmp.le.s32.totalorder 1, %s9
    %p112 = scmp.lt.s32.totalorder %s9, 3
    %p113 = pnand %p111, %p112
    %p114 = pneg %p113
    // Predicated region
    $region9: #{cnn_fashion_mnist_forward.2} parent=5 // pred_check
      _
    $region10: #{cnn_fashion_mnist_forward.2} parent=5 // pred_check_branch
      %116 = sbr.rel (%p113) target = $region12
    $region11: #{cnn_fashion_mnist_forward.2} parent=5 // pred_region
      %s117 = ssub.s32 %s9, 1
      // Predicated region
      $region13: #{cnn_fashion_mnist_forward.2} parent=11 // pred_check
        %p118 = pneg %p56
      $region14: #{cnn_fashion_mnist_forward.2} parent=11 // pred_check_branch
        %120 = sbr.rel (%p118) target = $region16
      $region15: #{cnn_fashion_mnist_forward.2} parent=11 // pred_region
        _
      $region16: #{cnn_fashion_mnist_forward.2} parent=11 // pred_fallthru
        _
      // Predicated region
      $region17: #{cnn_fashion_mnist_forward.2} parent=11 // pred_check
        %p121 = pneg %p77
      $region18: #{cnn_fashion_mnist_forward.2} parent=11 // pred_check_branch
        %123 = sbr.rel (%p121) target = $region20
      $region19: #{cnn_fashion_mnist_forward.2} parent=11 // pred_region
        _
      $region20: #{cnn_fashion_mnist_forward.2} parent=11 // pred_fallthru
        _
    $region12: #{cnn_fashion_mnist_forward.2} parent=5 // pred_fallthru
      _
    %p124 = scmp.lt.s32.totalorder %s9, 2
    // Predicated region
    $region21: #{cnn_fashion_mnist_forward.2} parent=5 // pred_check
      %p125 = pneg %p124
    $region22: #{cnn_fashion_mnist_forward.2} parent=5 // pred_check_branch
      %127 = sbr.rel (%p125) target = $region24
    $region23: #{cnn_fashion_mnist_forward.2} parent=5 // pred_region
      // Predicated region
      $region25: #{cnn_fashion_mnist_forward.2} parent=23 // pred_check
        %p128 = pneg %p29
      $region26: #{cnn_fashion_mnist_forward.2} parent=23 // pred_check_branch
        %130 = sbr.rel (%p128) target = $region28
      $region27: #{cnn_fashion_mnist_forward.2} parent=23 // pred_region
        %p131 = scmp.lt.s32.totalorder %s9, 1
        %s132 = scalar_select %p131, %s9, 1
        %s133 = smul.addr %s132, 100
        %s134 = smul.addr %s133, 4
        %s135 = scalar_lea.vmem %s0, %s134
      $region28: #{cnn_fashion_mnist_forward.2} parent=23 // pred_fallthru
        _
    $region24: #{cnn_fashion_mnist_forward.2} parent=5 // pred_fallthru
      _
    %p136 = scmp.le.s32.totalorder 1, %s9
    %p137 = scmp.lt.s32.totalorder %s9, 3
    %p138 = pnand %p136, %p137
    %p139 = pneg %p138
    // Predicated region
    $region29: #{cnn_fashion_mnist_forward.2} parent=5 // pred_check
      _
    $region30: #{cnn_fashion_mnist_forward.2} parent=5 // pred_check_branch
      %141 = sbr.rel (%p138) target = $region32
    $region31: #{cnn_fashion_mnist_forward.2} parent=5 // pred_region
      %s142 = ssub.s32 %s9, 1
      %p143 = scmp.lt.s32.totalorder %s14, 1
      %s144 = scalar_select %p143, %s14, 1
      %s145 = smul.addr %s144, 100
      %s146 = smul.addr %s145, 4
      %s147 = scalar_lea.vmem %s0, %s146
      %p148 = pneg %p35
      %p149 = pneg %p32
      %p150 = pneg %p56
      %p151 = pneg %p53
      %p152 = pneg %p77
      %p153 = pneg %p74
      %p154 = pneg %p103
      %p155 = pneg %p100
      %p156 = scmp.lt.s32.totalorder %s14, 1
      %s157 = scalar_select %p156, %s14, 1
      %s158 = smul.addr %s157, 28
      %s159 = smul.addr %s158, 4
      %s160 = scalar_lea.vmem %s3, %s159
      %p161 = scmp.lt.s32.totalorder %s14, 1
      %s162 = scalar_select %p161, %s14, 1
      %s163 = smul.addr %s162, 100
      %s164 = smul.addr %s163, 4
      %s165 = scalar_lea.vmem %s0, %s164
      %p166 = scmp.lt.s32.totalorder %s14, 1
      %s167 = scalar_select %p166, %s14, 1
      %s168 = smul.addr %s167, 28
      %s169 = smul.addr %s168, 4
      %s170 = scalar_lea.vmem %s3, %s169
      %v172 = vld [vmem:[%s1] sm:$0xf]
      %v173 = vld [vmem:[%s1 + $0x4] sm:$0xf]
      %v174 = vld [vmem:[%s1 + $0x8] sm:$0xf]
      %v175 = vld [vmem:[%s1 + $0xc] sm:$0x1]
      %v176 = vld [vmem:[%s2] sm:$0x1]
      %v177 = vld [vmem:[%s165] sm:$0xf]
      %v178 = vld [vmem:[%s165 + $0x4] sm:$0xf]
      %v179 = vld [vmem:[%s165 + $0x8] sm:$0xf]
      %v180 = vld [vmem:[%s165 + $0xc] sm:$0xf]
      %v181 = vld [vmem:[%s165 + $0x10] sm:$0xf]
      %v182 = vld [vmem:[%s165 + $0x14] sm:$0xf]
      %v183 = vld [vmem:[%s165 + $0x18] sm:$0xf]
      %v184 = vld [vmem:[%s165 + $0x1c] sm:$0xf]
      %v185 = vld [vmem:[%s165 + $0x20] sm:$0xf]
      %v186 = vld [vmem:[%s165 + $0x24] sm:$0xf]
      %v187 = vld [vmem:[%s165 + $0x28] sm:$0xf]
      %v188 = vld [vmem:[%s165 + $0x2c] sm:$0xf]
      %v189 = vld [vmem:[%s165 + $0x30] sm:$0xf]
      %v190 = vld [vmem:[%s165 + $0x34] sm:$0xf]
      %v191 = vld [vmem:[%s165 + $0x38] sm:$0xf]
      %v192 = vld [vmem:[%s165 + $0x3c] sm:$0xf]
      %v193 = vld [vmem:[%s165 + $0x40] sm:$0xf]
      %v194 = vld [vmem:[%s165 + $0x44] sm:$0xf]
      %v195 = vld [vmem:[%s165 + $0x48] sm:$0xf]
      %v196 = vld [vmem:[%s165 + $0x4c] sm:$0xf]
      %v197 = vld [vmem:[%s165 + $0x50] sm:$0xf]
      %v198 = vld [vmem:[%s165 + $0x54] sm:$0xf]
      %v199 = vld [vmem:[%s165 + $0x58] sm:$0xf]
      %v200 = vld [vmem:[%s165 + $0x5c] sm:$0xf]
      %v201 = vld [vmem:[%s165 + $0x60] sm:$0x3]
      %v203 = vlaneseq
      %v204 = vshrl.u32 %v203, 7
      %v205 = vsub.s32 0, %v204
      %v206 = vrot.slane %v176, %v205
      %v233 = vunpack.c.l.b16 %v177
      %v234 = vunpack.c.l.b16 %v178
      %v235 = vunpack.c.l.b16 %v179
      %v236 = vunpack.c.l.b16 %v180
      %v237 = vunpack.c.l.b16 %v181
      %v238 = vunpack.c.l.b16 %v182
      %v239 = vunpack.c.l.b16 %v183
      %v240 = vunpack.c.l.b16 %v184
      %v241 = vunpack.c.l.b16 %v185
      %v242 = vunpack.c.l.b16 %v186
      %v243 = vunpack.c.l.b16 %v187
      %v244 = vunpack.c.l.b16 %v188
      %v245 = vunpack.c.l.b16 %v189
      %v246 = vunpack.c.l.b16 %v190
      %v247 = vunpack.c.l.b16 %v191
      %v248 = vunpack.c.l.b16 %v192
      %v249 = vunpack.c.l.b16 %v193
      %v250 = vunpack.c.l.b16 %v194
      %v251 = vunpack.c.l.b16 %v195
      %v252 = vunpack.c.l.b16 %v196
      %v253 = vunpack.c.l.b16 %v197
      %v254 = vunpack.c.l.b16 %v198
      %v255 = vunpack.c.l.b16 %v199
      %v256 = vunpack.c.l.b16 %v200
      %v257 = vunpack.c.l.b16 %v201
      %v258 = vpack.c.b16 %v234, %v233
      %v259 = vpack.c.b16 %v236, %v235
      %v260 = vpack.c.b16 %v238, %v237
      %v261 = vpack.c.b16 %v240, %v239
      %v262 = vpack.c.b16 %v242, %v241
      %v263 = vpack.c.b16 %v244, %v243
      %v264 = vpack.c.b16 %v246, %v245
      %v265 = vpack.c.b16 %v248, %v247
      %v266 = vpack.c.b16 %v250, %v249
      %v267 = vpack.c.b16 %v252, %v251
      %v268 = vpack.c.b16 %v254, %v253
      %v269 = vpack.c.b16 %v256, %v255
      %v270 = vpack.c.b16 %v257, %v257
      %v275 = vunpack.c.l.b16 %v172
      %v276 = vunpack.c.l.b16 %v173
      %v277 = vunpack.c.l.b16 %v174
      %v278 = vunpack.c.l.b16 %v175
      %v279 = vpack.c.b16 %v276, %v275
      %v280 = vpack.c.b16 %v278, %v277
      %vm282 = vcmask 203776
      %v284 = vsel %vm282, %v258, 0
      %v287 = vsel %vm282, %v259, 0
      %v290 = vsel %vm282, %v260, 0
      %v293 = vsel %vm282, %v261, 0
      %v296 = vsel %vm282, %v262, 0
      %v299 = vsel %vm282, %v263, 0
      %v302 = vsel %vm282, %v264, 0
      %v305 = vsel %vm282, %v265, 0
      %v308 = vsel %vm282, %v266, 0
      %v311 = vsel %vm282, %v267, 0
      %v314 = vsel %vm282, %v268, 0
      %v317 = vsel %vm282, %v269, 0
      %v320 = vsel %vm282, %v270, 0
      %vm322 = vcmask 1043456
      %vm323 = vcmask 1044480
      %v324 = vsel %vm322, 4294967295, 65535
      %v325 = vsel %vm323, %v324, 0
      %v327 = vand.u32 %v280, %v325
      %329 = vmatprep.subr.bf16.mxu0 0
      %330 = vmatpush1.bf16.msra.mxu0 %v279
      %331 = vmatprep.subr.bf16.mxu0 0
      %332 = vmatpush1.bf16.msra.mxu0 %v327
      %333 = vmatprep.subr.bf16.mxu0 0
      %334 = vmatpush1.bf16.msra.mxu0 0
      %335 = vmatprep.subr.bf16.mxu0 0
      %336 = vmatpush1.bf16.msra.mxu0 0
      %337 = vmatprep.subr.bf16.mxu0 0
      %338 = vmatpush1.bf16.msra.mxu0 0
      %339 = vmatprep.subr.bf16.mxu0 0
      %340 = vmatpush1.bf16.msra.mxu0 0
      %341 = vmatprep.subr.bf16.mxu0 0
      %342 = vmatpush1.bf16.msra.mxu0 0
      %343 = vmatprep.subr.bf16.mxu0 0
      %344 = vmatpush1.bf16.msra.mxu0 0
      %345 = vmatprep.subr.bf16.mxu0 0
      %346 = vmatpush1.bf16.msra.mxu0 0
      %347 = vmatprep.subr.bf16.mxu0 0
      %348 = vmatpush1.bf16.msra.mxu0 0
      %349 = vmatprep.subr.bf16.mxu0 0
      %350 = vmatpush1.bf16.msra.mxu0 0
      %351 = vmatprep.subr.bf16.mxu0 0
      %352 = vmatpush1.bf16.msra.mxu0 0
      %353 = vmatprep.subr.bf16.mxu0 0
      %354 = vmatpush1.bf16.msra.mxu0 0
      %355 = vmatprep.subr.bf16.mxu0 0
      %356 = vmatpush1.bf16.msra.mxu0 0
      %357 = vmatprep.subr.bf16.mxu0 0
      %358 = vmatpush1.bf16.msra.mxu0 0
      %359 = vmatprep.subr.bf16.mxu0 0
      %360 = vmatpush1.bf16.msra.mxu0 0
      %361 = vmatprep.mubr.bf16.mxu0 0
      %362 = vmatmul.mubr.bf16.gmra.mrb[0].mxu0 %v284
      %v363 = vpop.f32.mrb[0].mxu0
      %v364 = vadd.f32 %v206, %v363
      %v365 = vpop.f32.mrb[0].mxu0
      %v366 = vpop.f32.mrb[0].mxu0
      %v367 = vadd.f32 %v206, %v366
      %v368 = vpop.f32.mrb[0].mxu0
      %369 = vmatprep.mubr.bf16.mxu0 0
      %370 = vmatmul.mubr.bf16.gmra.mrb[0].mxu0 %v287
      %v371 = vpop.f32.mrb[0].mxu0
      %v372 = vadd.f32 %v206, %v371
      %v373 = vpop.f32.mrb[0].mxu0
      %v374 = vpop.f32.mrb[0].mxu0
      %v375 = vadd.f32 %v206, %v374
      %v376 = vpop.f32.mrb[0].mxu0
      %377 = vmatprep.mubr.bf16.mxu0 0
      %378 = vmatmul.mubr.bf16.gmra.mrb[0].mxu0 %v290
      %v379 = vpop.f32.mrb[0].mxu0
      %v380 = vadd.f32 %v206, %v379
      %v381 = vpop.f32.mrb[0].mxu0
      %v382 = vpop.f32.mrb[0].mxu0
      %v383 = vadd.f32 %v206, %v382
      %v384 = vpop.f32.mrb[0].mxu0
      %385 = vmatprep.mubr.bf16.mxu0 0
      %386 = vmatmul.mubr.bf16.gmra.mrb[0].mxu0 %v293
      %v387 = vpop.f32.mrb[0].mxu0
      %v388 = vadd.f32 %v206, %v387
      %v389 = vpop.f32.mrb[0].mxu0
      %v390 = vpop.f32.mrb[0].mxu0
      %v391 = vadd.f32 %v206, %v390
      %v392 = vpop.f32.mrb[0].mxu0
      %393 = vmatprep.mubr.bf16.mxu0 0
      %394 = vmatmul.mubr.bf16.gmra.mrb[0].mxu0 %v296
      %v395 = vpop.f32.mrb[0].mxu0
      %v396 = vadd.f32 %v206, %v395
      %v397 = vpop.f32.mrb[0].mxu0
      %v398 = vpop.f32.mrb[0].mxu0
      %v399 = vadd.f32 %v206, %v398
      %v400 = vpop.f32.mrb[0].mxu0
      %401 = vmatprep.mubr.bf16.mxu0 0
      %402 = vmatmul.mubr.bf16.gmra.mrb[0].mxu0 %v299
      %v403 = vpop.f32.mrb[0].mxu0
      %v404 = vadd.f32 %v206, %v403
      %v405 = vpop.f32.mrb[0].mxu0
      %v406 = vpop.f32.mrb[0].mxu0
      %v407 = vadd.f32 %v206, %v406
      %v408 = vpop.f32.mrb[0].mxu0
      %409 = vmatprep.mubr.bf16.mxu0 0
      %410 = vmatmul.mubr.bf16.gmra.mrb[0].mxu0 %v302
      %v411 = vpop.f32.mrb[0].mxu0
      %v412 = vadd.f32 %v206, %v411
      %v413 = vpop.f32.mrb[0].mxu0
      %v414 = vpop.f32.mrb[0].mxu0
      %v415 = vadd.f32 %v206, %v414
      %v416 = vpop.f32.mrb[0].mxu0
      %417 = vmatprep.mubr.bf16.mxu0 0
      %418 = vmatmul.mubr.bf16.gmra.mrb[0].mxu0 %v305
      %v419 = vpop.f32.mrb[0].mxu0
      %v420 = vadd.f32 %v206, %v419
      %v421 = vpop.f32.mrb[0].mxu0
      %v422 = vpop.f32.mrb[0].mxu0
      %v423 = vadd.f32 %v206, %v422
      %v424 = vpop.f32.mrb[0].mxu0
      %425 = vmatprep.mubr.bf16.mxu0 0
      %426 = vmatmul.mubr.bf16.gmra.mrb[0].mxu0 %v308
      %v427 = vpop.f32.mrb[0].mxu0
      %v428 = vadd.f32 %v206, %v427
      %v429 = vpop.f32.mrb[0].mxu0
      %v430 = vpop.f32.mrb[0].mxu0
      %v431 = vadd.f32 %v206, %v430
      %v432 = vpop.f32.mrb[0].mxu0
      %433 = vmatprep.mubr.bf16.mxu0 0
      %434 = vmatmul.mubr.bf16.gmra.mrb[0].mxu0 %v311
      %v435 = vpop.f32.mrb[0].mxu0
      %v436 = vadd.f32 %v206, %v435
      %v437 = vpop.f32.mrb[0].mxu0
      %v438 = vpop.f32.mrb[0].mxu0
      %v439 = vadd.f32 %v206, %v438
      %v440 = vpop.f32.mrb[0].mxu0
      %441 = vmatprep.mubr.bf16.mxu0 0
      %442 = vmatmul.mubr.bf16.gmra.mrb[0].mxu0 %v314
      %v443 = vpop.f32.mrb[0].mxu0
      %v444 = vadd.f32 %v206, %v443
      %v445 = vpop.f32.mrb[0].mxu0
      %v446 = vpop.f32.mrb[0].mxu0
      %v447 = vadd.f32 %v206, %v446
      %v448 = vpop.f32.mrb[0].mxu0
      %449 = vmatprep.mubr.bf16.mxu0 0
      %450 = vmatmul.mubr.bf16.gmra.mrb[0].mxu0 %v317
      %v451 = vpop.f32.mrb[0].mxu0
      %v452 = vadd.f32 %v206, %v451
      %v453 = vpop.f32.mrb[0].mxu0
      %v454 = vpop.f32.mrb[0].mxu0
      %v455 = vadd.f32 %v206, %v454
      %v456 = vpop.f32.mrb[0].mxu0
      %457 = vmatprep.mubr.bf16.mxu0 0
      %458 = vmatmul.mubr.bf16.gmra.mrb[0].mxu0 %v320
      %v459 = vpop.f32.mrb[0].mxu0
      %v460 = vadd.f32 %v206, %v459
      %v461 = vpop.f32.mrb[0].mxu0
      %v462 = vpop.f32.mrb[0].mxu0
      %v463 = vpop.f32.mrb[0].mxu0
      %464 = vdwg.mxu0
      %v465 = vmax.f32 %v364, 0.0
      %v466 = vmax.f32 %v367, 0.0
      %v467 = vmax.f32 %v372, 0.0
      %v468 = vmax.f32 %v375, 0.0
      %v469 = vmax.f32 %v380, 0.0
      %v470 = vmax.f32 %v383, 0.0
      %v471 = vmax.f32 %v388, 0.0
      %v472 = vmax.f32 %v391, 0.0
      %v473 = vmax.f32 %v396, 0.0
      %v474 = vmax.f32 %v399, 0.0
      %v475 = vmax.f32 %v404, 0.0
      %v476 = vmax.f32 %v407, 0.0
      %v477 = vmax.f32 %v412, 0.0
      %v478 = vmax.f32 %v415, 0.0
      %v479 = vmax.f32 %v420, 0.0
      %v480 = vmax.f32 %v423, 0.0
      %v481 = vmax.f32 %v428, 0.0
      %v482 = vmax.f32 %v431, 0.0
      %v483 = vmax.f32 %v436, 0.0
      %v484 = vmax.f32 %v439, 0.0
      %v485 = vmax.f32 %v444, 0.0
      %v486 = vmax.f32 %v447, 0.0
      %v487 = vmax.f32 %v452, 0.0
      %v488 = vmax.f32 %v455, 0.0
      %v489 = vmax.f32 %v460, 0.0
      %s490 = scalar_lea.vmem %s165, 100
      %v491 = vld [vmem:[%s490] sm:$0xf]
      %v492 = vld [vmem:[%s490 + $0x4] sm:$0xf]
      %v493 = vld [vmem:[%s490 + $0x8] sm:$0xf]
      %v494 = vld [vmem:[%s490 + $0xc] sm:$0xf]
      %v495 = vld [vmem:[%s490 + $0x10] sm:$0xf]
      %v496 = vld [vmem:[%s490 + $0x14] sm:$0xf]
      %v497 = vld [vmem:[%s490 + $0x18] sm:$0xf]
      %v498 = vld [vmem:[%s490 + $0x1c] sm:$0xf]
      %v499 = vld [vmem:[%s490 + $0x20] sm:$0xf]
      %v500 = vld [vmem:[%s490 + $0x24] sm:$0xf]
      %v501 = vld [vmem:[%s490 + $0x28] sm:$0xf]
      %v502 = vld [vmem:[%s490 + $0x2c] sm:$0xf]
      %v503 = vld [vmem:[%s490 + $0x30] sm:$0xf]
      %v504 = vld [vmem:[%s490 + $0x34] sm:$0xf]
      %v505 = vld [vmem:[%s490 + $0x38] sm:$0xf]
      %v506 = vld [vmem:[%s490 + $0x3c] sm:$0xf]
      %v507 = vld [vmem:[%s490 + $0x40] sm:$0xf]
      %v508 = vld [vmem:[%s490 + $0x44] sm:$0xf]
      %v509 = vld [vmem:[%s490 + $0x48] sm:$0xf]
      %v510 = vld [vmem:[%s490 + $0x4c] sm:$0xf]
      %v511 = vld [vmem:[%s490 + $0x50] sm:$0xf]
      %v512 = vld [vmem:[%s490 + $0x54] sm:$0xf]
      %v513 = vld [vmem:[%s490 + $0x58] sm:$0xf]
      %v514 = vld [vmem:[%s490 + $0x5c] sm:$0xf]
      %v515 = vld [vmem:[%s490 + $0x60] sm:$0x3]
      %v541 = vunpack.c.l.b16 %v491
      %v542 = vunpack.c.l.b16 %v492
      %v543 = vunpack.c.l.b16 %v493
      %v544 = vunpack.c.l.b16 %v494
      %v545 = vunpack.c.l.b16 %v495
      %v546 = vunpack.c.l.b16 %v496
      %v547 = vunpack.c.l.b16 %v497
      %v548 = vunpack.c.l.b16 %v498
      %v549 = vunpack.c.l.b16 %v499
      %v550 = vunpack.c.l.b16 %v500
      %v551 = vunpack.c.l.b16 %v501
      %v552 = vunpack.c.l.b16 %v502
      %v553 = vunpack.c.l.b16 %v503
      %v554 = vunpack.c.l.b16 %v504
      %v555 = vunpack.c.l.b16 %v505
      %v556 = vunpack.c.l.b16 %v506
      %v557 = vunpack.c.l.b16 %v507
      %v558 = vunpack.c.l.b16 %v508
      %v559 = vunpack.c.l.b16 %v509
      %v560 = vunpack.c.l.b16 %v510
      %v561 = vunpack.c.l.b16 %v511
      %v562 = vunpack.c.l.b16 %v512
      %v563 = vunpack.c.l.b16 %v513
      %v564 = vunpack.c.l.b16 %v514
      %v565 = vunpack.c.l.b16 %v515
      %v566 = vpack.c.b16 %v542, %v541
      %v567 = vpack.c.b16 %v544, %v543
      %v568 = vpack.c.b16 %v546, %v545
      %v569 = vpack.c.b16 %v548, %v547
      %v570 = vpack.c.b16 %v550, %v549
      %v571 = vpack.c.b16 %v552, %v551
      %v572 = vpack.c.b16 %v554, %v553
      %v573 = vpack.c.b16 %v556, %v555
      %v574 = vpack.c.b16 %v558, %v557
      %v575 = vpack.c.b16 %v560, %v559
      %v576 = vpack.c.b16 %v562, %v561
      %v577 = vpack.c.b16 %v564, %v563
      %v578 = vpack.c.b16 %v565, %v565
      %v580 = vsel %vm282, %v566, 0
      %v583 = vsel %vm282, %v567, 0
      %v586 = vsel %vm282, %v568, 0
      %v589 = vsel %vm282, %v569, 0
      %v592 = vsel %vm282, %v570, 0
      %v595 = vsel %vm282, %v571, 0
      %v598 = vsel %vm282, %v572, 0
      %v601 = vsel %vm282, %v573, 0
      %v604 = vsel %vm282, %v574, 0
      %v607 = vsel %vm282, %v575, 0
      %v610 = vsel %vm282, %v576, 0
      %v613 = vsel %vm282, %v577, 0
      %v616 = vsel %vm282, %v578, 0
      %618 = vmatprep.subr.bf16.mxu0 0
      %619 = vmatpush1.bf16.msra.mxu0 %v279
      %620 = vmatprep.subr.bf16.mxu0 0
      %621 = vmatpush1.bf16.msra.mxu0 %v327
      %622 = vmatprep.subr.bf16.mxu0 0
      %623 = vmatpush1.bf16.msra.mxu0 0
      %624 = vmatprep.subr.bf16.mxu0 0
      %625 = vmatpush1.bf16.msra.mxu0 0
      %626 = vmatprep.subr.bf16.mxu0 0
      %627 = vmatpush1.bf16.msra.mxu0 0
      %628 = vmatprep.subr.bf16.mxu0 0
      %629 = vmatpush1.bf16.msra.mxu0 0
      %630 = vmatprep.subr.bf16.mxu0 0
      %631 = vmatpush1.bf16.msra.mxu0 0
      %632 = vmatprep.subr.bf16.mxu0 0
      %633 = vmatpush1.bf16.msra.mxu0 0
      %634 = vmatprep.subr.bf16.mxu0 0
      %635 = vmatpush1.bf16.msra.mxu0 0
      %636 = vmatprep.subr.bf16.mxu0 0
      %637 = vmatpush1.bf16.msra.mxu0 0
      %638 = vmatprep.subr.bf16.mxu0 0
      %639 = vmatpush1.bf16.msra.mxu0 0
      %640 = vmatprep.subr.bf16.mxu0 0
      %641 = vmatpush1.bf16.msra.mxu0 0
      %642 = vmatprep.subr.bf16.mxu0 0
      %643 = vmatpush1.bf16.msra.mxu0 0
      %644 = vmatprep.subr.bf16.mxu0 0
      %645 = vmatpush1.bf16.msra.mxu0 0
      %646 = vmatprep.subr.bf16.mxu0 0
      %647 = vmatpush1.bf16.msra.mxu0 0
      %648 = vmatprep.subr.bf16.mxu0 0
      %649 = vmatpush1.bf16.msra.mxu0 0
      %650 = vmatprep.mubr.bf16.mxu0 0
      %651 = vmatmul.mubr.bf16.gmra.mrb[0].mxu0 %v580
      %v652 = vpop.f32.mrb[0].mxu0
      %v653 = vadd.f32 %v206, %v652
      %v654 = vpop.f32.mrb[0].mxu0
      %v655 = vpop.f32.mrb[0].mxu0
      %v656 = vadd.f32 %v206, %v655
      %v657 = vpop.f32.mrb[0].mxu0
      %658 = vmatprep.mubr.bf16.mxu0 0
      %659 = vmatmul.mubr.bf16.gmra.mrb[0].mxu0 %v583
      %v660 = vpop.f32.mrb[0].mxu0
      %v661 = vadd.f32 %v206, %v660
      %v662 = vpop.f32.mrb[0].mxu0
      %v663 = vpop.f32.mrb[0].mxu0
      %v664 = vadd.f32 %v206, %v663
      %v665 = vpop.f32.mrb[0].mxu0
      %666 = vmatprep.mubr.bf16.mxu0 0
      %667 = vmatmul.mubr.bf16.gmra.mrb[0].mxu0 %v586
      %v668 = vpop.f32.mrb[0].mxu0
      %v669 = vadd.f32 %v206, %v668
      %v670 = vpop.f32.mrb[0].mxu0
      %v671 = vpop.f32.mrb[0].mxu0
      %v672 = vadd.f32 %v206, %v671
      %v673 = vpop.f32.mrb[0].mxu0
      %674 = vmatprep.mubr.bf16.mxu0 0
      %675 = vmatmul.mubr.bf16.gmra.mrb[0].mxu0 %v589
      %v676 = vpop.f32.mrb[0].mxu0
      %v677 = vadd.f32 %v206, %v676
      %v678 = vpop.f32.mrb[0].mxu0
      %v679 = vpop.f32.mrb[0].mxu0
      %v680 = vadd.f32 %v206, %v679
      %v681 = vpop.f32.mrb[0].mxu0
      %682 = vmatprep.mubr.bf16.mxu0 0
      %683 = vmatmul.mubr.bf16.gmra.mrb[0].mxu0 %v592
      %v684 = vpop.f32.mrb[0].mxu0
      %v685 = vadd.f32 %v206, %v684
      %v686 = vpop.f32.mrb[0].mxu0
      %v687 = vpop.f32.mrb[0].mxu0
      %v688 = vadd.f32 %v206, %v687
      %v689 = vpop.f32.mrb[0].mxu0
      %690 = vmatprep.mubr.bf16.mxu0 0
      %691 = vmatmul.mubr.bf16.gmra.mrb[0].mxu0 %v595
      %v692 = vpop.f32.mrb[0].mxu0
      %v693 = vadd.f32 %v206, %v692
      %v694 = vpop.f32.mrb[0].mxu0
      %v695 = vpop.f32.mrb[0].mxu0
      %v696 = vadd.f32 %v206, %v695
      %v697 = vpop.f32.mrb[0].mxu0
      %698 = vmatprep.mubr.bf16.mxu0 0
      %699 = vmatmul.mubr.bf16.gmra.mrb[0].mxu0 %v598
      %v700 = vpop.f32.mrb[0].mxu0
      %v701 = vadd.f32 %v206, %v700
      %v702 = vpop.f32.mrb[0].mxu0
      %v703 = vpop.f32.mrb[0].mxu0
      %v704 = vadd.f32 %v206, %v703
      %v705 = vpop.f32.mrb[0].mxu0
      %706 = vmatprep.mubr.bf16.mxu0 0
      %707 = vmatmul.mubr.bf16.gmra.mrb[0].mxu0 %v601
      %v708 = vpop.f32.mrb[0].mxu0
      %v709 = vadd.f32 %v206, %v708
      %v710 = vpop.f32.mrb[0].mxu0
      %v711 = vpop.f32.mrb[0].mxu0
      %v712 = vadd.f32 %v206, %v711
      %v713 = vpop.f32.mrb[0].mxu0
      %714 = vmatprep.mubr.bf16.mxu0 0
      %715 = vmatmul.mubr.bf16.gmra.mrb[0].mxu0 %v604
      %v716 = vpop.f32.mrb[0].mxu0
      %v717 = vadd.f32 %v206, %v716
      %v718 = vpop.f32.mrb[0].mxu0
      %v719 = vpop.f32.mrb[0].mxu0
      %v720 = vadd.f32 %v206, %v719
      %v721 = vpop.f32.mrb[0].mxu0
      %722 = vmatprep.mubr.bf16.mxu0 0
      %723 = vmatmul.mubr.bf16.gmra.mrb[0].mxu0 %v607
      %v724 = vpop.f32.mrb[0].mxu0
      %v725 = vadd.f32 %v206, %v724
      %v726 = vpop.f32.mrb[0].mxu0
      %v727 = vpop.f32.mrb[0].mxu0
      %v728 = vadd.f32 %v206, %v727
      %v729 = vpop.f32.mrb[0].mxu0
      %730 = vmatprep.mubr.bf16.mxu0 0
      %731 = vmatmul.mubr.bf16.gmra.mrb[0].mxu0 %v610
      %v732 = vpop.f32.mrb[0].mxu0
      %v733 = vadd.f32 %v206, %v732
      %v734 = vpop.f32.mrb[0].mxu0
      %v735 = vpop.f32.mrb[0].mxu0
      %v736 = vadd.f32 %v206, %v735
      %v737 = vpop.f32.mrb[0].mxu0
      %738 = vmatprep.mubr.bf16.mxu0 0
      %739 = vmatmul.mubr.bf16.gmra.mrb[0].mxu0 %v613
      %v740 = vpop.f32.mrb[0].mxu0
      %v741 = vadd.f32 %v206, %v740
      %v742 = vpop.f32.mrb[0].mxu0
      %v743 = vpop.f32.mrb[0].mxu0
      %v744 = vadd.f32 %v206, %v743
      %v745 = vpop.f32.mrb[0].mxu0
      %746 = vmatprep.mubr.bf16.mxu0 0
      %747 = vmatmul.mubr.bf16.gmra.mrb[0].mxu0 %v616
      %v748 = vpop.f32.mrb[0].mxu0
      %v749 = vadd.f32 %v206, %v748
      %v750 = vpop.f32.mrb[0].mxu0
      %v751 = vpop.f32.mrb[0].mxu0
      %v752 = vpop.f32.mrb[0].mxu0
      %753 = vdwg.mxu0
      %v754 = vmax.f32 %v653, 0.0
      %v755 = vmax.f32 %v656, 0.0
      %v756 = vmax.f32 %v661, 0.0
      %v757 = vmax.f32 %v664, 0.0
      %v758 = vmax.f32 %v669, 0.0
      %v759 = vmax.f32 %v672, 0.0
      %v760 = vmax.f32 %v677, 0.0
      %v761 = vmax.f32 %v680, 0.0
      %v762 = vmax.f32 %v685, 0.0
      %v763 = vmax.f32 %v688, 0.0
      %v764 = vmax.f32 %v693, 0.0
      %v765 = vmax.f32 %v696, 0.0
      %v766 = vmax.f32 %v701, 0.0
      %v767 = vmax.f32 %v704, 0.0
      %v768 = vmax.f32 %v709, 0.0
      %v769 = vmax.f32 %v712, 0.0
      %v770 = vmax.f32 %v717, 0.0
      %v771 = vmax.f32 %v720, 0.0
      %v772 = vmax.f32 %v725, 0.0
      %v773 = vmax.f32 %v728, 0.0
      %v774 = vmax.f32 %v733, 0.0
      %v775 = vmax.f32 %v736, 0.0
      %v776 = vmax.f32 %v741, 0.0
      %v777 = vmax.f32 %v744, 0.0
      %v778 = vmax.f32 %v749, 0.0
      %v779 = vmax.f32 %v465, %v754
      %v780 = vmax.f32 %v466, %v755
      %v781 = vmax.f32 %v467, %v756
      %v782 = vmax.f32 %v468, %v757
      %v783 = vmax.f32 %v469, %v758
      %v784 = vmax.f32 %v470, %v759
      %v785 = vmax.f32 %v471, %v760
      %v786 = vmax.f32 %v472, %v761
      %v787 = vmax.f32 %v473, %v762
      %v788 = vmax.f32 %v474, %v763
      %v789 = vmax.f32 %v475, %v764
      %v790 = vmax.f32 %v476, %v765
      %v791 = vmax.f32 %v477, %v766
      %v792 = vmax.f32 %v478, %v767
      %v793 = vmax.f32 %v479, %v768
      %v794 = vmax.f32 %v480, %v769
      %v795 = vmax.f32 %v481, %v770
      %v796 = vmax.f32 %v482, %v771
      %v797 = vmax.f32 %v483, %v772
      %v798 = vmax.f32 %v484, %v773
      %v799 = vmax.f32 %v485, %v774
      %v800 = vmax.f32 %v486, %v775
      %v801 = vmax.f32 %v487, %v776
      %v802 = vmax.f32 %v488, %v777
      %v803 = vmax.f32 %v489, %v778
      %s804 = scalar_lea.vmem %s165, 200
      %v805 = vld [vmem:[%s804] sm:$0xf]
      %v806 = vld [vmem:[%s804 + $0x4] sm:$0xf]
      %v807 = vld [vmem:[%s804 + $0x8] sm:$0xf]
      %v808 = vld [vmem:[%s804 + $0xc] sm:$0xf]
      %v809 = vld [vmem:[%s804 + $0x10] sm:$0xf]
      %v810 = vld [vmem:[%s804 + $0x14] sm:$0xf]
      %v811 = vld [vmem:[%s804 + $0x18] sm:$0xf]
      %v812 = vld [vmem:[%s804 + $0x1c] sm:$0xf]
      %v813 = vld [vmem:[%s804 + $0x20] sm:$0xf]
      %v814 = vld [vmem:[%s804 + $0x24] sm:$0xf]
      %v815 = vld [vmem:[%s804 + $0x28] sm:$0xf]
      %v816 = vld [vmem:[%s804 + $0x2c] sm:$0xf]
      %v817 = vld [vmem:[%s804 + $0x30] sm:$0xf]
      %v818 = vld [vmem:[%s804 + $0x34] sm:$0xf]
      %v819 = vld [vmem:[%s804 + $0x38] sm:$0xf]
      %v820 = vld [vmem:[%s804 + $0x3c] sm:$0xf]
      %v821 = vld [vmem:[%s804 + $0x40] sm:$0xf]
      %v822 = vld [vmem:[%s804 + $0x44] sm:$0xf]
      %v823 = vld [vmem:[%s804 + $0x48] sm:$0xf]
      %v824 = vld [vmem:[%s804 + $0x4c] sm:$0xf]
      %v825 = vld [vmem:[%s804 + $0x50] sm:$0xf]
      %v826 = vld [vmem:[%s804 + $0x54] sm:$0xf]
      %v827 = vld [vmem:[%s804 + $0x58] sm:$0xf]
      %v828 = vld [vmem:[%s804 + $0x5c] sm:$0xf]
      %v829 = vld [vmem:[%s804 + $0x60] sm:$0x3]
      %v855 = vunpack.c.l.b16 %v805
      %v856 = vunpack.c.l.b16 %v806
      %v857 = vunpack.c.l.b16 %v807
      %v858 = vunpack.c.l.b16 %v808
      %v859 = vunpack.c.l.b16 %v809
      %v860 = vunpack.c.l.b16 %v810
      %v861 = vunpack.c.l.b16 %v811
      %v862 = vunpack.c.l.b16 %v812
      %v863 = vunpack.c.l.b16 %v813
      %v864 = vunpack.c.l.b16 %v814
      %v865 = vunpack.c.l.b16 %v815
      %v866 = vunpack.c.l.b16 %v816
      %v867 = vunpack.c.l.b16 %v817
      %v868 = vunpack.c.l.b16 %v818
      %v869 = vunpack.c.l.b16 %v819
      %v870 = vunpack.c.l.b16 %v820
      %v871 = vunpack.c.l.b16 %v821
      %v872 = vunpack.c.l.b16 %v822
      %v873 = vunpack.c.l.b16 %v823
      %v874 = vunpack.c.l.b16 %v824
      %v875 = vunpack.c.l.b16 %v825
      %v876 = vunpack.c.l.b16 %v826
      %v877 = vunpack.c.l.b16 %v827
      %v878 = vunpack.c.l.b16 %v828
      %v879 = vunpack.c.l.b16 %v829
      %v880 = vpack.c.b16 %v856, %v855
      %v881 = vpack.c.b16 %v858, %v857
      %v882 = vpack.c.b16 %v860, %v859
      %v883 = vpack.c.b16 %v862, %v861
      %v884 = vpack.c.b16 %v864, %v863
      %v885 = vpack.c.b16 %v866, %v865
      %v886 = vpack.c.b16 %v868, %v867
      %v887 = vpack.c.b16 %v870, %v869
      %v888 = vpack.c.b16 %v872, %v871
      %v889 = vpack.c.b16 %v874, %v873
      %v890 = vpack.c.b16 %v876, %v875
      %v891 = vpack.c.b16 %v878, %v877
      %v892 = vpack.c.b16 %v879, %v879
      %v894 = vsel %vm282, %v880, 0
      %v897 = vsel %vm282, %v881, 0
      %v900 = vsel %vm282, %v882, 0
      %v903 = vsel %vm282, %v883, 0
      %v906 = vsel %vm282, %v884, 0
      %v909 = vsel %vm282, %v885, 0
      %v912 = vsel %vm282, %v886, 0
      %v915 = vsel %vm282, %v887, 0
      %v918 = vsel %vm282, %v888, 0
      %v921 = vsel %vm282, %v889, 0
      %v924 = vsel %vm282, %v890, 0
      %v927 = vsel %vm282, %v891, 0
      %v930 = vsel %vm282, %v892, 0
      %932 = vmatprep.subr.bf16.mxu0 0
      %933 = vmatpush1.bf16.msra.mxu0 %v279
      %934 = vmatprep.subr.bf16.mxu0 0
      %935 = vmatpush1.bf16.msra.mxu0 %v327
      %936 = vmatprep.subr.bf16.mxu0 0
      %937 = vmatpush1.bf16.msra.mxu0 0
      %938 = vmatprep.subr.bf16.mxu0 0
      %939 = vmatpush1.bf16.msra.mxu0 0
      %940 = vmatprep.subr.bf16.mxu0 0
      %941 = vmatpush1.bf16.msra.mxu0 0
      %942 = vmatprep.subr.bf16.mxu0 0
      %943 = vmatpush1.bf16.msra.mxu0 0
      %944 = vmatprep.subr.bf16.mxu0 0
      %945 = vmatpush1.bf16.msra.mxu0 0
      %946 = vmatprep.subr.bf16.mxu0 0
      %947 = vmatpush1.bf16.msra.mxu0 0
      %948 = vmatprep.subr.bf16.mxu0 0
      %949 = vmatpush1.bf16.msra.mxu0 0
      %950 = vmatprep.subr.bf16.mxu0 0
      %951 = vmatpush1.bf16.msra.mxu0 0
      %952 = vmatprep.subr.bf16.mxu0 0
      %953 = vmatpush1.bf16.msra.mxu0 0
      %954 = vmatprep.subr.bf16.mxu0 0
      %955 = vmatpush1.bf16.msra.mxu0 0
      %956 = vmatprep.subr.bf16.mxu0 0
      %957 = vmatpush1.bf16.msra.mxu0 0
      %958 = vmatprep.subr.bf16.mxu0 0
      %959 = vmatpush1.bf16.msra.mxu0 0
      %960 = vmatprep.subr.bf16.mxu0 0
      %961 = vmatpush1.bf16.msra.mxu0 0
      %962 = vmatprep.subr.bf16.mxu0 0
      %963 = vmatpush1.bf16.msra.mxu0 0
      %964 = vmatprep.mubr.bf16.mxu0 0
      %965 = vmatmul.mubr.bf16.gmra.mrb[0].mxu0 %v894
      %v966 = vpop.f32.mrb[0].mxu0
      %v967 = vadd.f32 %v206, %v966
      %v968 = vpop.f32.mrb[0].mxu0
      %v969 = vpop.f32.mrb[0].mxu0
      %v970 = vadd.f32 %v206, %v969
      %v971 = vpop.f32.mrb[0].mxu0
      %972 = vmatprep.mubr.bf16.mxu0 0
      %973 = vmatmul.mubr.bf16.gmra.mrb[0].mxu0 %v897
      %v974 = vpop.f32.mrb[0].mxu0
      %v975 = vadd.f32 %v206, %v974
      %v976 = vpop.f32.mrb[0].mxu0
      %v977 = vpop.f32.mrb[0].mxu0
      %v978 = vadd.f32 %v206, %v977
      %v979 = vpop.f32.mrb[0].mxu0
      %980 = vmatprep.mubr.bf16.mxu0 0
      %981 = vmatmul.mubr.bf16.gmra.mrb[0].mxu0 %v900
      %v982 = vpop.f32.mrb[0].mxu0
      %v983 = vadd.f32 %v206, %v982
      %v984 = vpop.f32.mrb[0].mxu0
      %v985 = vpop.f32.mrb[0].mxu0
      %v986 = vadd.f32 %v206, %v985
      %v987 = vpop.f32.mrb[0].mxu0
      %988 = vmatprep.mubr.bf16.mxu0 0
      %989 = vmatmul.mubr.bf16.gmra.mrb[0].mxu0 %v903
      %v990 = vpop.f32.mrb[0].mxu0
      %v991 = vadd.f32 %v206, %v990
      %v992 = vpop.f32.mrb[0].mxu0
      %v993 = vpop.f32.mrb[0].mxu0
      %v994 = vadd.f32 %v206, %v993
      %v995 = vpop.f32.mrb[0].mxu0
      %996 = vmatprep.mubr.bf16.mxu0 0
      %997 = vmatmul.mubr.bf16.gmra.mrb[0].mxu0 %v906
      %v998 = vpop.f32.mrb[0].mxu0
      %v999 = vadd.f32 %v206, %v998
      %v1000 = vpop.f32.mrb[0].mxu0
      %v1001 = vpop.f32.mrb[0].mxu0
      %v1002 = vadd.f32 %v206, %v1001
      %v1003 = vpop.f32.mrb[0].mxu0
      %1004 = vmatprep.mubr.bf16.mxu0 0
      %1005 = vmatmul.mubr.bf16.gmra.mrb[0].mxu0 %v909
      %v1006 = vpop.f32.mrb[0].mxu0
      %v1007 = vadd.f32 %v206, %v1006
      %v1008 = vpop.f32.mrb[0].mxu0
      %v1009 = vpop.f32.mrb[0].mxu0
      %v1010 = vadd.f32 %v206, %v1009
      %v1011 = vpop.f32.mrb[0].mxu0
      %1012 = vmatprep.mubr.bf16.mxu0 0
      %1013 = vmatmul.mubr.bf16.gmra.mrb[0].mxu0 %v912
      %v1014 = vpop.f32.mrb[0].mxu0
      %v1015 = vadd.f32 %v206, %v1014
      %v1016 = vpop.f32.mrb[0].mxu0
      %v1017 = vpop.f32.mrb[0].mxu0
      %v1018 = vadd.f32 %v206, %v1017
      %v1019 = vpop.f32.mrb[0].mxu0
      %1020 = vmatprep.mubr.bf16.mxu0 0
      %1021 = vmatmul.mubr.bf16.gmra.mrb[0].mxu0 %v915
      %v1022 = vpop.f32.mrb[0].mxu0
      %v1023 = vadd.f32 %v206, %v1022
      %v1024 = vpop.f32.mrb[0].mxu0
      %v1025 = vpop.f32.mrb[0].mxu0
      %v1026 = vadd.f32 %v206, %v1025
      %v1027 = vpop.f32.mrb[0].mxu0
      %1028 = vmatprep.mubr.bf16.mxu0 0
      %1029 = vmatmul.mubr.bf16.gmra.mrb[0].mxu0 %v918
      %v1030 = vpop.f32.mrb[0].mxu0
      %v1031 = vadd.f32 %v206, %v1030
      %v1032 = vpop.f32.mrb[0].mxu0
      %v1033 = vpop.f32.mrb[0].mxu0
      %v1034 = vadd.f32 %v206, %v1033
      %v1035 = vpop.f32.mrb[0].mxu0
      %1036 = vmatprep.mubr.bf16.mxu0 0
      %1037 = vmatmul.mubr.bf16.gmra.mrb[0].mxu0 %v921
      %v1038 = vpop.f32.mrb[0].mxu0
      %v1039 = vadd.f32 %v206, %v1038
      %v1040 = vpop.f32.mrb[0].mxu0
      %v1041 = vpop.f32.mrb[0].mxu0
      %v1042 = vadd.f32 %v206, %v1041
      %v1043 = vpop.f32.mrb[0].mxu0
      %1044 = vmatprep.mubr.bf16.mxu0 0
      %1045 = vmatmul.mubr.bf16.gmra.mrb[0].mxu0 %v924
      %v1046 = vpop.f32.mrb[0].mxu0
      %v1047 = vadd.f32 %v206, %v1046
      %v1048 = vpop.f32.mrb[0].mxu0
      %v1049 = vpop.f32.mrb[0].mxu0
      %v1050 = vadd.f32 %v206, %v1049
      %v1051 = vpop.f32.mrb[0].mxu0
      %1052 = vmatprep.mubr.bf16.mxu0 0
      %1053 = vmatmul.mubr.bf16.gmra.mrb[0].mxu0 %v927
      %v1054 = vpop.f32.mrb[0].mxu0
      %v1055 = vadd.f32 %v206, %v1054
      %v1056 = vpop.f32.mrb[0].mxu0
      %v1057 = vpop.f32.mrb[0].mxu0
      %v1058 = vadd.f32 %v206, %v1057
      %v1059 = vpop.f32.mrb[0].mxu0
      %1060 = vmatprep.mubr.bf16.mxu0 0
      %1061 = vmatmul.mubr.bf16.gmra.mrb[0].mxu0 %v930
      %v1062 = vpop.f32.mrb[0].mxu0
      %v1063 = vadd.f32 %v206, %v1062
      %v1064 = vpop.f32.mrb[0].mxu0
      %v1065 = vpop.f32.mrb[0].mxu0
      %v1066 = vpop.f32.mrb[0].mxu0
      %1067 = vdwg.mxu0
      %v1068 = vmax.f32 %v967, 0.0
      %v1069 = vmax.f32 %v970, 0.0
      %v1070 = vmax.f32 %v975, 0.0
      %v1071 = vmax.f32 %v978, 0.0
      %v1072 = vmax.f32 %v983, 0.0
      %v1073 = vmax.f32 %v986, 0.0
      %v1074 = vmax.f32 %v991, 0.0
      %v1075 = vmax.f32 %v994, 0.0
      %v1076 = vmax.f32 %v999, 0.0
      %v1077 = vmax.f32 %v1002, 0.0
      %v1078 = vmax.f32 %v1007, 0.0
      %v1079 = vmax.f32 %v1010, 0.0
      %v1080 = vmax.f32 %v1015, 0.0
      %v1081 = vmax.f32 %v1018, 0.0
      %v1082 = vmax.f32 %v1023, 0.0
      %v1083 = vmax.f32 %v1026, 0.0
      %v1084 = vmax.f32 %v1031, 0.0
      %v1085 = vmax.f32 %v1034, 0.0
      %v1086 = vmax.f32 %v1039, 0.0
      %v1087 = vmax.f32 %v1042, 0.0
      %v1088 = vmax.f32 %v1047, 0.0
      %v1089 = vmax.f32 %v1050, 0.0
      %v1090 = vmax.f32 %v1055, 0.0
      %v1091 = vmax.f32 %v1058, 0.0
      %v1092 = vmax.f32 %v1063, 0.0
      %v1093 = vmax.f32 %v779, %v1068
      %v1094 = vmax.f32 %v780, %v1069
      %v1095 = vmax.f32 %v781, %v1070
      %v1096 = vmax.f32 %v782, %v1071
      %v1097 = vmax.f32 %v783, %v1072
      %v1098 = vmax.f32 %v784, %v1073
      %v1099 = vmax.f32 %v785, %v1074
      %v1100 = vmax.f32 %v786, %v1075
      %v1101 = vmax.f32 %v787, %v1076
      %v1102 = vmax.f32 %v788, %v1077
      %v1103 = vmax.f32 %v789, %v1078
      %v1104 = vmax.f32 %v790, %v1079
      %v1105 = vmax.f32 %v791, %v1080
      %v1106 = vmax.f32 %v792, %v1081
      %v1107 = vmax.f32 %v793, %v1082
      %v1108 = vmax.f32 %v794, %v1083
      %v1109 = vmax.f32 %v795, %v1084
      %v1110 = vmax.f32 %v796, %v1085
      %v1111 = vmax.f32 %v797, %v1086
      %v1112 = vmax.f32 %v798, %v1087
      %v1113 = vmax.f32 %v799, %v1088
      %v1114 = vmax.f32 %v800, %v1089
      %v1115 = vmax.f32 %v801, %v1090
      %v1116 = vmax.f32 %v802, %v1091
      %v1117 = vmax.f32 %v803, %v1092
      %s1118 = scalar_lea.vmem %s165, 300
      %v1119 = vld [vmem:[%s1118] sm:$0xf]
      %v1120 = vld [vmem:[%s1118 + $0x4] sm:$0xf]
      %v1121 = vld [vmem:[%s1118 + $0x8] sm:$0xf]
      %v1122 = vld [vmem:[%s1118 + $0xc] sm:$0xf]
      %v1123 = vld [vmem:[%s1118 + $0x10] sm:$0xf]
      %v1124 = vld [vmem:[%s1118 + $0x14] sm:$0xf]
      %v1125 = vld [vmem:[%s1118 + $0x18] sm:$0xf]
      %v1126 = vld [vmem:[%s1118 + $0x1c] sm:$0xf]
      %v1127 = vld [vmem:[%s1118 + $0x20] sm:$0xf]
      %v1128 = vld [vmem:[%s1118 + $0x24] sm:$0xf]
      %v1129 = vld [vmem:[%s1118 + $0x28] sm:$0xf]
      %v1130 = vld [vmem:[%s1118 + $0x2c] sm:$0xf]
      %v1131 = vld [vmem:[%s1118 + $0x30] sm:$0xf]
      %v1132 = vld [vmem:[%s1118 + $0x34] sm:$0xf]
      %v1133 = vld [vmem:[%s1118 + $0x38] sm:$0xf]
      %v1134 = vld [vmem:[%s1118 + $0x3c] sm:$0xf]
      %v1135 = vld [vmem:[%s1118 + $0x40] sm:$0xf]
      %v1136 = vld [vmem:[%s1118 + $0x44] sm:$0xf]
      %v1137 = vld [vmem:[%s1118 + $0x48] sm:$0xf]
      %v1138 = vld [vmem:[%s1118 + $0x4c] sm:$0xf]
      %v1139 = vld [vmem:[%s1118 + $0x50] sm:$0xf]
      %v1140 = vld [vmem:[%s1118 + $0x54] sm:$0xf]
      %v1141 = vld [vmem:[%s1118 + $0x58] sm:$0xf]
      %v1142 = vld [vmem:[%s1118 + $0x5c] sm:$0xf]
      %v1143 = vld [vmem:[%s1118 + $0x60] sm:$0x3]
      %v1169 = vunpack.c.l.b16 %v1119
      %v1170 = vunpack.c.l.b16 %v1120
      %v1171 = vunpack.c.l.b16 %v1121
      %v1172 = vunpack.c.l.b16 %v1122
      %v1173 = vunpack.c.l.b16 %v1123
      %v1174 = vunpack.c.l.b16 %v1124
      %v1175 = vunpack.c.l.b16 %v1125
      %v1176 = vunpack.c.l.b16 %v1126
      %v1177 = vunpack.c.l.b16 %v1127
      %v1178 = vunpack.c.l.b16 %v1128
      %v1179 = vunpack.c.l.b16 %v1129
      %v1180 = vunpack.c.l.b16 %v1130
      %v1181 = vunpack.c.l.b16 %v1131
      %v1182 = vunpack.c.l.b16 %v1132
      %v1183 = vunpack.c.l.b16 %v1133
      %v1184 = vunpack.c.l.b16 %v1134
      %v1185 = vunpack.c.l.b16 %v1135
      %v1186 = vunpack.c.l.b16 %v1136
      %v1187 = vunpack.c.l.b16 %v1137
      %v1188 = vunpack.c.l.b16 %v1138
      %v1189 = vunpack.c.l.b16 %v1139
      %v1190 = vunpack.c.l.b16 %v1140
      %v1191 = vunpack.c.l.b16 %v1141
      %v1192 = vunpack.c.l.b16 %v1142
      %v1193 = vunpack.c.l.b16 %v1143
      %v1194 = vpack.c.b16 %v1170, %v1169
      %v1195 = vpack.c.b16 %v1172, %v1171
      %v1196 = vpack.c.b16 %v1174, %v1173
      %v1197 = vpack.c.b16 %v1176, %v1175
      %v1198 = vpack.c.b16 %v1178, %v1177
      %v1199 = vpack.c.b16 %v1180, %v1179
      %v1200 = vpack.c.b16 %v1182, %v1181
      %v1201 = vpack.c.b16 %v1184, %v1183
      %v1202 = vpack.c.b16 %v1186, %v1185
      %v1203 = vpack.c.b16 %v1188, %v1187
      %v1204 = vpack.c.b16 %v1190, %v1189
      %v1205 = vpack.c.b16 %v1192, %v1191
      %v1206 = vpack.c.b16 %v1193, %v1193
      %v1208 = vsel %vm282, %v1194, 0
      %v1211 = vsel %vm282, %v1195, 0
      %v1214 = vsel %vm282, %v1196, 0
      %v1217 = vsel %vm282, %v1197, 0
      %v1220 = vsel %vm282, %v1198, 0
      %v1223 = vsel %vm282, %v1199, 0
      %v1226 = vsel %vm282, %v1200, 0
      %v1229 = vsel %vm282, %v1201, 0
      %v1232 = vsel %vm282, %v1202, 0
      %v1235 = vsel %vm282, %v1203, 0
      %v1238 = vsel %vm282, %v1204, 0
      %v1241 = vsel %vm282, %v1205, 0
      %v1244 = vsel %vm282, %v1206, 0
      %1246 = vmatprep.subr.bf16.mxu0 0
      %1247 = vmatpush1.bf16.msra.mxu0 %v279
      %1248 = vmatprep.subr.bf16.mxu0 0
      %1249 = vmatpush1.bf16.msra.mxu0 %v327
      %1250 = vmatprep.subr.bf16.mxu0 0
      %1251 = vmatpush1.bf16.msra.mxu0 0
      %1252 = vmatprep.subr.bf16.mxu0 0
      %1253 = vmatpush1.bf16.msra.mxu0 0
      %1254 = vmatprep.subr.bf16.mxu0 0
      %1255 = vmatpush1.bf16.msra.mxu0 0
      %1256 = vmatprep.subr.bf16.mxu0 0
      %1257 = vmatpush1.bf16.msra.mxu0 0
      %1258 = vmatprep.subr.bf16.mxu0 0
      %1259 = vmatpush1.bf16.msra.mxu0 0
      %1260 = vmatprep.subr.bf16.mxu0 0
      %1261 = vmatpush1.bf16.msra.mxu0 0
      %1262 = vmatprep.subr.bf16.mxu0 0
      %1263 = vmatpush1.bf16.msra.mxu0 0
      %1264 = vmatprep.subr.bf16.mxu0 0
      %1265 = vmatpush1.bf16.msra.mxu0 0
      %1266 = vmatprep.subr.bf16.mxu0 0
      %1267 = vmatpush1.bf16.msra.mxu0 0
      %1268 = vmatprep.subr.bf16.mxu0 0
      %1269 = vmatpush1.bf16.msra.mxu0 0
      %1270 = vmatprep.subr.bf16.mxu0 0
      %1271 = vmatpush1.bf16.msra.mxu0 0
      %1272 = vmatprep.subr.bf16.mxu0 0
      %1273 = vmatpush1.bf16.msra.mxu0 0
      %1274 = vmatprep.subr.bf16.mxu0 0
      %1275 = vmatpush1.bf16.msra.mxu0 0
      %1276 = vmatprep.subr.bf16.mxu0 0
      %1277 = vmatpush1.bf16.msra.mxu0 0
      %1278 = vmatprep.mubr.bf16.mxu0 0
      %1279 = vmatmul.mubr.bf16.gmra.mrb[0].mxu0 %v1208
      %v1280 = vpop.f32.mrb[0].mxu0
      %v1281 = vadd.f32 %v206, %v1280
      %v1282 = vpop.f32.mrb[0].mxu0
      %v1283 = vpop.f32.mrb[0].mxu0
      %v1284 = vadd.f32 %v206, %v1283
      %v1285 = vpop.f32.mrb[0].mxu0
      %1286 = vmatprep.mubr.bf16.mxu0 0
      %1287 = vmatmul.mubr.bf16.gmra.mrb[0].mxu0 %v1211
      %v1288 = vpop.f32.mrb[0].mxu0
      %v1289 = vadd.f32 %v206, %v1288
      %v1290 = vpop.f32.mrb[0].mxu0
      %v1291 = vpop.f32.mrb[0].mxu0
      %v1292 = vadd.f32 %v206, %v1291
      %v1293 = vpop.f32.mrb[0].mxu0
      %1294 = vmatprep.mubr.bf16.mxu0 0
      %1295 = vmatmul.mubr.bf16.gmra.mrb[0].mxu0 %v1214
      %v1296 = vpop.f32.mrb[0].mxu0
      %v1297 = vadd.f32 %v206, %v1296
      %v1298 = vpop.f32.mrb[0].mxu0
      %v1299 = vpop.f32.mrb[0].mxu0
      %v1300 = vadd.f32 %v206, %v1299
      %v1301 = vpop.f32.mrb[0].mxu0
      %1302 = vmatprep.mubr.bf16.mxu0 0
      %1303 = vmatmul.mubr.bf16.gmra.mrb[0].mxu0 %v1217
      %v1304 = vpop.f32.mrb[0].mxu0
      %v1305 = vadd.f32 %v206, %v1304
      %v1306 = vpop.f32.mrb[0].mxu0
      %v1307 = vpop.f32.mrb[0].mxu0
      %v1308 = vadd.f32 %v206, %v1307
      %v1309 = vpop.f32.mrb[0].mxu0
      %1310 = vmatprep.mubr.bf16.mxu0 0
      %1311 = vmatmul.mubr.bf16.gmra.mrb[0].mxu0 %v1220
      %v1312 = vpop.f32.mrb[0].mxu0
      %v1313 = vadd.f32 %v206, %v1312
      %v1314 = vpop.f32.mrb[0].mxu0
      %v1315 = vpop.f32.mrb[0].mxu0
      %v1316 = vadd.f32 %v206, %v1315
      %v1317 = vpop.f32.mrb[0].mxu0
      %1318 = vmatprep.mubr.bf16.mxu0 0
      %1319 = vmatmul.mubr.bf16.gmra.mrb[0].mxu0 %v1223
      %v1320 = vpop.f32.mrb[0].mxu0
      %v1321 = vadd.f32 %v206, %v1320
      %v1322 = vpop.f32.mrb[0].mxu0
      %v1323 = vpop.f32.mrb[0].mxu0
      %v1324 = vadd.f32 %v206, %v1323
      %v1325 = vpop.f32.mrb[0].mxu0
      %1326 = vmatprep.mubr.bf16.mxu0 0
      %1327 = vmatmul.mubr.bf16.gmra.mrb[0].mxu0 %v1226
      %v1328 = vpop.f32.mrb[0].mxu0
      %v1329 = vadd.f32 %v206, %v1328
      %v1330 = vpop.f32.mrb[0].mxu0
      %v1331 = vpop.f32.mrb[0].mxu0
      %v1332 = vadd.f32 %v206, %v1331
      %v1333 = vpop.f32.mrb[0].mxu0
      %1334 = vmatprep.mubr.bf16.mxu0 0
      %1335 = vmatmul.mubr.bf16.gmra.mrb[0].mxu0 %v1229
      %v1336 = vpop.f32.mrb[0].mxu0
      %v1337 = vadd.f32 %v206, %v1336
      %v1338 = vpop.f32.mrb[0].mxu0
      %v1339 = vpop.f32.mrb[0].mxu0
      %v1340 = vadd.f32 %v206, %v1339
      %v1341 = vpop.f32.mrb[0].mxu0
      %1342 = vmatprep.mubr.bf16.mxu0 0
      %1343 = vmatmul.mubr.bf16.gmra.mrb[0].mxu0 %v1232
      %v1344 = vpop.f32.mrb[0].mxu0
      %v1345 = vadd.f32 %v206, %v1344
      %v1346 = vpop.f32.mrb[0].mxu0
      %v1347 = vpop.f32.mrb[0].mxu0
      %v1348 = vadd.f32 %v206, %v1347
      %v1349 = vpop.f32.mrb[0].mxu0
      %1350 = vmatprep.mubr.bf16.mxu0 0
      %1351 = vmatmul.mubr.bf16.gmra.mrb[0].mxu0 %v1235
      %v1352 = vpop.f32.mrb[0].mxu0
      %v1353 = vadd.f32 %v206, %v1352
      %v1354 = vpop.f32.mrb[0].mxu0
      %v1355 = vpop.f32.mrb[0].mxu0
      %v1356 = vadd.f32 %v206, %v1355
      %v1357 = vpop.f32.mrb[0].mxu0
      %1358 = vmatprep.mubr.bf16.mxu0 0
      %1359 = vmatmul.mubr.bf16.gmra.mrb[0].mxu0 %v1238
      %v1360 = vpop.f32.mrb[0].mxu0
      %v1361 = vadd.f32 %v206, %v1360
      %v1362 = vpop.f32.mrb[0].mxu0
      %v1363 = vpop.f32.mrb[0].mxu0
      %v1364 = vadd.f32 %v206, %v1363
      %v1365 = vpop.f32.mrb[0].mxu0
      %1366 = vmatprep.mubr.bf16.mxu0 0
      %1367 = vmatmul.mubr.bf16.gmra.mrb[0].mxu0 %v1241
      %v1368 = vpop.f32.mrb[0].mxu0
      %v1369 = vadd.f32 %v206, %v1368
      %v1370 = vpop.f32.mrb[0].mxu0
      %v1371 = vpop.f32.mrb[0].mxu0
      %v1372 = vadd.f32 %v206, %v1371
      %v1373 = vpop.f32.mrb[0].mxu0
      %1374 = vmatprep.mubr.bf16.mxu0 0
      %1375 = vmatmul.mubr.bf16.gmra.mrb[0].mxu0 %v1244
      %v1376 = vpop.f32.mrb[0].mxu0
      %v1377 = vadd.f32 %v206, %v1376
      %v1378 = vpop.f32.mrb[0].mxu0
      %v1379 = vpop.f32.mrb[0].mxu0
      %v1380 = vpop.f32.mrb[0].mxu0
      %1381 = vdwg.mxu0
      %v1382 = vmax.f32 %v1281, 0.0
      %v1383 = vmax.f32 %v1284, 0.0
      %v1384 = vmax.f32 %v1289, 0.0
      %v1385 = vmax.f32 %v1292, 0.0
      %v1386 = vmax.f32 %v1297, 0.0
      %v1387 = vmax.f32 %v1300, 0.0
      %v1388 = vmax.f32 %v1305, 0.0
      %v1389 = vmax.f32 %v1308, 0.0
      %v1390 = vmax.f32 %v1313, 0.0
      %v1391 = vmax.f32 %v1316, 0.0
      %v1392 = vmax.f32 %v1321, 0.0
      %v1393 = vmax.f32 %v1324, 0.0
      %v1394 = vmax.f32 %v1329, 0.0
      %v1395 = vmax.f32 %v1332, 0.0
      %v1396 = vmax.f32 %v1337, 0.0
      %v1397 = vmax.f32 %v1340, 0.0
      %v1398 = vmax.f32 %v1345, 0.0
      %v1399 = vmax.f32 %v1348, 0.0
      %v1400 = vmax.f32 %v1353, 0.0
      %v1401 = vmax.f32 %v1356, 0.0
      %v1402 = vmax.f32 %v1361, 0.0
      %v1403 = vmax.f32 %v1364, 0.0
      %v1404 = vmax.f32 %v1369, 0.0
      %v1405 = vmax.f32 %v1372, 0.0
      %v1406 = vmax.f32 %v1377, 0.0
      %v1407 = vmax.f32 %v1093, %v1382
      %v1408 = vmax.f32 %v1094, %v1383
      %v1409 = vmax.f32 %v1095, %v1384
      %v1410 = vmax.f32 %v1096, %v1385
      %v1411 = vmax.f32 %v1097, %v1386
      %v1412 = vmax.f32 %v1098, %v1387
      %v1413 = vmax.f32 %v1099, %v1388
      %v1414 = vmax.f32 %v1100, %v1389
      %v1415 = vmax.f32 %v1101, %v1390
      %v1416 = vmax.f32 %v1102, %v1391
      %v1417 = vmax.f32 %v1103, %v1392
      %v1418 = vmax.f32 %v1104, %v1393
      %v1419 = vmax.f32 %v1105, %v1394
      %v1420 = vmax.f32 %v1106, %v1395
      %v1421 = vmax.f32 %v1107, %v1396
      %v1422 = vmax.f32 %v1108, %v1397
      %v1423 = vmax.f32 %v1109, %v1398
      %v1424 = vmax.f32 %v1110, %v1399
      %v1425 = vmax.f32 %v1111, %v1400
      %v1426 = vmax.f32 %v1112, %v1401
      %v1427 = vmax.f32 %v1113, %v1402
      %v1428 = vmax.f32 %v1114, %v1403
      %v1429 = vmax.f32 %v1115, %v1404
      %v1430 = vmax.f32 %v1116, %v1405
      %v1431 = vmax.f32 %v1117, %v1406
      %v1457 = vcombine.high %v1407, %v1407
      %v1459 = vunpack.c.l.s4 1983009808
      %v1460 = vunpack.c.0.s8 %v1459
      %v1461 = vlaneseq
      %v1462 = vshrl.u32 %v1461, 7
      %v1463 = vsub.s32 %v1460, %v1462
      %v1464 = vrot.slane %v1407, %v1463
      %v1466 = vunpack.c.l.s4 1983009808
      %v1467 = vunpack.c.0.s8 %v1466
      %v1468 = vlaneseq
      %v1469 = vshrl.u32 %v1468, 7
      %v1470 = vsub.s32 %v1467, %v1469
      %v1471 = vrot.slane %v1457, %v1470
      %v1472 = vcombine.high %v1464, %v1464
      %v1473 = vcombine.high %v1471, %v1471
      %v1474 = vcombine.high %v1408, %v1408
      %v1476 = vunpack.c.l.s4 1983009808
      %v1477 = vunpack.c.0.s8 %v1476
      %v1478 = vlaneseq
      %v1479 = vshrl.u32 %v1478, 7
      %v1480 = vsub.s32 %v1477, %v1479
      %v1481 = vrot.slane %v1408, %v1480
      %v1483 = vunpack.c.l.s4 1983009808
      %v1484 = vunpack.c.0.s8 %v1483
      %v1485 = vlaneseq
      %v1486 = vshrl.u32 %v1485, 7
      %v1487 = vsub.s32 %v1484, %v1486
      %v1488 = vrot.slane %v1474, %v1487
      %v1489 = vcombine.high %v1481, %v1481
      %v1490 = vcombine.high %v1488, %v1488
      %v1491 = vcombine.high %v1409, %v1409
      %v1493 = vunpack.c.l.s4 1983009808
      %v1494 = vunpack.c.0.s8 %v1493
      %v1495 = vlaneseq
      %v1496 = vshrl.u32 %v1495, 7
      %v1497 = vsub.s32 %v1494, %v1496
      %v1498 = vrot.slane %v1409, %v1497
      %v1500 = vunpack.c.l.s4 1983009808
      %v1501 = vunpack.c.0.s8 %v1500
      %v1502 = vlaneseq
      %v1503 = vshrl.u32 %v1502, 7
      %v1504 = vsub.s32 %v1501, %v1503
      %v1505 = vrot.slane %v1491, %v1504
      %v1506 = vcombine.high %v1498, %v1498
      %v1507 = vcombine.high %v1505, %v1505
      %v1508 = vcombine.high %v1410, %v1410
      %v1510 = vunpack.c.l.s4 1983009808
      %v1511 = vunpack.c.0.s8 %v1510
      %v1512 = vlaneseq
      %v1513 = vshrl.u32 %v1512, 7
      %v1514 = vsub.s32 %v1511, %v1513
      %v1515 = vrot.slane %v1410, %v1514
      %v1517 = vunpack.c.l.s4 1983009808
      %v1518 = vunpack.c.0.s8 %v1517
      %v1519 = vlaneseq
      %v1520 = vshrl.u32 %v1519, 7
      %v1521 = vsub.s32 %v1518, %v1520
      %v1522 = vrot.slane %v1508, %v1521
      %v1523 = vcombine.high %v1515, %v1515
      %v1524 = vcombine.high %v1522, %v1522
      %v1525 = vcombine.high %v1411, %v1411
      %v1527 = vunpack.c.l.s4 1983009808
      %v1528 = vunpack.c.0.s8 %v1527
      %v1529 = vlaneseq
      %v1530 = vshrl.u32 %v1529, 7
      %v1531 = vsub.s32 %v1528, %v1530
      %v1532 = vrot.slane %v1411, %v1531
      %v1534 = vunpack.c.l.s4 1983009808
      %v1535 = vunpack.c.0.s8 %v1534
      %v1536 = vlaneseq
      %v1537 = vshrl.u32 %v1536, 7
      %v1538 = vsub.s32 %v1535, %v1537
      %v1539 = vrot.slane %v1525, %v1538
      %v1540 = vcombine.high %v1532, %v1532
      %v1541 = vcombine.high %v1539, %v1539
      %v1542 = vcombine.high %v1412, %v1412
      %v1544 = vunpack.c.l.s4 1983009808
      %v1545 = vunpack.c.0.s8 %v1544
      %v1546 = vlaneseq
      %v1547 = vshrl.u32 %v1546, 7
      %v1548 = vsub.s32 %v1545, %v1547
      %v1549 = vrot.slane %v1412, %v1548
      %v1551 = vunpack.c.l.s4 1983009808
      %v1552 = vunpack.c.0.s8 %v1551
      %v1553 = vlaneseq
      %v1554 = vshrl.u32 %v1553, 7
      %v1555 = vsub.s32 %v1552, %v1554
      %v1556 = vrot.slane %v1542, %v1555
      %v1557 = vcombine.high %v1549, %v1549
      %v1558 = vcombine.high %v1556, %v1556
      %v1559 = vcombine.high %v1413, %v1413
      %v1561 = vunpack.c.l.s4 1983009808
      %v1562 = vunpack.c.0.s8 %v1561
      %v1563 = vlaneseq
      %v1564 = vshrl.u32 %v1563, 7
      %v1565 = vsub.s32 %v1562, %v1564
      %v1566 = vrot.slane %v1413, %v1565
      %v1568 = vunpack.c.l.s4 1983009808
      %v1569 = vunpack.c.0.s8 %v1568
      %v1570 = vlaneseq
      %v1571 = vshrl.u32 %v1570, 7
      %v1572 = vsub.s32 %v1569, %v1571
      %v1573 = vrot.slane %v1559, %v1572
      %v1574 = vcombine.high %v1566, %v1566
      %v1575 = vcombine.high %v1573, %v1573
      %v1576 = vcombine.high %v1414, %v1414
      %v1578 = vunpack.c.l.s4 1983009808
      %v1579 = vunpack.c.0.s8 %v1578
      %v1580 = vlaneseq
      %v1581 = vshrl.u32 %v1580, 7
      %v1582 = vsub.s32 %v1579, %v1581
      %v1583 = vrot.slane %v1414, %v1582
      %v1585 = vunpack.c.l.s4 1983009808
      %v1586 = vunpack.c.0.s8 %v1585
      %v1587 = vlaneseq
      %v1588 = vshrl.u32 %v1587, 7
      %v1589 = vsub.s32 %v1586, %v1588
      %v1590 = vrot.slane %v1576, %v1589
      %v1591 = vcombine.high %v1583, %v1583
      %v1592 = vcombine.high %v1590, %v1590
      %v1593 = vcombine.high %v1415, %v1415
      %v1595 = vunpack.c.l.s4 1983009808
      %v1596 = vunpack.c.0.s8 %v1595
      %v1597 = vlaneseq
      %v1598 = vshrl.u32 %v1597, 7
      %v1599 = vsub.s32 %v1596, %v1598
      %v1600 = vrot.slane %v1415, %v1599
      %v1602 = vunpack.c.l.s4 1983009808
      %v1603 = vunpack.c.0.s8 %v1602
      %v1604 = vlaneseq
      %v1605 = vshrl.u32 %v1604, 7
      %v1606 = vsub.s32 %v1603, %v1605
      %v1607 = vrot.slane %v1593, %v1606
      %v1608 = vcombine.high %v1600, %v1600
      %v1609 = vcombine.high %v1607, %v1607
      %v1610 = vcombine.high %v1416, %v1416
      %v1612 = vunpack.c.l.s4 1983009808
      %v1613 = vunpack.c.0.s8 %v1612
      %v1614 = vlaneseq
      %v1615 = vshrl.u32 %v1614, 7
      %v1616 = vsub.s32 %v1613, %v1615
      %v1617 = vrot.slane %v1416, %v1616
      %v1619 = vunpack.c.l.s4 1983009808
      %v1620 = vunpack.c.0.s8 %v1619
      %v1621 = vlaneseq
      %v1622 = vshrl.u32 %v1621, 7
      %v1623 = vsub.s32 %v1620, %v1622
      %v1624 = vrot.slane %v1610, %v1623
      %v1625 = vcombine.high %v1617, %v1617
      %v1626 = vcombine.high %v1624, %v1624
      %v1627 = vcombine.high %v1417, %v1417
      %v1629 = vunpack.c.l.s4 1983009808
      %v1630 = vunpack.c.0.s8 %v1629
      %v1631 = vlaneseq
      %v1632 = vshrl.u32 %v1631, 7
      %v1633 = vsub.s32 %v1630, %v1632
      %v1634 = vrot.slane %v1417, %v1633
      %v1636 = vunpack.c.l.s4 1983009808
      %v1637 = vunpack.c.0.s8 %v1636
      %v1638 = vlaneseq
      %v1639 = vshrl.u32 %v1638, 7
      %v1640 = vsub.s32 %v1637, %v1639
      %v1641 = vrot.slane %v1627, %v1640
      %v1642 = vcombine.high %v1634, %v1634
      %v1643 = vcombine.high %v1641, %v1641
      %v1644 = vcombine.high %v1418, %v1418
      %v1646 = vunpack.c.l.s4 1983009808
      %v1647 = vunpack.c.0.s8 %v1646
      %v1648 = vlaneseq
      %v1649 = vshrl.u32 %v1648, 7
      %v1650 = vsub.s32 %v1647, %v1649
      %v1651 = vrot.slane %v1418, %v1650
      %v1653 = vunpack.c.l.s4 1983009808
      %v1654 = vunpack.c.0.s8 %v1653
      %v1655 = vlaneseq
      %v1656 = vshrl.u32 %v1655, 7
      %v1657 = vsub.s32 %v1654, %v1656
      %v1658 = vrot.slane %v1644, %v1657
      %v1659 = vcombine.high %v1651, %v1651
      %v1660 = vcombine.high %v1658, %v1658
      %v1661 = vcombine.high %v1419, %v1419
      %v1663 = vunpack.c.l.s4 1983009808
      %v1664 = vunpack.c.0.s8 %v1663
      %v1665 = vlaneseq
      %v1666 = vshrl.u32 %v1665, 7
      %v1667 = vsub.s32 %v1664, %v1666
      %v1668 = vrot.slane %v1419, %v1667
      %v1670 = vunpack.c.l.s4 1983009808
      %v1671 = vunpack.c.0.s8 %v1670
      %v1672 = vlaneseq
      %v1673 = vshrl.u32 %v1672, 7
      %v1674 = vsub.s32 %v1671, %v1673
      %v1675 = vrot.slane %v1661, %v1674
      %v1676 = vcombine.high %v1668, %v1668
      %v1677 = vcombine.high %v1675, %v1675
      %v1678 = vcombine.high %v1420, %v1420
      %v1680 = vunpack.c.l.s4 1983009808
      %v1681 = vunpack.c.0.s8 %v1680
      %v1682 = vlaneseq
      %v1683 = vshrl.u32 %v1682, 7
      %v1684 = vsub.s32 %v1681, %v1683
      %v1685 = vrot.slane %v1420, %v1684
      %v1687 = vunpack.c.l.s4 1983009808
      %v1688 = vunpack.c.0.s8 %v1687
      %v1689 = vlaneseq
      %v1690 = vshrl.u32 %v1689, 7
      %v1691 = vsub.s32 %v1688, %v1690
      %v1692 = vrot.slane %v1678, %v1691
      %v1693 = vcombine.high %v1685, %v1685
      %v1694 = vcombine.high %v1692, %v1692
      %v1695 = vcombine.high %v1421, %v1421
      %v1697 = vunpack.c.l.s4 1983009808
      %v1698 = vunpack.c.0.s8 %v1697
      %v1699 = vlaneseq
      %v1700 = vshrl.u32 %v1699, 7
      %v1701 = vsub.s32 %v1698, %v1700
      %v1702 = vrot.slane %v1421, %v1701
      %v1704 = vunpack.c.l.s4 1983009808
      %v1705 = vunpack.c.0.s8 %v1704
      %v1706 = vlaneseq
      %v1707 = vshrl.u32 %v1706, 7
      %v1708 = vsub.s32 %v1705, %v1707
      %v1709 = vrot.slane %v1695, %v1708
      %v1710 = vcombine.high %v1702, %v1702
      %v1711 = vcombine.high %v1709, %v1709
      %v1712 = vcombine.high %v1422, %v1422
      %v1714 = vunpack.c.l.s4 1983009808
      %v1715 = vunpack.c.0.s8 %v1714
      %v1716 = vlaneseq
      %v1717 = vshrl.u32 %v1716, 7
      %v1718 = vsub.s32 %v1715, %v1717
      %v1719 = vrot.slane %v1422, %v1718
      %v1721 = vunpack.c.l.s4 1983009808
      %v1722 = vunpack.c.0.s8 %v1721
      %v1723 = vlaneseq
      %v1724 = vshrl.u32 %v1723, 7
      %v1725 = vsub.s32 %v1722, %v1724
      %v1726 = vrot.slane %v1712, %v1725
      %v1727 = vcombine.high %v1719, %v1719
      %v1728 = vcombine.high %v1726, %v1726
      %v1729 = vcombine.high %v1423, %v1423
      %v1731 = vunpack.c.l.s4 1983009808
      %v1732 = vunpack.c.0.s8 %v1731
      %v1733 = vlaneseq
      %v1734 = vshrl.u32 %v1733, 7
      %v1735 = vsub.s32 %v1732, %v1734
      %v1736 = vrot.slane %v1423, %v1735
      %v1738 = vunpack.c.l.s4 1983009808
      %v1739 = vunpack.c.0.s8 %v1738
      %v1740 = vlaneseq
      %v1741 = vshrl.u32 %v1740, 7
      %v1742 = vsub.s32 %v1739, %v1741
      %v1743 = vrot.slane %v1729, %v1742
      %v1744 = vcombine.high %v1736, %v1736
      %v1745 = vcombine.high %v1743, %v1743
      %v1746 = vcombine.high %v1424, %v1424
      %v1748 = vunpack.c.l.s4 1983009808
      %v1749 = vunpack.c.0.s8 %v1748
      %v1750 = vlaneseq
      %v1751 = vshrl.u32 %v1750, 7
      %v1752 = vsub.s32 %v1749, %v1751
      %v1753 = vrot.slane %v1424, %v1752
      %v1755 = vunpack.c.l.s4 1983009808
      %v1756 = vunpack.c.0.s8 %v1755
      %v1757 = vlaneseq
      %v1758 = vshrl.u32 %v1757, 7
      %v1759 = vsub.s32 %v1756, %v1758
      %v1760 = vrot.slane %v1746, %v1759
      %v1761 = vcombine.high %v1753, %v1753
      %v1762 = vcombine.high %v1760, %v1760
      %v1763 = vcombine.high %v1425, %v1425
      %v1765 = vunpack.c.l.s4 1983009808
      %v1766 = vunpack.c.0.s8 %v1765
      %v1767 = vlaneseq
      %v1768 = vshrl.u32 %v1767, 7
      %v1769 = vsub.s32 %v1766, %v1768
      %v1770 = vrot.slane %v1425, %v1769
      %v1772 = vunpack.c.l.s4 1983009808
      %v1773 = vunpack.c.0.s8 %v1772
      %v1774 = vlaneseq
      %v1775 = vshrl.u32 %v1774, 7
      %v1776 = vsub.s32 %v1773, %v1775
      %v1777 = vrot.slane %v1763, %v1776
      %v1778 = vcombine.high %v1770, %v1770
      %v1779 = vcombine.high %v1777, %v1777
      %v1780 = vcombine.high %v1426, %v1426
      %v1782 = vunpack.c.l.s4 1983009808
      %v1783 = vunpack.c.0.s8 %v1782
      %v1784 = vlaneseq
      %v1785 = vshrl.u32 %v1784, 7
      %v1786 = vsub.s32 %v1783, %v1785
      %v1787 = vrot.slane %v1426, %v1786
      %v1789 = vunpack.c.l.s4 1983009808
      %v1790 = vunpack.c.0.s8 %v1789
      %v1791 = vlaneseq
      %v1792 = vshrl.u32 %v1791, 7
      %v1793 = vsub.s32 %v1790, %v1792
      %v1794 = vrot.slane %v1780, %v1793
      %v1795 = vcombine.high %v1787, %v1787
      %v1796 = vcombine.high %v1794, %v1794
      %v1797 = vcombine.high %v1427, %v1427
      %v1799 = vunpack.c.l.s4 1983009808
      %v1800 = vunpack.c.0.s8 %v1799
      %v1801 = vlaneseq
      %v1802 = vshrl.u32 %v1801, 7
      %v1803 = vsub.s32 %v1800, %v1802
      %v1804 = vrot.slane %v1427, %v1803
      %v1806 = vunpack.c.l.s4 1983009808
      %v1807 = vunpack.c.0.s8 %v1806
      %v1808 = vlaneseq
      %v1809 = vshrl.u32 %v1808, 7
      %v1810 = vsub.s32 %v1807, %v1809
      %v1811 = vrot.slane %v1797, %v1810
      %v1812 = vcombine.high %v1804, %v1804
      %v1813 = vcombine.high %v1811, %v1811
      %v1814 = vcombine.high %v1428, %v1428
      %v1816 = vunpack.c.l.s4 1983009808
      %v1817 = vunpack.c.0.s8 %v1816
      %v1818 = vlaneseq
      %v1819 = vshrl.u32 %v1818, 7
      %v1820 = vsub.s32 %v1817, %v1819
      %v1821 = vrot.slane %v1428, %v1820
      %v1823 = vunpack.c.l.s4 1983009808
      %v1824 = vunpack.c.0.s8 %v1823
      %v1825 = vlaneseq
      %v1826 = vshrl.u32 %v1825, 7
      %v1827 = vsub.s32 %v1824, %v1826
      %v1828 = vrot.slane %v1814, %v1827
      %v1829 = vcombine.high %v1821, %v1821
      %v1830 = vcombine.high %v1828, %v1828
      %v1831 = vcombine.high %v1429, %v1429
      %v1833 = vunpack.c.l.s4 1983009808
      %v1834 = vunpack.c.0.s8 %v1833
      %v1835 = vlaneseq
      %v1836 = vshrl.u32 %v1835, 7
      %v1837 = vsub.s32 %v1834, %v1836
      %v1838 = vrot.slane %v1429, %v1837
      %v1840 = vunpack.c.l.s4 1983009808
      %v1841 = vunpack.c.0.s8 %v1840
      %v1842 = vlaneseq
      %v1843 = vshrl.u32 %v1842, 7
      %v1844 = vsub.s32 %v1841, %v1843
      %v1845 = vrot.slane %v1831, %v1844
      %v1846 = vcombine.high %v1838, %v1838
      %v1847 = vcombine.high %v1845, %v1845
      %v1848 = vcombine.high %v1430, %v1430
      %v1850 = vunpack.c.l.s4 1983009808
      %v1851 = vunpack.c.0.s8 %v1850
      %v1852 = vlaneseq
      %v1853 = vshrl.u32 %v1852, 7
      %v1854 = vsub.s32 %v1851, %v1853
      %v1855 = vrot.slane %v1430, %v1854
      %v1857 = vunpack.c.l.s4 1983009808
      %v1858 = vunpack.c.0.s8 %v1857
      %v1859 = vlaneseq
      %v1860 = vshrl.u32 %v1859, 7
      %v1861 = vsub.s32 %v1858, %v1860
      %v1862 = vrot.slane %v1848, %v1861
      %v1863 = vcombine.high %v1855, %v1855
      %v1864 = vcombine.high %v1862, %v1862
      %v1866 = vunpack.c.l.s4 1983009808
      %v1867 = vunpack.c.0.s8 %v1866
      %v1868 = vlaneseq
      %v1869 = vshrl.u32 %v1868, 7
      %v1870 = vsub.s32 %v1867, %v1869
      %v1871 = vrot.slane %v1431, %v1870
      %v1872 = vcombine.high %v1871, %v1871
      %v1873 = vcombine.low %v1464, %v1472
      %v1874 = vcombine.low %v1471, %v1473
      %v1876 = vunpack.c.l.s4 1983009808
      %v1877 = vunpack.c.0.s8 %v1876
      %v1878 = vlaneseq
      %v1879 = vshrl.u32 %v1878, 7
      %v1880 = vsub.s32 %v1877, %v1879
      %v1881 = vrot.slane %v1873, %v1880
      %v1883 = vunpack.c.l.s4 1983009808
      %v1884 = vunpack.c.0.s8 %v1883
      %v1885 = vlaneseq
      %v1886 = vshrl.u32 %v1885, 7
      %v1887 = vsub.s32 %v1884, %v1886
      %v1888 = vrot.slane %v1874, %v1887
      %v1889 = vcombine.low %v1881, %v1888
      %v1890 = vcombine.low %v1481, %v1489
      %v1892 = vunpack.c.l.s4 1983009808
      %v1893 = vunpack.c.0.s8 %v1892
      %v1894 = vlaneseq
      %v1895 = vshrl.u32 %v1894, 7
      %v1896 = vsub.s32 %v1893, %v1895
      %v1897 = vrot.slane %v1890, %v1896
      %v1899 = vunpack.c.l.s4 1983009808
      %v1900 = vunpack.c.0.s8 %v1899
      %v1901 = vlaneseq
      %v1902 = vshrl.u32 %v1901, 7
      %v1903 = vsub.s32 %v1900, %v1902
      %v1904 = vrot.slane %v1488, %v1903
      %v1905 = vcombine.low %v1897, %v1904
      %v1906 = vcombine.low %v1490, %v1498
      %v1907 = vcombine.low %v1506, %v1505
      %v1909 = vunpack.c.l.s4 1983009808
      %v1910 = vunpack.c.0.s8 %v1909
      %v1911 = vlaneseq
      %v1912 = vshrl.u32 %v1911, 7
      %v1913 = vsub.s32 %v1910, %v1912
      %v1914 = vrot.slane %v1906, %v1913
      %v1916 = vunpack.c.l.s4 1983009808
      %v1917 = vunpack.c.0.s8 %v1916
      %v1918 = vlaneseq
      %v1919 = vshrl.u32 %v1918, 7
      %v1920 = vsub.s32 %v1917, %v1919
      %v1921 = vrot.slane %v1907, %v1920
      %v1922 = vcombine.low %v1914, %v1921
      %v1923 = vcombine.low %v1507, %v1515
      %v1925 = vunpack.c.l.s4 1983009808
      %v1926 = vunpack.c.0.s8 %v1925
      %v1927 = vlaneseq
      %v1928 = vshrl.u32 %v1927, 7
      %v1929 = vsub.s32 %v1926, %v1928
      %v1930 = vrot.slane %v1923, %v1929
      %v1932 = vunpack.c.l.s4 1983009808
      %v1933 = vunpack.c.0.s8 %v1932
      %v1934 = vlaneseq
      %v1935 = vshrl.u32 %v1934, 7
      %v1936 = vsub.s32 %v1933, %v1935
      %v1937 = vrot.slane %v1523, %v1936
      %v1938 = vcombine.low %v1930, %v1937
      %v1939 = vcombine.low %v1522, %v1524
      %v1940 = vcombine.low %v1532, %v1540
      %v1942 = vunpack.c.l.s4 1983009808
      %v1943 = vunpack.c.0.s8 %v1942
      %v1944 = vlaneseq
      %v1945 = vshrl.u32 %v1944, 7
      %v1946 = vsub.s32 %v1943, %v1945
      %v1947 = vrot.slane %v1939, %v1946
      %v1949 = vunpack.c.l.s4 1983009808
      %v1950 = vunpack.c.0.s8 %v1949
      %v1951 = vlaneseq
      %v1952 = vshrl.u32 %v1951, 7
      %v1953 = vsub.s32 %v1950, %v1952
      %v1954 = vrot.slane %v1940, %v1953
      %v1955 = vcombine.low %v1947, %v1954
      %v1956 = vcombine.low %v1539, %v1541
      %v1958 = vunpack.c.l.s4 1983009808
      %v1959 = vunpack.c.0.s8 %v1958
      %v1960 = vlaneseq
      %v1961 = vshrl.u32 %v1960, 7
      %v1962 = vsub.s32 %v1959, %v1961
      %v1963 = vrot.slane %v1956, %v1962
      %v1965 = vunpack.c.l.s4 1983009808
      %v1966 = vunpack.c.0.s8 %v1965
      %v1967 = vlaneseq
      %v1968 = vshrl.u32 %v1967, 7
      %v1969 = vsub.s32 %v1966, %v1968
      %v1970 = vrot.slane %v1549, %v1969
      %v1971 = vcombine.low %v1963, %v1970
      %v1972 = vcombine.low %v1557, %v1556
      %v1973 = vcombine.low %v1558, %v1566
      %v1975 = vunpack.c.l.s4 1983009808
      %v1976 = vunpack.c.0.s8 %v1975
      %v1977 = vlaneseq
      %v1978 = vshrl.u32 %v1977, 7
      %v1979 = vsub.s32 %v1976, %v1978
      %v1980 = vrot.slane %v1972, %v1979
      %v1982 = vunpack.c.l.s4 1983009808
      %v1983 = vunpack.c.0.s8 %v1982
      %v1984 = vlaneseq
      %v1985 = vshrl.u32 %v1984, 7
      %v1986 = vsub.s32 %v1983, %v1985
      %v1987 = vrot.slane %v1973, %v1986
      %v1988 = vcombine.low %v1980, %v1987
      %v1989 = vcombine.low %v1574, %v1573
      %v1991 = vunpack.c.l.s4 1983009808
      %v1992 = vunpack.c.0.s8 %v1991
      %v1993 = vlaneseq
      %v1994 = vshrl.u32 %v1993, 7
      %v1995 = vsub.s32 %v1992, %v1994
      %v1996 = vrot.slane %v1989, %v1995
      %v1998 = vunpack.c.l.s4 1983009808
      %v1999 = vunpack.c.0.s8 %v1998
      %v2000 = vlaneseq
      %v2001 = vshrl.u32 %v2000, 7
      %v2002 = vsub.s32 %v1999, %v2001
      %v2003 = vrot.slane %v1575, %v2002
      %v2004 = vcombine.low %v1996, %v2003
      %v2005 = vcombine.low %v1583, %v1591
      %v2006 = vcombine.low %v1590, %v1592
      %v2008 = vunpack.c.l.s4 1983009808
      %v2009 = vunpack.c.0.s8 %v2008
      %v2010 = vlaneseq
      %v2011 = vshrl.u32 %v2010, 7
      %v2012 = vsub.s32 %v2009, %v2011
      %v2013 = vrot.slane %v2005, %v2012
      %v2015 = vunpack.c.l.s4 1983009808
      %v2016 = vunpack.c.0.s8 %v2015
      %v2017 = vlaneseq
      %v2018 = vshrl.u32 %v2017, 7
      %v2019 = vsub.s32 %v2016, %v2018
      %v2020 = vrot.slane %v2006, %v2019
      %v2021 = vcombine.low %v2013, %v2020
      %v2022 = vcombine.low %v1600, %v1608
      %v2024 = vunpack.c.l.s4 1983009808
      %v2025 = vunpack.c.0.s8 %v2024
      %v2026 = vlaneseq
      %v2027 = vshrl.u32 %v2026, 7
      %v2028 = vsub.s32 %v2025, %v2027
      %v2029 = vrot.slane %v2022, %v2028
      %v2031 = vunpack.c.l.s4 1983009808
      %v2032 = vunpack.c.0.s8 %v2031
      %v2033 = vlaneseq
      %v2034 = vshrl.u32 %v2033, 7
      %v2035 = vsub.s32 %v2032, %v2034
      %v2036 = vrot.slane %v1607, %v2035
      %v2037 = vcombine.low %v2029, %v2036
      %v2038 = vcombine.low %v1609, %v1617
      %v2039 = vcombine.low %v1625, %v1624
      %v2041 = vunpack.c.l.s4 1983009808
      %v2042 = vunpack.c.0.s8 %v2041
      %v2043 = vlaneseq
      %v2044 = vshrl.u32 %v2043, 7
      %v2045 = vsub.s32 %v2042, %v2044
      %v2046 = vrot.slane %v2038, %v2045
      %v2048 = vunpack.c.l.s4 1983009808
      %v2049 = vunpack.c.0.s8 %v2048
      %v2050 = vlaneseq
      %v2051 = vshrl.u32 %v2050, 7
      %v2052 = vsub.s32 %v2049, %v2051
      %v2053 = vrot.slane %v2039, %v2052
      %v2054 = vcombine.low %v2046, %v2053
      %v2055 = vcombine.low %v1626, %v1634
      %v2057 = vunpack.c.l.s4 1983009808
      %v2058 = vunpack.c.0.s8 %v2057
      %v2059 = vlaneseq
      %v2060 = vshrl.u32 %v2059, 7
      %v2061 = vsub.s32 %v2058, %v2060
      %v2062 = vrot.slane %v2055, %v2061
      %v2064 = vunpack.c.l.s4 1983009808
      %v2065 = vunpack.c.0.s8 %v2064
      %v2066 = vlaneseq
      %v2067 = vshrl.u32 %v2066, 7
      %v2068 = vsub.s32 %v2065, %v2067
      %v2069 = vrot.slane %v1642, %v2068
      %v2070 = vcombine.low %v2062, %v2069
      %v2071 = vcombine.low %v1641, %v1643
      %v2072 = vcombine.low %v1651, %v1659
      %v2074 = vunpack.c.l.s4 1983009808
      %v2075 = vunpack.c.0.s8 %v2074
      %v2076 = vlaneseq
      %v2077 = vshrl.u32 %v2076, 7
      %v2078 = vsub.s32 %v2075, %v2077
      %v2079 = vrot.slane %v2071, %v2078
      %v2081 = vunpack.c.l.s4 1983009808
      %v2082 = vunpack.c.0.s8 %v2081
      %v2083 = vlaneseq
      %v2084 = vshrl.u32 %v2083, 7
      %v2085 = vsub.s32 %v2082, %v2084
      %v2086 = vrot.slane %v2072, %v2085
      %v2087 = vcombine.low %v2079, %v2086
      %v2088 = vcombine.low %v1658, %v1660
      %v2090 = vunpack.c.l.s4 1983009808
      %v2091 = vunpack.c.0.s8 %v2090
      %v2092 = vlaneseq
      %v2093 = vshrl.u32 %v2092, 7
      %v2094 = vsub.s32 %v2091, %v2093
      %v2095 = vrot.slane %v2088, %v2094
      %v2097 = vunpack.c.l.s4 1983009808
      %v2098 = vunpack.c.0.s8 %v2097
      %v2099 = vlaneseq
      %v2100 = vshrl.u32 %v2099, 7
      %v2101 = vsub.s32 %v2098, %v2100
      %v2102 = vrot.slane %v1668, %v2101
      %v2103 = vcombine.low %v2095, %v2102
      %v2104 = vcombine.low %v1676, %v1675
      %v2105 = vcombine.low %v1677, %v1685
      %v2107 = vunpack.c.l.s4 1983009808
      %v2108 = vunpack.c.0.s8 %v2107
      %v2109 = vlaneseq
      %v2110 = vshrl.u32 %v2109, 7
      %v2111 = vsub.s32 %v2108, %v2110
      %v2112 = vrot.slane %v2104, %v2111
      %v2114 = vunpack.c.l.s4 1983009808
      %v2115 = vunpack.c.0.s8 %v2114
      %v2116 = vlaneseq
      %v2117 = vshrl.u32 %v2116, 7
      %v2118 = vsub.s32 %v2115, %v2117
      %v2119 = vrot.slane %v2105, %v2118
      %v2120 = vcombine.low %v2112, %v2119
      %v2121 = vcombine.low %v1693, %v1692
      %v2123 = vunpack.c.l.s4 1983009808
      %v2124 = vunpack.c.0.s8 %v2123
      %v2125 = vlaneseq
      %v2126 = vshrl.u32 %v2125, 7
      %v2127 = vsub.s32 %v2124, %v2126
      %v2128 = vrot.slane %v2121, %v2127
      %v2130 = vunpack.c.l.s4 1983009808
      %v2131 = vunpack.c.0.s8 %v2130
      %v2132 = vlaneseq
      %v2133 = vshrl.u32 %v2132, 7
      %v2134 = vsub.s32 %v2131, %v2133
      %v2135 = vrot.slane %v1694, %v2134
      %v2136 = vcombine.low %v2128, %v2135
      %v2137 = vcombine.low %v1702, %v1710
      %v2138 = vcombine.low %v1709, %v1711
      %v2140 = vunpack.c.l.s4 1983009808
      %v2141 = vunpack.c.0.s8 %v2140
      %v2142 = vlaneseq
      %v2143 = vshrl.u32 %v2142, 7
      %v2144 = vsub.s32 %v2141, %v2143
      %v2145 = vrot.slane %v2137, %v2144
      %v2147 = vunpack.c.l.s4 1983009808
      %v2148 = vunpack.c.0.s8 %v2147
      %v2149 = vlaneseq
      %v2150 = vshrl.u32 %v2149, 7
      %v2151 = vsub.s32 %v2148, %v2150
      %v2152 = vrot.slane %v2138, %v2151
      %v2153 = vcombine.low %v2145, %v2152
      %v2154 = vcombine.low %v1719, %v1727
      %v2156 = vunpack.c.l.s4 1983009808
      %v2157 = vunpack.c.0.s8 %v2156
      %v2158 = vlaneseq
      %v2159 = vshrl.u32 %v2158, 7
      %v2160 = vsub.s32 %v2157, %v2159
      %v2161 = vrot.slane %v2154, %v2160
      %v2163 = vunpack.c.l.s4 1983009808
      %v2164 = vunpack.c.0.s8 %v2163
      %v2165 = vlaneseq
      %v2166 = vshrl.u32 %v2165, 7
      %v2167 = vsub.s32 %v2164, %v2166
      %v2168 = vrot.slane %v1726, %v2167
      %v2169 = vcombine.low %v2161, %v2168
      %v2170 = vcombine.low %v1728, %v1736
      %v2171 = vcombine.low %v1744, %v1743
      %v2173 = vunpack.c.l.s4 1983009808
      %v2174 = vunpack.c.0.s8 %v2173
      %v2175 = vlaneseq
      %v2176 = vshrl.u32 %v2175, 7
      %v2177 = vsub.s32 %v2174, %v2176
      %v2178 = vrot.slane %v2170, %v2177
      %v2180 = vunpack.c.l.s4 1983009808
      %v2181 = vunpack.c.0.s8 %v2180
      %v2182 = vlaneseq
      %v2183 = vshrl.u32 %v2182, 7
      %v2184 = vsub.s32 %v2181, %v2183
      %v2185 = vrot.slane %v2171, %v2184
      %v2186 = vcombine.low %v2178, %v2185
      %v2187 = vcombine.low %v1745, %v1753
      %v2189 = vunpack.c.l.s4 1983009808
      %v2190 = vunpack.c.0.s8 %v2189
      %v2191 = vlaneseq
      %v2192 = vshrl.u32 %v2191, 7
      %v2193 = vsub.s32 %v2190, %v2192
      %v2194 = vrot.slane %v2187, %v2193
      %v2196 = vunpack.c.l.s4 1983009808
      %v2197 = vunpack.c.0.s8 %v2196
      %v2198 = vlaneseq
      %v2199 = vshrl.u32 %v2198, 7
      %v2200 = vsub.s32 %v2197, %v2199
      %v2201 = vrot.slane %v1761, %v2200
      %v2202 = vcombine.low %v2194, %v2201
      %v2203 = vcombine.low %v1760, %v1762
      %v2204 = vcombine.low %v1770, %v1778
      %v2206 = vunpack.c.l.s4 1983009808
      %v2207 = vunpack.c.0.s8 %v2206
      %v2208 = vlaneseq
      %v2209 = vshrl.u32 %v2208, 7
      %v2210 = vsub.s32 %v2207, %v2209
      %v2211 = vrot.slane %v2203, %v2210
      %v2213 = vunpack.c.l.s4 1983009808
      %v2214 = vunpack.c.0.s8 %v2213
      %v2215 = vlaneseq
      %v2216 = vshrl.u32 %v2215, 7
      %v2217 = vsub.s32 %v2214, %v2216
      %v2218 = vrot.slane %v2204, %v2217
      %v2219 = vcombine.low %v2211, %v2218
      %v2220 = vcombine.low %v1777, %v1779
      %v2222 = vunpack.c.l.s4 1983009808
      %v2223 = vunpack.c.0.s8 %v2222
      %v2224 = vlaneseq
      %v2225 = vshrl.u32 %v2224, 7
      %v2226 = vsub.s32 %v2223, %v2225
      %v2227 = vrot.slane %v2220, %v2226
      %v2229 = vunpack.c.l.s4 1983009808
      %v2230 = vunpack.c.0.s8 %v2229
      %v2231 = vlaneseq
      %v2232 = vshrl.u32 %v2231, 7
      %v2233 = vsub.s32 %v2230, %v2232
      %v2234 = vrot.slane %v1787, %v2233
      %v2235 = vcombine.low %v2227, %v2234
      %v2236 = vcombine.low %v1795, %v1794
      %v2237 = vcombine.low %v1796, %v1804
      %v2239 = vunpack.c.l.s4 1983009808
      %v2240 = vunpack.c.0.s8 %v2239
      %v2241 = vlaneseq
      %v2242 = vshrl.u32 %v2241, 7
      %v2243 = vsub.s32 %v2240, %v2242
      %v2244 = vrot.slane %v2236, %v2243
      %v2246 = vunpack.c.l.s4 1983009808
      %v2247 = vunpack.c.0.s8 %v2246
      %v2248 = vlaneseq
      %v2249 = vshrl.u32 %v2248, 7
      %v2250 = vsub.s32 %v2247, %v2249
      %v2251 = vrot.slane %v2237, %v2250
      %v2252 = vcombine.low %v2244, %v2251
      %v2253 = vcombine.low %v1812, %v1811
      %v2255 = vunpack.c.l.s4 1983009808
      %v2256 = vunpack.c.0.s8 %v2255
      %v2257 = vlaneseq
      %v2258 = vshrl.u32 %v2257, 7
      %v2259 = vsub.s32 %v2256, %v2258
      %v2260 = vrot.slane %v2253, %v2259
      %v2262 = vunpack.c.l.s4 1983009808
      %v2263 = vunpack.c.0.s8 %v2262
      %v2264 = vlaneseq
      %v2265 = vshrl.u32 %v2264, 7
      %v2266 = vsub.s32 %v2263, %v2265
      %v2267 = vrot.slane %v1813, %v2266
      %v2268 = vcombine.low %v2260, %v2267
      %v2269 = vcombine.low %v1821, %v1829
      %v2270 = vcombine.low %v1828, %v1830
      %v2272 = vunpack.c.l.s4 1983009808
      %v2273 = vunpack.c.0.s8 %v2272
      %v2274 = vlaneseq
      %v2275 = vshrl.u32 %v2274, 7
      %v2276 = vsub.s32 %v2273, %v2275
      %v2277 = vrot.slane %v2269, %v2276
      %v2279 = vunpack.c.l.s4 1983009808
      %v2280 = vunpack.c.0.s8 %v2279
      %v2281 = vlaneseq
      %v2282 = vshrl.u32 %v2281, 7
      %v2283 = vsub.s32 %v2280, %v2282
      %v2284 = vrot.slane %v2270, %v2283
      %v2285 = vcombine.low %v2277, %v2284
      %v2286 = vcombine.low %v1838, %v1846
      %v2288 = vunpack.c.l.s4 1983009808
      %v2289 = vunpack.c.0.s8 %v2288
      %v2290 = vlaneseq
      %v2291 = vshrl.u32 %v2290, 7
      %v2292 = vsub.s32 %v2289, %v2291
      %v2293 = vrot.slane %v2286, %v2292
      %v2295 = vunpack.c.l.s4 1983009808
      %v2296 = vunpack.c.0.s8 %v2295
      %v2297 = vlaneseq
      %v2298 = vshrl.u32 %v2297, 7
      %v2299 = vsub.s32 %v2296, %v2298
      %v2300 = vrot.slane %v1845, %v2299
      %v2301 = vcombine.low %v2293, %v2300
      %v2302 = vcombine.low %v1847, %v1855
      %v2303 = vcombine.low %v1863, %v1862
      %v2305 = vunpack.c.l.s4 1983009808
      %v2306 = vunpack.c.0.s8 %v2305
      %v2307 = vlaneseq
      %v2308 = vshrl.u32 %v2307, 7
      %v2309 = vsub.s32 %v2306, %v2308
      %v2310 = vrot.slane %v2302, %v2309
      %v2312 = vunpack.c.l.s4 1983009808
      %v2313 = vunpack.c.0.s8 %v2312
      %v2314 = vlaneseq
      %v2315 = vshrl.u32 %v2314, 7
      %v2316 = vsub.s32 %v2313, %v2315
      %v2317 = vrot.slane %v2303, %v2316
      %v2318 = vcombine.low %v2310, %v2317
      %v2319 = vcombine.low %v1864, %v1871
      %v2321 = vunpack.c.l.s4 1983009808
      %v2322 = vunpack.c.0.s8 %v2321
      %v2323 = vlaneseq
      %v2324 = vshrl.u32 %v2323, 7
      %v2325 = vsub.s32 %v2322, %v2324
      %v2326 = vrot.slane %v2319, %v2325
      %v2328 = vunpack.c.l.s4 1983009808
      %v2329 = vunpack.c.0.s8 %v2328
      %v2330 = vlaneseq
      %v2331 = vshrl.u32 %v2330, 7
      %v2332 = vsub.s32 %v2329, %v2331
      %v2333 = vrot.slane %v1872, %v2332
      %v2334 = vcombine.low %v2326, %v2333
      %v2363 = vpack.c.bf16 %v1905, %v1889
      %v2364 = vpack.c.bf16 %v1938, %v1922
      %v2365 = vpack.c.bf16 %v1971, %v1955
      %v2366 = vpack.c.bf16 %v2004, %v1988
      %v2367 = vpack.c.bf16 %v2037, %v2021
      %v2368 = vpack.c.bf16 %v2070, %v2054
      %v2369 = vpack.c.bf16 %v2103, %v2087
      %v2370 = vpack.c.bf16 %v2136, %v2120
      %v2371 = vpack.c.bf16 %v2169, %v2153
      %v2372 = vpack.c.bf16 %v2202, %v2186
      %v2373 = vpack.c.bf16 %v2235, %v2219
      %v2374 = vpack.c.bf16 %v2268, %v2252
      %v2375 = vpack.c.bf16 %v2301, %v2285
      %v2376 = vpack.c.bf16 %v2334, %v2318
      %v2391 = vunpack.c.l.b16 %v2363
      %v2392 = vunpack.c.h.b16 %v2363
      %v2393 = vunpack.c.l.b16 %v2364
      %v2394 = vunpack.c.h.b16 %v2364
      %v2395 = vunpack.c.l.b16 %v2365
      %v2396 = vunpack.c.h.b16 %v2365
      %v2397 = vunpack.c.l.b16 %v2366
      %v2398 = vunpack.c.h.b16 %v2366
      %v2399 = vunpack.c.l.b16 %v2367
      %v2400 = vunpack.c.h.b16 %v2367
      %v2401 = vunpack.c.l.b16 %v2368
      %v2402 = vunpack.c.h.b16 %v2368
      %v2403 = vunpack.c.l.b16 %v2369
      %v2404 = vunpack.c.h.b16 %v2369
      %v2405 = vunpack.c.l.b16 %v2370
      %v2406 = vunpack.c.h.b16 %v2370
      %v2407 = vunpack.c.l.b16 %v2371
      %v2408 = vunpack.c.h.b16 %v2371
      %v2409 = vunpack.c.l.b16 %v2372
      %v2410 = vunpack.c.h.b16 %v2372
      %v2411 = vunpack.c.l.b16 %v2373
      %v2412 = vunpack.c.h.b16 %v2373
      %v2413 = vunpack.c.l.b16 %v2374
      %v2414 = vunpack.c.h.b16 %v2374
      %v2415 = vunpack.c.l.b16 %v2375
      %v2416 = vunpack.c.h.b16 %v2375
      %v2417 = vunpack.c.l.b16 %v2376
      %v2418 = vunpack.c.h.b16 %v2376
      %v2419 = vpack.c.b16 %v2391, %v2391
      %v2420 = vpack.c.b16 %v2392, %v2392
      %v2421 = vpack.c.b16 %v2393, %v2393
      %v2422 = vpack.c.b16 %v2394, %v2394
      %v2423 = vpack.c.b16 %v2395, %v2395
      %v2424 = vpack.c.b16 %v2396, %v2396
      %v2425 = vpack.c.b16 %v2397, %v2397
      %v2426 = vpack.c.b16 %v2398, %v2398
      %v2427 = vpack.c.b16 %v2399, %v2399
      %v2428 = vpack.c.b16 %v2400, %v2400
      %v2429 = vpack.c.b16 %v2401, %v2401
      %v2430 = vpack.c.b16 %v2402, %v2402
      %v2431 = vpack.c.b16 %v2403, %v2403
      %v2432 = vpack.c.b16 %v2404, %v2404
      %v2433 = vpack.c.b16 %v2405, %v2405
      %v2434 = vpack.c.b16 %v2406, %v2406
      %v2435 = vpack.c.b16 %v2407, %v2407
      %v2436 = vpack.c.b16 %v2408, %v2408
      %v2437 = vpack.c.b16 %v2409, %v2409
      %v2438 = vpack.c.b16 %v2410, %v2410
      %v2439 = vpack.c.b16 %v2411, %v2411
      %v2440 = vpack.c.b16 %v2412, %v2412
      %v2441 = vpack.c.b16 %v2413, %v2413
      %v2442 = vpack.c.b16 %v2414, %v2414
      %v2443 = vpack.c.b16 %v2415, %v2415
      %v2444 = vpack.c.b16 %v2416, %v2416
      %v2445 = vpack.c.b16 %v2417, %v2417
      %v2446 = vpack.c.b16 %v2418, %v2418
      %2475 = vst [vmem:[%s170] sm:$0xf] %v2419
      %2476 = vst [vmem:[%s170 + $0x4] sm:$0x7] %v2420
      %2477 = vst [vmem:[%s170 + $0x8] sm:$0xf] %v2421
      %2478 = vst [vmem:[%s170 + $0xc] sm:$0x7] %v2422
      %2479 = vst [vmem:[%s170 + $0x10] sm:$0xf] %v2423
      %2480 = vst [vmem:[%s170 + $0x14] sm:$0x7] %v2424
      %2481 = vst [vmem:[%s170 + $0x18] sm:$0xf] %v2425
      %2482 = vst [vmem:[%s170 + $0x1c] sm:$0x7] %v2426
      %2483 = vst [vmem:[%s170 + $0x20] sm:$0xf] %v2427
      %2484 = vst [vmem:[%s170 + $0x24] sm:$0x7] %v2428
      %2485 = vst [vmem:[%s170 + $0x28] sm:$0xf] %v2429
      %2486 = vst [vmem:[%s170 + $0x2c] sm:$0x7] %v2430
      %2487 = vst [vmem:[%s170 + $0x30] sm:$0xf] %v2431
      %2488 = vst [vmem:[%s170 + $0x34] sm:$0x7] %v2432
      %2489 = vst [vmem:[%s170 + $0x38] sm:$0xf] %v2433
      %2490 = vst [vmem:[%s170 + $0x3c] sm:$0x7] %v2434
      %2491 = vst [vmem:[%s170 + $0x40] sm:$0xf] %v2435
      %2492 = vst [vmem:[%s170 + $0x44] sm:$0x7] %v2436
      %2493 = vst [vmem:[%s170 + $0x48] sm:$0xf] %v2437
      %2494 = vst [vmem:[%s170 + $0x4c] sm:$0x7] %v2438
      %2495 = vst [vmem:[%s170 + $0x50] sm:$0xf] %v2439
      %2496 = vst [vmem:[%s170 + $0x54] sm:$0x7] %v2440
      %2497 = vst [vmem:[%s170 + $0x58] sm:$0xf] %v2441
      %2498 = vst [vmem:[%s170 + $0x5c] sm:$0x7] %v2442
      %2499 = vst [vmem:[%s170 + $0x60] sm:$0xf] %v2443
      %2500 = vst [vmem:[%s170 + $0x64] sm:$0x7] %v2444
      %2501 = vst [vmem:[%s170 + $0x68] sm:$0xf] %v2445
      %2502 = vst [vmem:[%s170 + $0x6c] sm:$0x7] %v2446
      %p2503 = scmp.lt.s32.totalorder %s14, 1
      %s2504 = scalar_select %p2503, %s14, 1
      %s2505 = smul.addr %s2504, 28
      %s2506 = smul.addr %s2505, 4
      %s2507 = scalar_lea.vmem %s3, %s2506
      // Predicated region
      $region33: #{cnn_fashion_mnist_forward.2} parent=31 // pred_check
        %p2508 = pneg %p100
      $region34: #{cnn_fashion_mnist_forward.2} parent=31 // pred_check_branch
        %2510 = sbr.rel (%p2508) target = $region36
      $region35: #{cnn_fashion_mnist_forward.2} parent=31 // pred_region
        _
      $region36: #{cnn_fashion_mnist_forward.2} parent=31 // pred_fallthru
        _
    $region32: #{cnn_fashion_mnist_forward.2} parent=5 // pred_fallthru
      _
    %p2511 = scmp.le.s32.totalorder 2, %s9
    // Predicated region
    $region37: #{cnn_fashion_mnist_forward.2} parent=5 // pred_check
      %p2512 = pneg %p2511
    $region38: #{cnn_fashion_mnist_forward.2} parent=5 // pred_check_branch
      %2514 = sbr.rel (%p2512) target = $region40
    $region39: #{cnn_fashion_mnist_forward.2} parent=5 // pred_region
      %s2515 = ssub.s32 %s9, 2
      // Predicated region
      $region41: #{cnn_fashion_mnist_forward.2} parent=39 // pred_check
        %p2516 = pneg %p106
      $region42: #{cnn_fashion_mnist_forward.2} parent=39 // pred_check_branch
        %2518 = sbr.rel (%p2516) target = $region44
      $region43: #{cnn_fashion_mnist_forward.2} parent=39 // pred_region
        %p2519 = scmp.lt.s32.totalorder %s15, 1
        %s2520 = scalar_select %p2519, %s15, 1
        %s2521 = smul.addr %s2520, 28
        %s2522 = smul.addr %s2521, 4
        %s2523 = scalar_lea.vmem %s3, %s2522
      $region44: #{cnn_fashion_mnist_forward.2} parent=39 // pred_fallthru
        _
    $region40: #{cnn_fashion_mnist_forward.2} parent=5 // pred_fallthru
      _
  $region6: #{cnn_fashion_mnist_forward.2} parent=0 // loop_footer
    %s13 = sadd.s32 1, %s9
  $region7: #{cnn_fashion_mnist_forward.2} parent=0 // loop_footer_branch
    %8 = sbr.rel target = $region3
  $region8: #{cnn_fashion_mnist_forward.2} parent=0 // loop_exit
    _

// kernel: cnn_fashion_mnist_forward.3
$region0: #{cnn_fashion_mnist_forward.3}
  #allocation0 [shape = 'u32[]', space=smem, size = 0x4, offset = 0x4, fixed_abs, tag = 'smem constant byte address 0x4 - core index']
  #allocation1 [shape = 'u32[144,128]{1,0:T(1,128)}', space=vmem, size = 0x12000, scoped, tag = 'internal scratch']
  %s0 = inlined_call_operand.vmem [shape: bf16[2,4,49,512], index: 0, kind: input, shape index: {}]
  %s1 = inlined_call_operand.vmem [shape: bf16[512,128], index: 1, kind: input, shape index: {}]
  %s2 = inlined_call_operand.vmem [shape: f32[1,128], index: 2, kind: input, shape index: {}]
  %s3 = inlined_call_operand.vmem [shape: bf16[2,7,7,128], index: 3, kind: output, shape index: {}]
  %s4 = sld [smem:[#allocation0]]
  $region45: #{cnn_fashion_mnist_forward.3} parent=0
    _
  %s6 = ssub.s32 1, %s4
  %s7 = scalar_select 0, %s6, %s4
  loop: start=0, step=1, limit=4
  $region2: #{cnn_fashion_mnist_forward.3} parent=0 // loop_pre_header
    _
  $region3: #{cnn_fashion_mnist_forward.3} parent=0 // loop_header
    %s9 = sphi 0, %s13
    %p10 = scmp.ge.s32.totalorder %s9, 4
    %s19 = sphi 0, %s21
    %s22 = sphi 0, %s19
    %s23 = sphi 0, %s22
    %s39 = sphi 0, %s23
    %s43 = sphi 0, %s43
    %s45 = sphi 0, %s43
    %s46 = sphi 0, %s45
    %s60 = sphi 0, %s46
    %s64 = sphi 0, %s64
    %s66 = sphi 0, %s64
    %s67 = sphi 0, %s66
    %s81 = sphi 0, %s67
    %s87 = sphi 0, %s89
    %s90 = sphi 0, %s87
    %s91 = sphi 0, %s90
    %s107 = sphi 0, %s91
  $region4: #{cnn_fashion_mnist_forward.3} parent=0 // loop_header_branch
    %12 = sbr.rel (%p10) target = $region8
  $region5: #{cnn_fashion_mnist_forward.3} parent=0 // loop_body
    %s14 = ssub.s32 %s9, 1
    %s15 = ssub.s32 %s9, 2
    %s16 = sadd.s32 %s9, 1
    %s17 = ssub.s32 %s9, %s16
    %p18 = scmp.eq.s32.totalorder %s17, 0
    %s20 = sadd.s32 %s19, 1
    %s21 = scalar_select %p18, %s19, %s20
    %p24 = pneg %p18
    %p25 = scmp.eq.s32.totalorder %s9, 1
    %p26 = por %p24, %p25
    %p27 = scmp.ne.s32.totalorder %s19, %s22
    %p28 = scmp.eq.s32.totalorder %s9, 0
    %p29 = por %p27, %p28
    %p30 = scmp.ne.s32.totalorder %s19, %s22
    %p31 = scmp.eq.s32.totalorder %s14, 1
    %p32 = por %p30, %p31
    %p33 = scmp.ne.s32.totalorder %s22, %s23
    %p34 = scmp.eq.s32.totalorder %s14, 0
    %p35 = por %p33, %p34
    %p36 = scmp.ne.s32.totalorder %s22, %s23
    %p37 = scmp.eq.s32.totalorder %s15, 1
    %p38 = por %p36, %p37
    %p40 = scmp.ne.s32.totalorder %s23, %s39
    %p41 = scmp.eq.s32.totalorder %s15, 0
    %p42 = por %p40, %p41
    %s44 = sadd.s32 %s43, 1
    %p47 = scmp.eq.s32.totalorder %s9, 1
    %p48 = scmp.ne.s32.totalorder %s43, %s45
    %p49 = scmp.eq.s32.totalorder %s9, 0
    %p50 = por %p48, %p49
    %p51 = scmp.ne.s32.totalorder %s43, %s45
    %p52 = scmp.eq.s32.totalorder %s14, 1
    %p53 = por %p51, %p52
    %p54 = scmp.ne.s32.totalorder %s45, %s46
    %p55 = scmp.eq.s32.totalorder %s14, 0
    %p56 = por %p54, %p55
    %p57 = scmp.ne.s32.totalorder %s45, %s46
    %p58 = scmp.eq.s32.totalorder %s15, 1
    %p59 = por %p57, %p58
    %p61 = scmp.ne.s32.totalorder %s46, %s60
    %p62 = scmp.eq.s32.totalorder %s15, 0
    %p63 = por %p61, %p62
    %s65 = sadd.s32 %s64, 1
    %p68 = scmp.eq.s32.totalorder %s9, 1
    %p69 = scmp.ne.s32.totalorder %s64, %s66
    %p70 = scmp.eq.s32.totalorder %s9, 0
    %p71 = por %p69, %p70
    %p72 = scmp.ne.s32.totalorder %s64, %s66
    %p73 = scmp.eq.s32.totalorder %s14, 1
    %p74 = por %p72, %p73
    %p75 = scmp.ne.s32.totalorder %s66, %s67
    %p76 = scmp.eq.s32.totalorder %s14, 0
    %p77 = por %p75, %p76
    %p78 = scmp.ne.s32.totalorder %s66, %s67
    %p79 = scmp.eq.s32.totalorder %s15, 1
    %p80 = por %p78, %p79
    %p82 = scmp.ne.s32.totalorder %s67, %s81
    %p83 = scmp.eq.s32.totalorder %s15, 0
    %p84 = por %p82, %p83
    %s85 = ssub.s32 %s9, %s16
    %p86 = scmp.eq.s32.totalorder %s85, 0
    %s88 = sadd.s32 %s87, 1
    %s89 = scalar_select %p86, %s87, %s88
    %p92 = pneg %p86
    %p93 = scmp.eq.s32.totalorder %s9, 1
    %p94 = por %p92, %p93
    %p95 = scmp.ne.s32.totalorder %s87, %s90
    %p96 = scmp.eq.s32.totalorder %s9, 0
    %p97 = por %p95, %p96
    %p98 = scmp.ne.s32.totalorder %s87, %s90
    %p99 = scmp.eq.s32.totalorder %s14, 1
    %p100 = por %p98, %p99
    %p101 = scmp.ne.s32.totalorder %s90, %s91
    %p102 = scmp.eq.s32.totalorder %s14, 0
    %p103 = por %p101, %p102
    %p104 = scmp.ne.s32.totalorder %s90, %s91
    %p105 = scmp.eq.s32.totalorder %s15, 1
    %p106 = por %p104, %p105
    %p108 = scmp.ne.s32.totalorder %s91, %s107
    %p109 = scmp.eq.s32.totalorder %s15, 0
    %p110 = por %p108, %p109
    %p111 = scmp.le.s32.totalorder 1, %s9
    %p112 = scmp.lt.s32.totalorder %s9, 3
    %p113 = pnand %p111, %p112
    %p114 = pneg %p113
    // Predicated region
    $region9: #{cnn_fashion_mnist_forward.3} parent=5 // pred_check
      _
    $region10: #{cnn_fashion_mnist_forward.3} parent=5 // pred_check_branch
      %116 = sbr.rel (%p113) target = $region12
    $region11: #{cnn_fashion_mnist_forward.3} parent=5 // pred_region
      %s117 = ssub.s32 %s9, 1
      // Predicated region
      $region13: #{cnn_fashion_mnist_forward.3} parent=11 // pred_check
        %p118 = pneg %p56
      $region14: #{cnn_fashion_mnist_forward.3} parent=11 // pred_check_branch
        %120 = sbr.rel (%p118) target = $region16
      $region15: #{cnn_fashion_mnist_forward.3} parent=11 // pred_region
        _
      $region16: #{cnn_fashion_mnist_forward.3} parent=11 // pred_fallthru
        _
      // Predicated region
      $region17: #{cnn_fashion_mnist_forward.3} parent=11 // pred_check
        %p121 = pneg %p77
      $region18: #{cnn_fashion_mnist_forward.3} parent=11 // pred_check_branch
        %123 = sbr.rel (%p121) target = $region20
      $region19: #{cnn_fashion_mnist_forward.3} parent=11 // pred_region
        _
      $region20: #{cnn_fashion_mnist_forward.3} parent=11 // pred_fallthru
        _
    $region12: #{cnn_fashion_mnist_forward.3} parent=5 // pred_fallthru
      _
    %p124 = scmp.lt.s32.totalorder %s9, 2
    // Predicated region
    $region21: #{cnn_fashion_mnist_forward.3} parent=5 // pred_check
      %p125 = pneg %p124
    $region22: #{cnn_fashion_mnist_forward.3} parent=5 // pred_check_branch
      %127 = sbr.rel (%p125) target = $region24
    $region23: #{cnn_fashion_mnist_forward.3} parent=5 // pred_region
      // Predicated region
      $region25: #{cnn_fashion_mnist_forward.3} parent=23 // pred_check
        %p128 = pneg %p29
      $region26: #{cnn_fashion_mnist_forward.3} parent=23 // pred_check_branch
        %130 = sbr.rel (%p128) target = $region28
      $region27: #{cnn_fashion_mnist_forward.3} parent=23 // pred_region
        %p131 = scmp.lt.s32.totalorder %s9, 1
        %s132 = scalar_select %p131, %s9, 1
        %s133 = smul.addr %s132, 112
        %s134 = smul.addr %s133, 4
        %s135 = scalar_lea.vmem %s0, %s134
      $region28: #{cnn_fashion_mnist_forward.3} parent=23 // pred_fallthru
        _
    $region24: #{cnn_fashion_mnist_forward.3} parent=5 // pred_fallthru
      _
    %p136 = scmp.le.s32.totalorder 1, %s9
    %p137 = scmp.lt.s32.totalorder %s9, 3
    %p138 = pnand %p136, %p137
    %p139 = pneg %p138
    // Predicated region
    $region29: #{cnn_fashion_mnist_forward.3} parent=5 // pred_check
      _
    $region30: #{cnn_fashion_mnist_forward.3} parent=5 // pred_check_branch
      %141 = sbr.rel (%p138) target = $region32
    $region31: #{cnn_fashion_mnist_forward.3} parent=5 // pred_region
      %s142 = ssub.s32 %s9, 1
      %p143 = scmp.lt.s32.totalorder %s14, 1
      %s144 = scalar_select %p143, %s14, 1
      %s145 = smul.addr %s144, 112
      %s146 = smul.addr %s145, 4
      %s147 = scalar_lea.vmem %s0, %s146
      %p148 = pneg %p35
      %p149 = pneg %p32
      %p150 = pneg %p56
      %p151 = pneg %p53
      %p152 = pneg %p77
      %p153 = pneg %p74
      %p154 = pneg %p103
      %p155 = pneg %p100
      %p156 = scmp.lt.s32.totalorder %s14, 1
      %s157 = scalar_select %p156, %s14, 1
      %s158 = smul.addr %s157, 7
      %s159 = smul.addr %s158, 4
      %s160 = scalar_lea.vmem %s3, %s159
      %p161 = scmp.lt.s32.totalorder %s14, 1
      %s162 = scalar_select %p161, %s14, 1
      %s163 = smul.addr %s162, 112
      %s164 = smul.addr %s163, 4
      %s165 = scalar_lea.vmem %s0, %s164
      %p166 = scmp.lt.s32.totalorder %s14, 1
      %s167 = scalar_select %p166, %s14, 1
      %s168 = smul.addr %s167, 7
      %s169 = smul.addr %s168, 4
      %s170 = scalar_lea.vmem %s3, %s169
      %v172 = vld [vmem:[%s1] sm:$0xf]
      %v173 = vld [vmem:[%s1 + $0x4] sm:$0xf]
      %v174 = vld [vmem:[%s1 + $0x8] sm:$0xf]
      %v175 = vld [vmem:[%s1 + $0xc] sm:$0xf]
      %v176 = vld [vmem:[%s1 + $0x10] sm:$0xf]
      %v177 = vld [vmem:[%s1 + $0x14] sm:$0xf]
      %v178 = vld [vmem:[%s1 + $0x18] sm:$0xf]
      %v179 = vld [vmem:[%s1 + $0x1c] sm:$0xf]
      %v180 = vld [vmem:[%s1 + $0x20] sm:$0xf]
      %v181 = vld [vmem:[%s1 + $0x24] sm:$0xf]
      %v182 = vld [vmem:[%s1 + $0x28] sm:$0xf]
      %v183 = vld [vmem:[%s1 + $0x2c] sm:$0xf]
      %v184 = vld [vmem:[%s1 + $0x30] sm:$0xf]
      %v185 = vld [vmem:[%s1 + $0x34] sm:$0xf]
      %v186 = vld [vmem:[%s1 + $0x38] sm:$0xf]
      %v187 = vld [vmem:[%s1 + $0x3c] sm:$0xf]
      %v188 = vld [vmem:[%s1 + $0x40] sm:$0xf]
      %v189 = vld [vmem:[%s1 + $0x44] sm:$0xf]
      %v190 = vld [vmem:[%s1 + $0x48] sm:$0xf]
      %v191 = vld [vmem:[%s1 + $0x4c] sm:$0xf]
      %v192 = vld [vmem:[%s1 + $0x50] sm:$0xf]
      %v193 = vld [vmem:[%s1 + $0x54] sm:$0xf]
      %v194 = vld [vmem:[%s1 + $0x58] sm:$0xf]
      %v195 = vld [vmem:[%s1 + $0x5c] sm:$0xf]
      %v196 = vld [vmem:[%s1 + $0x60] sm:$0xf]
      %v197 = vld [vmem:[%s1 + $0x64] sm:$0xf]
      %v198 = vld [vmem:[%s1 + $0x68] sm:$0xf]
      %v199 = vld [vmem:[%s1 + $0x6c] sm:$0xf]
      %v200 = vld [vmem:[%s1 + $0x70] sm:$0xf]
      %v201 = vld [vmem:[%s1 + $0x74] sm:$0xf]
      %v202 = vld [vmem:[%s1 + $0x78] sm:$0xf]
      %v203 = vld [vmem:[%s1 + $0x7c] sm:$0xf]
      %v204 = vld [vmem:[%s1 + $0x80] sm:$0xf]
      %v205 = vld [vmem:[%s1 + $0x84] sm:$0xf]
      %v206 = vld [vmem:[%s1 + $0x88] sm:$0xf]
      %v207 = vld [vmem:[%s1 + $0x8c] sm:$0xf]
      %v208 = vld [vmem:[%s1 + $0x90] sm:$0xf]
      %v209 = vld [vmem:[%s1 + $0x94] sm:$0xf]
      %v210 = vld [vmem:[%s1 + $0x98] sm:$0xf]
      %v211 = vld [vmem:[%s1 + $0x9c] sm:$0xf]
      %v212 = vld [vmem:[%s1 + $0xa0] sm:$0xf]
      %v213 = vld [vmem:[%s1 + $0xa4] sm:$0xf]
      %v214 = vld [vmem:[%s1 + $0xa8] sm:$0xf]
      %v215 = vld [vmem:[%s1 + $0xac] sm:$0xf]
      %v216 = vld [vmem:[%s1 + $0xb0] sm:$0xf]
      %v217 = vld [vmem:[%s1 + $0xb4] sm:$0xf]
      %v218 = vld [vmem:[%s1 + $0xb8] sm:$0xf]
      %v219 = vld [vmem:[%s1 + $0xbc] sm:$0xf]
      %v220 = vld [vmem:[%s1 + $0xc0] sm:$0xf]
      %v221 = vld [vmem:[%s1 + $0xc4] sm:$0xf]
      %v222 = vld [vmem:[%s1 + $0xc8] sm:$0xf]
      %v223 = vld [vmem:[%s1 + $0xcc] sm:$0xf]
      %v224 = vld [vmem:[%s1 + $0xd0] sm:$0xf]
      %v225 = vld [vmem:[%s1 + $0xd4] sm:$0xf]
      %v226 = vld [vmem:[%s1 + $0xd8] sm:$0xf]
      %v227 = vld [vmem:[%s1 + $0xdc] sm:$0xf]
      %v228 = vld [vmem:[%s1 + $0xe0] sm:$0xf]
      %v229 = vld [vmem:[%s1 + $0xe4] sm:$0xf]
      %v230 = vld [vmem:[%s1 + $0xe8] sm:$0xf]
      %v231 = vld [vmem:[%s1 + $0xec] sm:$0xf]
      %v232 = vld [vmem:[%s1 + $0xf0] sm:$0xf]
      %v233 = vld [vmem:[%s1 + $0xf4] sm:$0xf]
      %v234 = vld [vmem:[%s1 + $0xf8] sm:$0xf]
      %v235 = vld [vmem:[%s1 + $0xfc] sm:$0xf]
      %v236 = vld [vmem:[%s2] sm:$0x1]
      %v237 = vld [vmem:[%s165] sm:$0xff]
      %v238 = vld [vmem:[%s165 + $0x8] sm:$0xff]
      %v239 = vld [vmem:[%s165 + $0x10] sm:$0xff]
      %v240 = vld [vmem:[%s165 + $0x18] sm:$0xff]
      %v241 = vld [vmem:[%s165 + $0x20] sm:$0xff]
      %v242 = vld [vmem:[%s165 + $0x28] sm:$0xff]
      %v243 = vld [vmem:[%s165 + $0x30] sm:$0xff]
      %v244 = vld [vmem:[%s165 + $0x38] sm:$0xff]
      %v245 = vld [vmem:[%s165 + $0x40] sm:$0xff]
      %v246 = vld [vmem:[%s165 + $0x48] sm:$0xff]
      %v247 = vld [vmem:[%s165 + $0x50] sm:$0xff]
      %v248 = vld [vmem:[%s165 + $0x58] sm:$0xff]
      %v249 = vld [vmem:[%s165 + $0x60] sm:$0x11]
      %v250 = vld [vmem:[%s165 + $0x68] sm:$0x11]
      %v252 = vlaneseq
      %v253 = vshrl.u32 %v252, 7
      %v254 = vsub.s32 0, %v253
      %v255 = vrot.slane %v236, %v254
      %v271 = vunpack.c.l.b16 %v237
      %v272 = vunpack.c.h.b16 %v237
      %v273 = vunpack.c.l.b16 %v238
      %v274 = vunpack.c.h.b16 %v238
      %v275 = vunpack.c.l.b16 %v239
      %v276 = vunpack.c.h.b16 %v239
      %v277 = vunpack.c.l.b16 %v240
      %v278 = vunpack.c.h.b16 %v240
      %v279 = vunpack.c.l.b16 %v241
      %v280 = vunpack.c.h.b16 %v241
      %v281 = vunpack.c.l.b16 %v242
      %v282 = vunpack.c.h.b16 %v242
      %v283 = vunpack.c.l.b16 %v243
      %v284 = vunpack.c.h.b16 %v243
      %v285 = vunpack.c.l.b16 %v244
      %v286 = vunpack.c.h.b16 %v244
      %v287 = vunpack.c.l.b16 %v245
      %v288 = vunpack.c.h.b16 %v245
      %v289 = vunpack.c.l.b16 %v246
      %v290 = vunpack.c.h.b16 %v246
      %v291 = vunpack.c.l.b16 %v247
      %v292 = vunpack.c.h.b16 %v247
      %v293 = vunpack.c.l.b16 %v248
      %v294 = vunpack.c.h.b16 %v248
      %v295 = vunpack.c.l.b16 %v249
      %v296 = vunpack.c.h.b16 %v249
      %v297 = vunpack.c.l.b16 %v250
      %v298 = vunpack.c.h.b16 %v250
      %v299 = vpack.c.b16 %v275, %v271
      %v300 = vpack.c.b16 %v276, %v272
      %v301 = vpack.c.b16 %v277, %v273
      %v302 = vpack.c.b16 %v278, %v274
      %v303 = vpack.c.b16 %v283, %v279
      %v304 = vpack.c.b16 %v284, %v280
      %v305 = vpack.c.b16 %v285, %v281
      %v306 = vpack.c.b16 %v286, %v282
      %v307 = vpack.c.b16 %v291, %v287
      %v308 = vpack.c.b16 %v292, %v288
      %v309 = vpack.c.b16 %v293, %v289
      %v310 = vpack.c.b16 %v294, %v290
      %v311 = vpack.c.b16 %v295, %v295
      %v312 = vpack.c.b16 %v296, %v296
      %v313 = vpack.c.b16 %v297, %v297
      %v314 = vpack.c.b16 %v298, %v298
      %v395 = vunpack.c.l.b16 %v172
      %v396 = vunpack.c.l.b16 %v173
      %v397 = vunpack.c.l.b16 %v174
      %v398 = vunpack.c.l.b16 %v175
      %v399 = vunpack.c.l.b16 %v176
      %v400 = vunpack.c.l.b16 %v177
      %v401 = vunpack.c.l.b16 %v178
      %v402 = vunpack.c.l.b16 %v179
      %v403 = vunpack.c.l.b16 %v180
      %v404 = vunpack.c.l.b16 %v181
      %v405 = vunpack.c.l.b16 %v182
      %v406 = vunpack.c.l.b16 %v183
      %v407 = vunpack.c.l.b16 %v184
      %v408 = vunpack.c.l.b16 %v185
      %v409 = vunpack.c.l.b16 %v186
      %v410 = vunpack.c.l.b16 %v187
      %v411 = vunpack.c.l.b16 %v188
      %v412 = vunpack.c.l.b16 %v189
      %v413 = vunpack.c.l.b16 %v190
      %v414 = vunpack.c.l.b16 %v191
      %v415 = vunpack.c.l.b16 %v192
      %v416 = vunpack.c.l.b16 %v193
      %v417 = vunpack.c.l.b16 %v194
      %v418 = vunpack.c.l.b16 %v195
      %v419 = vunpack.c.l.b16 %v196
      %v420 = vunpack.c.l.b16 %v197
      %v421 = vunpack.c.l.b16 %v198
      %v422 = vunpack.c.l.b16 %v199
      %v423 = vunpack.c.l.b16 %v200
      %v424 = vunpack.c.l.b16 %v201
      %v425 = vunpack.c.l.b16 %v202
      %v426 = vunpack.c.l.b16 %v203
      %v427 = vunpack.c.l.b16 %v204
      %v428 = vunpack.c.l.b16 %v205
      %v429 = vunpack.c.l.b16 %v206
      %v430 = vunpack.c.l.b16 %v207
      %v431 = vunpack.c.l.b16 %v208
      %v432 = vunpack.c.l.b16 %v209
      %v433 = vunpack.c.l.b16 %v210
      %v434 = vunpack.c.l.b16 %v211
      %v435 = vunpack.c.l.b16 %v212
      %v436 = vunpack.c.l.b16 %v213
      %v437 = vunpack.c.l.b16 %v214
      %v438 = vunpack.c.l.b16 %v215
      %v439 = vunpack.c.l.b16 %v216
      %v440 = vunpack.c.l.b16 %v217
      %v441 = vunpack.c.l.b16 %v218
      %v442 = vunpack.c.l.b16 %v219
      %v443 = vunpack.c.l.b16 %v220
      %v444 = vunpack.c.l.b16 %v221
      %v445 = vunpack.c.l.b16 %v222
      %v446 = vunpack.c.l.b16 %v223
      %v447 = vunpack.c.l.b16 %v224
      %v448 = vunpack.c.l.b16 %v225
      %v449 = vunpack.c.l.b16 %v226
      %v450 = vunpack.c.l.b16 %v227
      %v451 = vunpack.c.l.b16 %v228
      %v452 = vunpack.c.l.b16 %v229
      %v453 = vunpack.c.l.b16 %v230
      %v454 = vunpack.c.l.b16 %v231
      %v455 = vunpack.c.l.b16 %v232
      %v456 = vunpack.c.l.b16 %v233
      %v457 = vunpack.c.l.b16 %v234
      %v458 = vunpack.c.l.b16 %v235
      %v459 = vpack.c.b16 %v396, %v395
      %v460 = vpack.c.b16 %v398, %v397
      %v461 = vpack.c.b16 %v400, %v399
      %v462 = vpack.c.b16 %v402, %v401
      %v463 = vpack.c.b16 %v404, %v403
      %v464 = vpack.c.b16 %v406, %v405
      %v465 = vpack.c.b16 %v408, %v407
      %v466 = vpack.c.b16 %v410, %v409
      %v467 = vpack.c.b16 %v412, %v411
      %v468 = vpack.c.b16 %v414, %v413
      %v469 = vpack.c.b16 %v416, %v415
      %v470 = vpack.c.b16 %v418, %v417
      %v471 = vpack.c.b16 %v420, %v419
      %v472 = vpack.c.b16 %v422, %v421
      %v473 = vpack.c.b16 %v424, %v423
      %v474 = vpack.c.b16 %v426, %v425
      %v475 = vpack.c.b16 %v428, %v427
      %v476 = vpack.c.b16 %v430, %v429
      %v477 = vpack.c.b16 %v432, %v431
      %v478 = vpack.c.b16 %v434, %v433
      %v479 = vpack.c.b16 %v436, %v435
      %v480 = vpack.c.b16 %v438, %v437
      %v481 = vpack.c.b16 %v440, %v439
      %v482 = vpack.c.b16 %v442, %v441
      %v483 = vpack.c.b16 %v444, %v443
      %v484 = vpack.c.b16 %v446, %v445
      %v485 = vpack.c.b16 %v448, %v447
      %v486 = vpack.c.b16 %v450, %v449
      %v487 = vpack.c.b16 %v452, %v451
      %v488 = vpack.c.b16 %v454, %v453
      %v489 = vpack.c.b16 %v456, %v455
      %v490 = vpack.c.b16 %v458, %v457
      %523 = vmatprep.subr.bf16.mxu0 0
      %524 = vmatpush1.bf16.msra.mxu0 %v459
      %525 = vmatprep.subr.bf16.mxu0 0
      %526 = vmatpush1.bf16.msra.mxu0 %v460
      %527 = vmatprep.subr.bf16.mxu0 0
      %528 = vmatpush1.bf16.msra.mxu0 %v461
      %529 = vmatprep.subr.bf16.mxu0 0
      %530 = vmatpush1.bf16.msra.mxu0 %v462
      %531 = vmatprep.subr.bf16.mxu0 0
      %532 = vmatpush1.bf16.msra.mxu0 %v463
      %533 = vmatprep.subr.bf16.mxu0 0
      %534 = vmatpush1.bf16.msra.mxu0 %v464
      %535 = vmatprep.subr.bf16.mxu0 0
      %536 = vmatpush1.bf16.msra.mxu0 %v465
      %537 = vmatprep.subr.bf16.mxu0 0
      %538 = vmatpush1.bf16.msra.mxu0 %v466
      %539 = vmatprep.subr.bf16.mxu0 0
      %540 = vmatpush1.bf16.msra.mxu0 %v467
      %541 = vmatprep.subr.bf16.mxu0 0
      %542 = vmatpush1.bf16.msra.mxu0 %v468
      %543 = vmatprep.subr.bf16.mxu0 0
      %544 = vmatpush1.bf16.msra.mxu0 %v469
      %545 = vmatprep.subr.bf16.mxu0 0
      %546 = vmatpush1.bf16.msra.mxu0 %v470
      %547 = vmatprep.subr.bf16.mxu0 0
      %548 = vmatpush1.bf16.msra.mxu0 %v471
      %549 = vmatprep.subr.bf16.mxu0 0
      %550 = vmatpush1.bf16.msra.mxu0 %v472
      %551 = vmatprep.subr.bf16.mxu0 0
      %552 = vmatpush1.bf16.msra.mxu0 %v473
      %553 = vmatprep.subr.bf16.mxu0 0
      %554 = vmatpush1.bf16.msra.mxu0 %v474
      %555 = vmatprep.mubr.bf16.mxu0 %v300
      %556 = vmatmul.mubr.bf16.gmra.mrb[0].mxu0 %v299
      %v557 = vpop.f32.mrb[0].mxu0
      %v558 = vadd.f32 %v255, %v557
      %v559 = vpop.f32.mrb[0].mxu0
      %v560 = vpop.f32.mrb[0].mxu0
      %v561 = vadd.f32 %v255, %v560
      %v562 = vpop.f32.mrb[0].mxu0
      %563 = vmatprep.mubr.bf16.mxu0 %v304
      %564 = vmatmul.mubr.bf16.gmra.mrb[0].mxu0 %v303
      %v565 = vpop.f32.mrb[0].mxu0
      %v566 = vadd.f32 %v255, %v565
      %v567 = vpop.f32.mrb[0].mxu0
      %v568 = vpop.f32.mrb[0].mxu0
      %v569 = vadd.f32 %v255, %v568
      %v570 = vpop.f32.mrb[0].mxu0
      %571 = vmatprep.mubr.bf16.mxu0 %v308
      %572 = vmatmul.mubr.bf16.gmra.mrb[0].mxu0 %v307
      %v573 = vpop.f32.mrb[0].mxu0
      %v574 = vadd.f32 %v255, %v573
      %v575 = vpop.f32.mrb[0].mxu0
      %v576 = vpop.f32.mrb[0].mxu0
      %v577 = vadd.f32 %v255, %v576
      %v578 = vpop.f32.mrb[0].mxu0
      %579 = vmatprep.mubr.bf16.mxu0 %v312
      %580 = vmatmul.mubr.bf16.gmra.mrb[0].mxu0 %v311
      %v581 = vpop.f32.mrb[0].mxu0
      %v582 = vadd.f32 %v255, %v581
      %v583 = vpop.f32.mrb[0].mxu0
      %v584 = vpop.f32.mrb[0].mxu0
      %v585 = vpop.f32.mrb[0].mxu0
      %586 = vdwg.mxu0
      %587 = vmatprep.subr.bf16.mxu0 0
      %588 = vmatpush1.bf16.msra.mxu0 %v475
      %589 = vmatprep.subr.bf16.mxu0 0
      %590 = vmatpush1.bf16.msra.mxu0 %v476
      %591 = vmatprep.subr.bf16.mxu0 0
      %592 = vmatpush1.bf16.msra.mxu0 %v477
      %593 = vmatprep.subr.bf16.mxu0 0
      %594 = vmatpush1.bf16.msra.mxu0 %v478
      %595 = vmatprep.subr.bf16.mxu0 0
      %596 = vmatpush1.bf16.msra.mxu0 %v479
      %597 = vmatprep.subr.bf16.mxu0 0
      %598 = vmatpush1.bf16.msra.mxu0 %v480
      %599 = vmatprep.subr.bf16.mxu0 0
      %600 = vmatpush1.bf16.msra.mxu0 %v481
      %601 = vmatprep.subr.bf16.mxu0 0
      %602 = vmatpush1.bf16.msra.mxu0 %v482
      %603 = vmatprep.subr.bf16.mxu0 0
      %604 = vmatpush1.bf16.msra.mxu0 %v483
      %605 = vmatprep.subr.bf16.mxu0 0
      %606 = vmatpush1.bf16.msra.mxu0 %v484
      %607 = vmatprep.subr.bf16.mxu0 0
      %608 = vmatpush1.bf16.msra.mxu0 %v485
      %609 = vmatprep.subr.bf16.mxu0 0
      %610 = vmatpush1.bf16.msra.mxu0 %v486
      %611 = vmatprep.subr.bf16.mxu0 0
      %612 = vmatpush1.bf16.msra.mxu0 %v487
      %613 = vmatprep.subr.bf16.mxu0 0
      %614 = vmatpush1.bf16.msra.mxu0 %v488
      %615 = vmatprep.subr.bf16.mxu0 0
      %616 = vmatpush1.bf16.msra.mxu0 %v489
      %617 = vmatprep.subr.bf16.mxu0 0
      %618 = vmatpush1.bf16.msra.mxu0 %v490
      %619 = vmatprep.mubr.bf16.mxu0 %v302
      %620 = vmatmul.mubr.bf16.gmra.mrb[0].mxu0 %v301
      %v621 = vpop.f32.mrb[0].mxu0
      %v622 = vadd.f32 %v558, %v621
      %v623 = vpop.f32.mrb[0].mxu0
      %v624 = vpop.f32.mrb[0].mxu0
      %v625 = vadd.f32 %v561, %v624
      %v626 = vpop.f32.mrb[0].mxu0
      %627 = vmatprep.mubr.bf16.mxu0 %v306
      %628 = vmatmul.mubr.bf16.gmra.mrb[0].mxu0 %v305
      %v629 = vpop.f32.mrb[0].mxu0
      %v630 = vadd.f32 %v566, %v629
      %v631 = vpop.f32.mrb[0].mxu0
      %v632 = vpop.f32.mrb[0].mxu0
      %v633 = vadd.f32 %v569, %v632
      %v634 = vpop.f32.mrb[0].mxu0
      %635 = vmatprep.mubr.bf16.mxu0 %v310
      %636 = vmatmul.mubr.bf16.gmra.mrb[0].mxu0 %v309
      %v637 = vpop.f32.mrb[0].mxu0
      %v638 = vadd.f32 %v574, %v637
      %v639 = vpop.f32.mrb[0].mxu0
      %v640 = vpop.f32.mrb[0].mxu0
      %v641 = vadd.f32 %v577, %v640
      %v642 = vpop.f32.mrb[0].mxu0
      %643 = vmatprep.mubr.bf16.mxu0 %v314
      %644 = vmatmul.mubr.bf16.gmra.mrb[0].mxu0 %v313
      %v645 = vpop.f32.mrb[0].mxu0
      %v646 = vadd.f32 %v582, %v645
      %v647 = vpop.f32.mrb[0].mxu0
      %v648 = vpop.f32.mrb[0].mxu0
      %v649 = vpop.f32.mrb[0].mxu0
      %650 = vdwg.mxu0
      %v651 = vmax.f32 %v622, 0.0
      %v652 = vmax.f32 %v625, 0.0
      %v653 = vmax.f32 %v630, 0.0
      %v654 = vmax.f32 %v633, 0.0
      %v655 = vmax.f32 %v638, 0.0
      %v656 = vmax.f32 %v641, 0.0
      %v657 = vmax.f32 %v646, 0.0
      %s658 = scalar_lea.vmem %s165, 112
      %v659 = vld [vmem:[%s658] sm:$0xff]
      %v660 = vld [vmem:[%s658 + $0x8] sm:$0xff]
      %v661 = vld [vmem:[%s658 + $0x10] sm:$0xff]
      %v662 = vld [vmem:[%s658 + $0x18] sm:$0xff]
      %v663 = vld [vmem:[%s658 + $0x20] sm:$0xff]
      %v664 = vld [vmem:[%s658 + $0x28] sm:$0xff]
      %v665 = vld [vmem:[%s658 + $0x30] sm:$0xff]
      %v666 = vld [vmem:[%s658 + $0x38] sm:$0xff]
      %v667 = vld [vmem:[%s658 + $0x40] sm:$0xff]
      %v668 = vld [vmem:[%s658 + $0x48] sm:$0xff]
      %v669 = vld [vmem:[%s658 + $0x50] sm:$0xff]
      %v670 = vld [vmem:[%s658 + $0x58] sm:$0xff]
      %v671 = vld [vmem:[%s658 + $0x60] sm:$0x11]
      %v672 = vld [vmem:[%s658 + $0x68] sm:$0x11]
      %v687 = vunpack.c.l.b16 %v659
      %v688 = vunpack.c.h.b16 %v659
      %v689 = vunpack.c.l.b16 %v660
      %v690 = vunpack.c.h.b16 %v660
      %v691 = vunpack.c.l.b16 %v661
      %v692 = vunpack.c.h.b16 %v661
      %v693 = vunpack.c.l.b16 %v662
      %v694 = vunpack.c.h.b16 %v662
      %v695 = vunpack.c.l.b16 %v663
      %v696 = vunpack.c.h.b16 %v663
      %v697 = vunpack.c.l.b16 %v664
      %v698 = vunpack.c.h.b16 %v664
      %v699 = vunpack.c.l.b16 %v665
      %v700 = vunpack.c.h.b16 %v665
      %v701 = vunpack.c.l.b16 %v666
      %v702 = vunpack.c.h.b16 %v666
      %v703 = vunpack.c.l.b16 %v667
      %v704 = vunpack.c.h.b16 %v667
      %v705 = vunpack.c.l.b16 %v668
      %v706 = vunpack.c.h.b16 %v668
      %v707 = vunpack.c.l.b16 %v669
      %v708 = vunpack.c.h.b16 %v669
      %v709 = vunpack.c.l.b16 %v670
      %v710 = vunpack.c.h.b16 %v670
      %v711 = vunpack.c.l.b16 %v671
      %v712 = vunpack.c.h.b16 %v671
      %v713 = vunpack.c.l.b16 %v672
      %v714 = vunpack.c.h.b16 %v672
      %v715 = vpack.c.b16 %v691, %v687
      %v716 = vpack.c.b16 %v692, %v688
      %v717 = vpack.c.b16 %v693, %v689
      %v718 = vpack.c.b16 %v694, %v690
      %v719 = vpack.c.b16 %v699, %v695
      %v720 = vpack.c.b16 %v700, %v696
      %v721 = vpack.c.b16 %v701, %v697
      %v722 = vpack.c.b16 %v702, %v698
      %v723 = vpack.c.b16 %v707, %v703
      %v724 = vpack.c.b16 %v708, %v704
      %v725 = vpack.c.b16 %v709, %v705
      %v726 = vpack.c.b16 %v710, %v706
      %v727 = vpack.c.b16 %v711, %v711
      %v728 = vpack.c.b16 %v712, %v712
      %v729 = vpack.c.b16 %v713, %v713
      %v730 = vpack.c.b16 %v714, %v714
      %747 = vmatprep.subr.bf16.mxu0 0
      %748 = vmatpush1.bf16.msra.mxu0 %v459
      %749 = vmatprep.subr.bf16.mxu0 0
      %750 = vmatpush1.bf16.msra.mxu0 %v460
      %751 = vmatprep.subr.bf16.mxu0 0
      %752 = vmatpush1.bf16.msra.mxu0 %v461
      %753 = vmatprep.subr.bf16.mxu0 0
      %754 = vmatpush1.bf16.msra.mxu0 %v462
      %755 = vmatprep.subr.bf16.mxu0 0
      %756 = vmatpush1.bf16.msra.mxu0 %v463
      %757 = vmatprep.subr.bf16.mxu0 0
      %758 = vmatpush1.bf16.msra.mxu0 %v464
      %759 = vmatprep.subr.bf16.mxu0 0
      %760 = vmatpush1.bf16.msra.mxu0 %v465
      %761 = vmatprep.subr.bf16.mxu0 0
      %762 = vmatpush1.bf16.msra.mxu0 %v466
      %763 = vmatprep.subr.bf16.mxu0 0
      %764 = vmatpush1.bf16.msra.mxu0 %v467
      %765 = vmatprep.subr.bf16.mxu0 0
      %766 = vmatpush1.bf16.msra.mxu0 %v468
      %767 = vmatprep.subr.bf16.mxu0 0
      %768 = vmatpush1.bf16.msra.mxu0 %v469
      %769 = vmatprep.subr.bf16.mxu0 0
      %770 = vmatpush1.bf16.msra.mxu0 %v470
      %771 = vmatprep.subr.bf16.mxu0 0
      %772 = vmatpush1.bf16.msra.mxu0 %v471
      %773 = vmatprep.subr.bf16.mxu0 0
      %774 = vmatpush1.bf16.msra.mxu0 %v472
      %775 = vmatprep.subr.bf16.mxu0 0
      %776 = vmatpush1.bf16.msra.mxu0 %v473
      %777 = vmatprep.subr.bf16.mxu0 0
      %778 = vmatpush1.bf16.msra.mxu0 %v474
      %779 = vmatprep.mubr.bf16.mxu0 %v716
      %780 = vmatmul.mubr.bf16.gmra.mrb[0].mxu0 %v715
      %v781 = vpop.f32.mrb[0].mxu0
      %v782 = vadd.f32 %v255, %v781
      %v783 = vpop.f32.mrb[0].mxu0
      %v784 = vpop.f32.mrb[0].mxu0
      %v785 = vadd.f32 %v255, %v784
      %v786 = vpop.f32.mrb[0].mxu0
      %787 = vmatprep.mubr.bf16.mxu0 %v720
      %788 = vmatmul.mubr.bf16.gmra.mrb[0].mxu0 %v719
      %v789 = vpop.f32.mrb[0].mxu0
      %v790 = vadd.f32 %v255, %v789
      %v791 = vpop.f32.mrb[0].mxu0
      %v792 = vpop.f32.mrb[0].mxu0
      %v793 = vadd.f32 %v255, %v792
      %v794 = vpop.f32.mrb[0].mxu0
      %795 = vmatprep.mubr.bf16.mxu0 %v724
      %796 = vmatmul.mubr.bf16.gmra.mrb[0].mxu0 %v723
      %v797 = vpop.f32.mrb[0].mxu0
      %v798 = vadd.f32 %v255, %v797
      %v799 = vpop.f32.mrb[0].mxu0
      %v800 = vpop.f32.mrb[0].mxu0
      %v801 = vadd.f32 %v255, %v800
      %v802 = vpop.f32.mrb[0].mxu0
      %803 = vmatprep.mubr.bf16.mxu0 %v728
      %804 = vmatmul.mubr.bf16.gmra.mrb[0].mxu0 %v727
      %v805 = vpop.f32.mrb[0].mxu0
      %v806 = vadd.f32 %v255, %v805
      %v807 = vpop.f32.mrb[0].mxu0
      %v808 = vpop.f32.mrb[0].mxu0
      %v809 = vpop.f32.mrb[0].mxu0
      %810 = vdwg.mxu0
      %811 = vmatprep.subr.bf16.mxu0 0
      %812 = vmatpush1.bf16.msra.mxu0 %v475
      %813 = vmatprep.subr.bf16.mxu0 0
      %814 = vmatpush1.bf16.msra.mxu0 %v476
      %815 = vmatprep.subr.bf16.mxu0 0
      %816 = vmatpush1.bf16.msra.mxu0 %v477
      %817 = vmatprep.subr.bf16.mxu0 0
      %818 = vmatpush1.bf16.msra.mxu0 %v478
      %819 = vmatprep.subr.bf16.mxu0 0
      %820 = vmatpush1.bf16.msra.mxu0 %v479
      %821 = vmatprep.subr.bf16.mxu0 0
      %822 = vmatpush1.bf16.msra.mxu0 %v480
      %823 = vmatprep.subr.bf16.mxu0 0
      %824 = vmatpush1.bf16.msra.mxu0 %v481
      %825 = vmatprep.subr.bf16.mxu0 0
      %826 = vmatpush1.bf16.msra.mxu0 %v482
      %827 = vmatprep.subr.bf16.mxu0 0
      %828 = vmatpush1.bf16.msra.mxu0 %v483
      %829 = vmatprep.subr.bf16.mxu0 0
      %830 = vmatpush1.bf16.msra.mxu0 %v484
      %831 = vmatprep.subr.bf16.mxu0 0
      %832 = vmatpush1.bf16.msra.mxu0 %v485
      %833 = vmatprep.subr.bf16.mxu0 0
      %834 = vmatpush1.bf16.msra.mxu0 %v486
      %835 = vmatprep.subr.bf16.mxu0 0
      %836 = vmatpush1.bf16.msra.mxu0 %v487
      %837 = vmatprep.subr.bf16.mxu0 0
      %838 = vmatpush1.bf16.msra.mxu0 %v488
      %839 = vmatprep.subr.bf16.mxu0 0
      %840 = vmatpush1.bf16.msra.mxu0 %v489
      %841 = vmatprep.subr.bf16.mxu0 0
      %842 = vmatpush1.bf16.msra.mxu0 %v490
      %843 = vmatprep.mubr.bf16.mxu0 %v718
      %844 = vmatmul.mubr.bf16.gmra.mrb[0].mxu0 %v717
      %v845 = vpop.f32.mrb[0].mxu0
      %v846 = vadd.f32 %v782, %v845
      %v847 = vpop.f32.mrb[0].mxu0
      %v848 = vpop.f32.mrb[0].mxu0
      %v849 = vadd.f32 %v785, %v848
      %v850 = vpop.f32.mrb[0].mxu0
      %851 = vmatprep.mubr.bf16.mxu0 %v722
      %852 = vmatmul.mubr.bf16.gmra.mrb[0].mxu0 %v721
      %v853 = vpop.f32.mrb[0].mxu0
      %v854 = vadd.f32 %v790, %v853
      %v855 = vpop.f32.mrb[0].mxu0
      %v856 = vpop.f32.mrb[0].mxu0
      %v857 = vadd.f32 %v793, %v856
      %v858 = vpop.f32.mrb[0].mxu0
      %859 = vmatprep.mubr.bf16.mxu0 %v726
      %860 = vmatmul.mubr.bf16.gmra.mrb[0].mxu0 %v725
      %v861 = vpop.f32.mrb[0].mxu0
      %v862 = vadd.f32 %v798, %v861
      %v863 = vpop.f32.mrb[0].mxu0
      %v864 = vpop.f32.mrb[0].mxu0
      %v865 = vadd.f32 %v801, %v864
      %v866 = vpop.f32.mrb[0].mxu0
      %867 = vmatprep.mubr.bf16.mxu0 %v730
      %868 = vmatmul.mubr.bf16.gmra.mrb[0].mxu0 %v729
      %v869 = vpop.f32.mrb[0].mxu0
      %v870 = vadd.f32 %v806, %v869
      %v871 = vpop.f32.mrb[0].mxu0
      %v872 = vpop.f32.mrb[0].mxu0
      %v873 = vpop.f32.mrb[0].mxu0
      %874 = vdwg.mxu0
      %v875 = vmax.f32 %v846, 0.0
      %v876 = vmax.f32 %v849, 0.0
      %v877 = vmax.f32 %v854, 0.0
      %v878 = vmax.f32 %v857, 0.0
      %v879 = vmax.f32 %v862, 0.0
      %v880 = vmax.f32 %v865, 0.0
      %v881 = vmax.f32 %v870, 0.0
      %v882 = vmax.f32 %v651, %v875
      %v883 = vmax.f32 %v652, %v876
      %v884 = vmax.f32 %v653, %v877
      %v885 = vmax.f32 %v654, %v878
      %v886 = vmax.f32 %v655, %v879
      %v887 = vmax.f32 %v656, %v880
      %v888 = vmax.f32 %v657, %v881
      %s889 = scalar_lea.vmem %s165, 224
      %v890 = vld [vmem:[%s889] sm:$0xff]
      %v891 = vld [vmem:[%s889 + $0x8] sm:$0xff]
      %v892 = vld [vmem:[%s889 + $0x10] sm:$0xff]
      %v893 = vld [vmem:[%s889 + $0x18] sm:$0xff]
      %v894 = vld [vmem:[%s889 + $0x20] sm:$0xff]
      %v895 = vld [vmem:[%s889 + $0x28] sm:$0xff]
      %v896 = vld [vmem:[%s889 + $0x30] sm:$0xff]
      %v897 = vld [vmem:[%s889 + $0x38] sm:$0xff]
      %v898 = vld [vmem:[%s889 + $0x40] sm:$0xff]
      %v899 = vld [vmem:[%s889 + $0x48] sm:$0xff]
      %v900 = vld [vmem:[%s889 + $0x50] sm:$0xff]
      %v901 = vld [vmem:[%s889 + $0x58] sm:$0xff]
      %v902 = vld [vmem:[%s889 + $0x60] sm:$0x11]
      %v903 = vld [vmem:[%s889 + $0x68] sm:$0x11]
      %v918 = vunpack.c.l.b16 %v890
      %v919 = vunpack.c.h.b16 %v890
      %v920 = vunpack.c.l.b16 %v891
      %v921 = vunpack.c.h.b16 %v891
      %v922 = vunpack.c.l.b16 %v892
      %v923 = vunpack.c.h.b16 %v892
      %v924 = vunpack.c.l.b16 %v893
      %v925 = vunpack.c.h.b16 %v893
      %v926 = vunpack.c.l.b16 %v894
      %v927 = vunpack.c.h.b16 %v894
      %v928 = vunpack.c.l.b16 %v895
      %v929 = vunpack.c.h.b16 %v895
      %v930 = vunpack.c.l.b16 %v896
      %v931 = vunpack.c.h.b16 %v896
      %v932 = vunpack.c.l.b16 %v897
      %v933 = vunpack.c.h.b16 %v897
      %v934 = vunpack.c.l.b16 %v898
      %v935 = vunpack.c.h.b16 %v898
      %v936 = vunpack.c.l.b16 %v899
      %v937 = vunpack.c.h.b16 %v899
      %v938 = vunpack.c.l.b16 %v900
      %v939 = vunpack.c.h.b16 %v900
      %v940 = vunpack.c.l.b16 %v901
      %v941 = vunpack.c.h.b16 %v901
      %v942 = vunpack.c.l.b16 %v902
      %v943 = vunpack.c.h.b16 %v902
      %v944 = vunpack.c.l.b16 %v903
      %v945 = vunpack.c.h.b16 %v903
      %v946 = vpack.c.b16 %v922, %v918
      %v947 = vpack.c.b16 %v923, %v919
      %v948 = vpack.c.b16 %v924, %v920
      %v949 = vpack.c.b16 %v925, %v921
      %v950 = vpack.c.b16 %v930, %v926
      %v951 = vpack.c.b16 %v931, %v927
      %v952 = vpack.c.b16 %v932, %v928
      %v953 = vpack.c.b16 %v933, %v929
      %v954 = vpack.c.b16 %v938, %v934
      %v955 = vpack.c.b16 %v939, %v935
      %v956 = vpack.c.b16 %v940, %v936
      %v957 = vpack.c.b16 %v941, %v937
      %v958 = vpack.c.b16 %v942, %v942
      %v959 = vpack.c.b16 %v943, %v943
      %v960 = vpack.c.b16 %v944, %v944
      %v961 = vpack.c.b16 %v945, %v945
      %978 = vmatprep.subr.bf16.mxu0 0
      %979 = vmatpush1.bf16.msra.mxu0 %v459
      %980 = vmatprep.subr.bf16.mxu0 0
      %981 = vmatpush1.bf16.msra.mxu0 %v460
      %982 = vmatprep.subr.bf16.mxu0 0
      %983 = vmatpush1.bf16.msra.mxu0 %v461
      %984 = vmatprep.subr.bf16.mxu0 0
      %985 = vmatpush1.bf16.msra.mxu0 %v462
      %986 = vmatprep.subr.bf16.mxu0 0
      %987 = vmatpush1.bf16.msra.mxu0 %v463
      %988 = vmatprep.subr.bf16.mxu0 0
      %989 = vmatpush1.bf16.msra.mxu0 %v464
      %990 = vmatprep.subr.bf16.mxu0 0
      %991 = vmatpush1.bf16.msra.mxu0 %v465
      %992 = vmatprep.subr.bf16.mxu0 0
      %993 = vmatpush1.bf16.msra.mxu0 %v466
      %994 = vmatprep.subr.bf16.mxu0 0
      %995 = vmatpush1.bf16.msra.mxu0 %v467
      %996 = vmatprep.subr.bf16.mxu0 0
      %997 = vmatpush1.bf16.msra.mxu0 %v468
      %998 = vmatprep.subr.bf16.mxu0 0
      %999 = vmatpush1.bf16.msra.mxu0 %v469
      %1000 = vmatprep.subr.bf16.mxu0 0
      %1001 = vmatpush1.bf16.msra.mxu0 %v470
      %1002 = vmatprep.subr.bf16.mxu0 0
      %1003 = vmatpush1.bf16.msra.mxu0 %v471
      %1004 = vmatprep.subr.bf16.mxu0 0
      %1005 = vmatpush1.bf16.msra.mxu0 %v472
      %1006 = vmatprep.subr.bf16.mxu0 0
      %1007 = vmatpush1.bf16.msra.mxu0 %v473
      %1008 = vmatprep.subr.bf16.mxu0 0
      %1009 = vmatpush1.bf16.msra.mxu0 %v474
      %1010 = vmatprep.mubr.bf16.mxu0 %v947
      %1011 = vmatmul.mubr.bf16.gmra.mrb[0].mxu0 %v946
      %v1012 = vpop.f32.mrb[0].mxu0
      %v1013 = vadd.f32 %v255, %v1012
      %v1014 = vpop.f32.mrb[0].mxu0
      %v1015 = vpop.f32.mrb[0].mxu0
      %v1016 = vadd.f32 %v255, %v1015
      %v1017 = vpop.f32.mrb[0].mxu0
      %1018 = vmatprep.mubr.bf16.mxu0 %v951
      %1019 = vmatmul.mubr.bf16.gmra.mrb[0].mxu0 %v950
      %v1020 = vpop.f32.mrb[0].mxu0
      %v1021 = vadd.f32 %v255, %v1020
      %v1022 = vpop.f32.mrb[0].mxu0
      %v1023 = vpop.f32.mrb[0].mxu0
      %v1024 = vadd.f32 %v255, %v1023
      %v1025 = vpop.f32.mrb[0].mxu0
      %1026 = vmatprep.mubr.bf16.mxu0 %v955
      %1027 = vmatmul.mubr.bf16.gmra.mrb[0].mxu0 %v954
      %v1028 = vpop.f32.mrb[0].mxu0
      %v1029 = vadd.f32 %v255, %v1028
      %v1030 = vpop.f32.mrb[0].mxu0
      %v1031 = vpop.f32.mrb[0].mxu0
      %v1032 = vadd.f32 %v255, %v1031
      %v1033 = vpop.f32.mrb[0].mxu0
      %1034 = vmatprep.mubr.bf16.mxu0 %v959
      %1035 = vmatmul.mubr.bf16.gmra.mrb[0].mxu0 %v958
      %v1036 = vpop.f32.mrb[0].mxu0
      %v1037 = vadd.f32 %v255, %v1036
      %v1038 = vpop.f32.mrb[0].mxu0
      %v1039 = vpop.f32.mrb[0].mxu0
      %v1040 = vpop.f32.mrb[0].mxu0
      %1041 = vdwg.mxu0
      %1042 = vmatprep.subr.bf16.mxu0 0
      %1043 = vmatpush1.bf16.msra.mxu0 %v475
      %1044 = vmatprep.subr.bf16.mxu0 0
      %1045 = vmatpush1.bf16.msra.mxu0 %v476
      %1046 = vmatprep.subr.bf16.mxu0 0
      %1047 = vmatpush1.bf16.msra.mxu0 %v477
      %1048 = vmatprep.subr.bf16.mxu0 0
      %1049 = vmatpush1.bf16.msra.mxu0 %v478
      %1050 = vmatprep.subr.bf16.mxu0 0
      %1051 = vmatpush1.bf16.msra.mxu0 %v479
      %1052 = vmatprep.subr.bf16.mxu0 0
      %1053 = vmatpush1.bf16.msra.mxu0 %v480
      %1054 = vmatprep.subr.bf16.mxu0 0
      %1055 = vmatpush1.bf16.msra.mxu0 %v481
      %1056 = vmatprep.subr.bf16.mxu0 0
      %1057 = vmatpush1.bf16.msra.mxu0 %v482
      %1058 = vmatprep.subr.bf16.mxu0 0
      %1059 = vmatpush1.bf16.msra.mxu0 %v483
      %1060 = vmatprep.subr.bf16.mxu0 0
      %1061 = vmatpush1.bf16.msra.mxu0 %v484
      %1062 = vmatprep.subr.bf16.mxu0 0
      %1063 = vmatpush1.bf16.msra.mxu0 %v485
      %1064 = vmatprep.subr.bf16.mxu0 0
      %1065 = vmatpush1.bf16.msra.mxu0 %v486
      %1066 = vmatprep.subr.bf16.mxu0 0
      %1067 = vmatpush1.bf16.msra.mxu0 %v487
      %1068 = vmatprep.subr.bf16.mxu0 0
      %1069 = vmatpush1.bf16.msra.mxu0 %v488
      %1070 = vmatprep.subr.bf16.mxu0 0
      %1071 = vmatpush1.bf16.msra.mxu0 %v489
      %1072 = vmatprep.subr.bf16.mxu0 0
      %1073 = vmatpush1.bf16.msra.mxu0 %v490
      %1074 = vmatprep.mubr.bf16.mxu0 %v949
      %1075 = vmatmul.mubr.bf16.gmra.mrb[0].mxu0 %v948
      %v1076 = vpop.f32.mrb[0].mxu0
      %v1077 = vadd.f32 %v1013, %v1076
      %v1078 = vpop.f32.mrb[0].mxu0
      %v1079 = vpop.f32.mrb[0].mxu0
      %v1080 = vadd.f32 %v1016, %v1079
      %v1081 = vpop.f32.mrb[0].mxu0
      %1082 = vmatprep.mubr.bf16.mxu0 %v953
      %1083 = vmatmul.mubr.bf16.gmra.mrb[0].mxu0 %v952
      %v1084 = vpop.f32.mrb[0].mxu0
      %v1085 = vadd.f32 %v1021, %v1084
      %v1086 = vpop.f32.mrb[0].mxu0
      %v1087 = vpop.f32.mrb[0].mxu0
      %v1088 = vadd.f32 %v1024, %v1087
      %v1089 = vpop.f32.mrb[0].mxu0
      %1090 = vmatprep.mubr.bf16.mxu0 %v957
      %1091 = vmatmul.mubr.bf16.gmra.mrb[0].mxu0 %v956
      %v1092 = vpop.f32.mrb[0].mxu0
      %v1093 = vadd.f32 %v1029, %v1092
      %v1094 = vpop.f32.mrb[0].mxu0
      %v1095 = vpop.f32.mrb[0].mxu0
      %v1096 = vadd.f32 %v1032, %v1095
      %v1097 = vpop.f32.mrb[0].mxu0
      %1098 = vmatprep.mubr.bf16.mxu0 %v961
      %1099 = vmatmul.mubr.bf16.gmra.mrb[0].mxu0 %v960
      %v1100 = vpop.f32.mrb[0].mxu0
      %v1101 = vadd.f32 %v1037, %v1100
      %v1102 = vpop.f32.mrb[0].mxu0
      %v1103 = vpop.f32.mrb[0].mxu0
      %v1104 = vpop.f32.mrb[0].mxu0
      %1105 = vdwg.mxu0
      %v1106 = vmax.f32 %v1077, 0.0
      %v1107 = vmax.f32 %v1080, 0.0
      %v1108 = vmax.f32 %v1085, 0.0
      %v1109 = vmax.f32 %v1088, 0.0
      %v1110 = vmax.f32 %v1093, 0.0
      %v1111 = vmax.f32 %v1096, 0.0
      %v1112 = vmax.f32 %v1101, 0.0
      %v1113 = vmax.f32 %v882, %v1106
      %v1114 = vmax.f32 %v883, %v1107
      %v1115 = vmax.f32 %v884, %v1108
      %v1116 = vmax.f32 %v885, %v1109
      %v1117 = vmax.f32 %v886, %v1110
      %v1118 = vmax.f32 %v887, %v1111
      %v1119 = vmax.f32 %v888, %v1112
      %s1120 = scalar_lea.vmem %s165, 336
      %v1121 = vld [vmem:[%s1120] sm:$0xff]
      %v1122 = vld [vmem:[%s1120 + $0x8] sm:$0xff]
      %v1123 = vld [vmem:[%s1120 + $0x10] sm:$0xff]
      %v1124 = vld [vmem:[%s1120 + $0x18] sm:$0xff]
      %v1125 = vld [vmem:[%s1120 + $0x20] sm:$0xff]
      %v1126 = vld [vmem:[%s1120 + $0x28] sm:$0xff]
      %v1127 = vld [vmem:[%s1120 + $0x30] sm:$0xff]
      %v1128 = vld [vmem:[%s1120 + $0x38] sm:$0xff]
      %v1129 = vld [vmem:[%s1120 + $0x40] sm:$0xff]
      %v1130 = vld [vmem:[%s1120 + $0x48] sm:$0xff]
      %v1131 = vld [vmem:[%s1120 + $0x50] sm:$0xff]
      %v1132 = vld [vmem:[%s1120 + $0x58] sm:$0xff]
      %v1133 = vld [vmem:[%s1120 + $0x60] sm:$0x11]
      %v1134 = vld [vmem:[%s1120 + $0x68] sm:$0x11]
      %v1149 = vunpack.c.l.b16 %v1121
      %v1150 = vunpack.c.h.b16 %v1121
      %v1151 = vunpack.c.l.b16 %v1122
      %v1152 = vunpack.c.h.b16 %v1122
      %v1153 = vunpack.c.l.b16 %v1123
      %v1154 = vunpack.c.h.b16 %v1123
      %v1155 = vunpack.c.l.b16 %v1124
      %v1156 = vunpack.c.h.b16 %v1124
      %v1157 = vunpack.c.l.b16 %v1125
      %v1158 = vunpack.c.h.b16 %v1125
      %v1159 = vunpack.c.l.b16 %v1126
      %v1160 = vunpack.c.h.b16 %v1126
      %v1161 = vunpack.c.l.b16 %v1127
      %v1162 = vunpack.c.h.b16 %v1127
      %v1163 = vunpack.c.l.b16 %v1128
      %v1164 = vunpack.c.h.b16 %v1128
      %v1165 = vunpack.c.l.b16 %v1129
      %v1166 = vunpack.c.h.b16 %v1129
      %v1167 = vunpack.c.l.b16 %v1130
      %v1168 = vunpack.c.h.b16 %v1130
      %v1169 = vunpack.c.l.b16 %v1131
      %v1170 = vunpack.c.h.b16 %v1131
      %v1171 = vunpack.c.l.b16 %v1132
      %v1172 = vunpack.c.h.b16 %v1132
      %v1173 = vunpack.c.l.b16 %v1133
      %v1174 = vunpack.c.h.b16 %v1133
      %v1175 = vunpack.c.l.b16 %v1134
      %v1176 = vunpack.c.h.b16 %v1134
      %v1177 = vpack.c.b16 %v1153, %v1149
      %v1178 = vpack.c.b16 %v1154, %v1150
      %v1179 = vpack.c.b16 %v1155, %v1151
      %v1180 = vpack.c.b16 %v1156, %v1152
      %v1181 = vpack.c.b16 %v1161, %v1157
      %v1182 = vpack.c.b16 %v1162, %v1158
      %v1183 = vpack.c.b16 %v1163, %v1159
      %v1184 = vpack.c.b16 %v1164, %v1160
      %v1185 = vpack.c.b16 %v1169, %v1165
      %v1186 = vpack.c.b16 %v1170, %v1166
      %v1187 = vpack.c.b16 %v1171, %v1167
      %v1188 = vpack.c.b16 %v1172, %v1168
      %v1189 = vpack.c.b16 %v1173, %v1173
      %v1190 = vpack.c.b16 %v1174, %v1174
      %v1191 = vpack.c.b16 %v1175, %v1175
      %v1192 = vpack.c.b16 %v1176, %v1176
      %1209 = vmatprep.subr.bf16.mxu0 0
      %1210 = vmatpush1.bf16.msra.mxu0 %v459
      %1211 = vmatprep.subr.bf16.mxu0 0
      %1212 = vmatpush1.bf16.msra.mxu0 %v460
      %1213 = vmatprep.subr.bf16.mxu0 0
      %1214 = vmatpush1.bf16.msra.mxu0 %v461
      %1215 = vmatprep.subr.bf16.mxu0 0
      %1216 = vmatpush1.bf16.msra.mxu0 %v462
      %1217 = vmatprep.subr.bf16.mxu0 0
      %1218 = vmatpush1.bf16.msra.mxu0 %v463
      %1219 = vmatprep.subr.bf16.mxu0 0
      %1220 = vmatpush1.bf16.msra.mxu0 %v464
      %1221 = vmatprep.subr.bf16.mxu0 0
      %1222 = vmatpush1.bf16.msra.mxu0 %v465
      %1223 = vmatprep.subr.bf16.mxu0 0
      %1224 = vmatpush1.bf16.msra.mxu0 %v466
      %1225 = vmatprep.subr.bf16.mxu0 0
      %1226 = vmatpush1.bf16.msra.mxu0 %v467
      %1227 = vmatprep.subr.bf16.mxu0 0
      %1228 = vmatpush1.bf16.msra.mxu0 %v468
      %1229 = vmatprep.subr.bf16.mxu0 0
      %1230 = vmatpush1.bf16.msra.mxu0 %v469
      %1231 = vmatprep.subr.bf16.mxu0 0
      %1232 = vmatpush1.bf16.msra.mxu0 %v470
      %1233 = vmatprep.subr.bf16.mxu0 0
      %1234 = vmatpush1.bf16.msra.mxu0 %v471
      %1235 = vmatprep.subr.bf16.mxu0 0
      %1236 = vmatpush1.bf16.msra.mxu0 %v472
      %1237 = vmatprep.subr.bf16.mxu0 0
      %1238 = vmatpush1.bf16.msra.mxu0 %v473
      %1239 = vmatprep.subr.bf16.mxu0 0
      %1240 = vmatpush1.bf16.msra.mxu0 %v474
      %1241 = vmatprep.mubr.bf16.mxu0 %v1178
      %1242 = vmatmul.mubr.bf16.gmra.mrb[0].mxu0 %v1177
      %v1243 = vpop.f32.mrb[0].mxu0
      %v1244 = vadd.f32 %v255, %v1243
      %v1245 = vpop.f32.mrb[0].mxu0
      %v1246 = vpop.f32.mrb[0].mxu0
      %v1247 = vadd.f32 %v255, %v1246
      %v1248 = vpop.f32.mrb[0].mxu0
      %1249 = vmatprep.mubr.bf16.mxu0 %v1182
      %1250 = vmatmul.mubr.bf16.gmra.mrb[0].mxu0 %v1181
      %v1251 = vpop.f32.mrb[0].mxu0
      %v1252 = vadd.f32 %v255, %v1251
      %v1253 = vpop.f32.mrb[0].mxu0
      %v1254 = vpop.f32.mrb[0].mxu0
      %v1255 = vadd.f32 %v255, %v1254
      %v1256 = vpop.f32.mrb[0].mxu0
      %1257 = vmatprep.mubr.bf16.mxu0 %v1186
      %1258 = vmatmul.mubr.bf16.gmra.mrb[0].mxu0 %v1185
      %v1259 = vpop.f32.mrb[0].mxu0
      %v1260 = vadd.f32 %v255, %v1259
      %v1261 = vpop.f32.mrb[0].mxu0
      %v1262 = vpop.f32.mrb[0].mxu0
      %v1263 = vadd.f32 %v255, %v1262
      %v1264 = vpop.f32.mrb[0].mxu0
      %1265 = vmatprep.mubr.bf16.mxu0 %v1190
      %1266 = vmatmul.mubr.bf16.gmra.mrb[0].mxu0 %v1189
      %v1267 = vpop.f32.mrb[0].mxu0
      %v1268 = vadd.f32 %v255, %v1267
      %v1269 = vpop.f32.mrb[0].mxu0
      %v1270 = vpop.f32.mrb[0].mxu0
      %v1271 = vpop.f32.mrb[0].mxu0
      %1272 = vdwg.mxu0
      %1273 = vmatprep.subr.bf16.mxu0 0
      %1274 = vmatpush1.bf16.msra.mxu0 %v475
      %1275 = vmatprep.subr.bf16.mxu0 0
      %1276 = vmatpush1.bf16.msra.mxu0 %v476
      %1277 = vmatprep.subr.bf16.mxu0 0
      %1278 = vmatpush1.bf16.msra.mxu0 %v477
      %1279 = vmatprep.subr.bf16.mxu0 0
      %1280 = vmatpush1.bf16.msra.mxu0 %v478
      %1281 = vmatprep.subr.bf16.mxu0 0
      %1282 = vmatpush1.bf16.msra.mxu0 %v479
      %1283 = vmatprep.subr.bf16.mxu0 0
      %1284 = vmatpush1.bf16.msra.mxu0 %v480
      %1285 = vmatprep.subr.bf16.mxu0 0
      %1286 = vmatpush1.bf16.msra.mxu0 %v481
      %1287 = vmatprep.subr.bf16.mxu0 0
      %1288 = vmatpush1.bf16.msra.mxu0 %v482
      %1289 = vmatprep.subr.bf16.mxu0 0
      %1290 = vmatpush1.bf16.msra.mxu0 %v483
      %1291 = vmatprep.subr.bf16.mxu0 0
      %1292 = vmatpush1.bf16.msra.mxu0 %v484
      %1293 = vmatprep.subr.bf16.mxu0 0
      %1294 = vmatpush1.bf16.msra.mxu0 %v485
      %1295 = vmatprep.subr.bf16.mxu0 0
      %1296 = vmatpush1.bf16.msra.mxu0 %v486
      %1297 = vmatprep.subr.bf16.mxu0 0
      %1298 = vmatpush1.bf16.msra.mxu0 %v487
      %1299 = vmatprep.subr.bf16.mxu0 0
      %1300 = vmatpush1.bf16.msra.mxu0 %v488
      %1301 = vmatprep.subr.bf16.mxu0 0
      %1302 = vmatpush1.bf16.msra.mxu0 %v489
      %1303 = vmatprep.subr.bf16.mxu0 0
      %1304 = vmatpush1.bf16.msra.mxu0 %v490
      %1305 = vmatprep.mubr.bf16.mxu0 %v1180
      %1306 = vmatmul.mubr.bf16.gmra.mrb[0].mxu0 %v1179
      %v1307 = vpop.f32.mrb[0].mxu0
      %v1308 = vadd.f32 %v1244, %v1307
      %v1309 = vpop.f32.mrb[0].mxu0
      %v1310 = vpop.f32.mrb[0].mxu0
      %v1311 = vadd.f32 %v1247, %v1310
      %v1312 = vpop.f32.mrb[0].mxu0
      %1313 = vmatprep.mubr.bf16.mxu0 %v1184
      %1314 = vmatmul.mubr.bf16.gmra.mrb[0].mxu0 %v1183
      %v1315 = vpop.f32.mrb[0].mxu0
      %v1316 = vadd.f32 %v1252, %v1315
      %v1317 = vpop.f32.mrb[0].mxu0
      %v1318 = vpop.f32.mrb[0].mxu0
      %v1319 = vadd.f32 %v1255, %v1318
      %v1320 = vpop.f32.mrb[0].mxu0
      %1321 = vmatprep.mubr.bf16.mxu0 %v1188
      %1322 = vmatmul.mubr.bf16.gmra.mrb[0].mxu0 %v1187
      %v1323 = vpop.f32.mrb[0].mxu0
      %v1324 = vadd.f32 %v1260, %v1323
      %v1325 = vpop.f32.mrb[0].mxu0
      %v1326 = vpop.f32.mrb[0].mxu0
      %v1327 = vadd.f32 %v1263, %v1326
      %v1328 = vpop.f32.mrb[0].mxu0
      %1329 = vmatprep.mubr.bf16.mxu0 %v1192
      %1330 = vmatmul.mubr.bf16.gmra.mrb[0].mxu0 %v1191
      %v1331 = vpop.f32.mrb[0].mxu0
      %v1332 = vadd.f32 %v1268, %v1331
      %v1333 = vpop.f32.mrb[0].mxu0
      %v1334 = vpop.f32.mrb[0].mxu0
      %v1335 = vpop.f32.mrb[0].mxu0
      %1336 = vdwg.mxu0
      %v1337 = vmax.f32 %v1308, 0.0
      %v1338 = vmax.f32 %v1311, 0.0
      %v1339 = vmax.f32 %v1316, 0.0
      %v1340 = vmax.f32 %v1319, 0.0
      %v1341 = vmax.f32 %v1324, 0.0
      %v1342 = vmax.f32 %v1327, 0.0
      %v1343 = vmax.f32 %v1332, 0.0
      %v1344 = vmax.f32 %v1113, %v1337
      %v1345 = vmax.f32 %v1114, %v1338
      %v1346 = vmax.f32 %v1115, %v1339
      %v1347 = vmax.f32 %v1116, %v1340
      %v1348 = vmax.f32 %v1117, %v1341
      %v1349 = vmax.f32 %v1118, %v1342
      %v1350 = vmax.f32 %v1119, %v1343
      %v1358 = vcombine.high %v1344, %v1344
      %v1360 = vunpack.c.l.s4 1966171168
      %v1361 = vunpack.c.0.s8 %v1360
      %v1362 = vlaneseq
      %v1363 = vshrl.u32 %v1362, 7
      %v1364 = vsub.s32 %v1361, %v1363
      %v1365 = vrot.slane %v1344, %v1364
      %v1367 = vunpack.c.l.s4 1966171168
      %v1368 = vunpack.c.0.s8 %v1367
      %v1369 = vlaneseq
      %v1370 = vshrl.u32 %v1369, 7
      %v1371 = vsub.s32 %v1368, %v1370
      %v1372 = vrot.slane %v1358, %v1371
      %v1373 = vcombine.high %v1365, %v1365
      %v1374 = vcombine.high %v1372, %v1372
      %v1376 = vunpack.c.l.s4 1966171168
      %v1377 = vunpack.c.0.s8 %v1376
      %v1378 = vlaneseq
      %v1379 = vshrl.u32 %v1378, 7
      %v1380 = vsub.s32 %v1377, %v1379
      %v1381 = vrot.slane %v1365, %v1380
      %v1383 = vunpack.c.l.s4 1966171168
      %v1384 = vunpack.c.0.s8 %v1383
      %v1385 = vlaneseq
      %v1386 = vshrl.u32 %v1385, 7
      %v1387 = vsub.s32 %v1384, %v1386
      %v1388 = vrot.slane %v1372, %v1387
      %v1390 = vunpack.c.l.s4 1966171168
      %v1391 = vunpack.c.0.s8 %v1390
      %v1392 = vlaneseq
      %v1393 = vshrl.u32 %v1392, 7
      %v1394 = vsub.s32 %v1391, %v1393
      %v1395 = vrot.slane %v1373, %v1394
      %v1397 = vunpack.c.l.s4 1966171168
      %v1398 = vunpack.c.0.s8 %v1397
      %v1399 = vlaneseq
      %v1400 = vshrl.u32 %v1399, 7
      %v1401 = vsub.s32 %v1398, %v1400
      %v1402 = vrot.slane %v1374, %v1401
      %v1403 = vcombine.high %v1381, %v1381
      %v1404 = vcombine.high %v1388, %v1388
      %v1405 = vcombine.high %v1395, %v1395
      %v1406 = vcombine.high %v1402, %v1402
      %v1407 = vcombine.high %v1345, %v1345
      %v1409 = vunpack.c.l.s4 1966171168
      %v1410 = vunpack.c.0.s8 %v1409
      %v1411 = vlaneseq
      %v1412 = vshrl.u32 %v1411, 7
      %v1413 = vsub.s32 %v1410, %v1412
      %v1414 = vrot.slane %v1345, %v1413
      %v1416 = vunpack.c.l.s4 1966171168
      %v1417 = vunpack.c.0.s8 %v1416
      %v1418 = vlaneseq
      %v1419 = vshrl.u32 %v1418, 7
      %v1420 = vsub.s32 %v1417, %v1419
      %v1421 = vrot.slane %v1407, %v1420
      %v1422 = vcombine.high %v1414, %v1414
      %v1423 = vcombine.high %v1421, %v1421
      %v1425 = vunpack.c.l.s4 1966171168
      %v1426 = vunpack.c.0.s8 %v1425
      %v1427 = vlaneseq
      %v1428 = vshrl.u32 %v1427, 7
      %v1429 = vsub.s32 %v1426, %v1428
      %v1430 = vrot.slane %v1414, %v1429
      %v1432 = vunpack.c.l.s4 1966171168
      %v1433 = vunpack.c.0.s8 %v1432
      %v1434 = vlaneseq
      %v1435 = vshrl.u32 %v1434, 7
      %v1436 = vsub.s32 %v1433, %v1435
      %v1437 = vrot.slane %v1421, %v1436
      %v1439 = vunpack.c.l.s4 1966171168
      %v1440 = vunpack.c.0.s8 %v1439
      %v1441 = vlaneseq
      %v1442 = vshrl.u32 %v1441, 7
      %v1443 = vsub.s32 %v1440, %v1442
      %v1444 = vrot.slane %v1422, %v1443
      %v1446 = vunpack.c.l.s4 1966171168
      %v1447 = vunpack.c.0.s8 %v1446
      %v1448 = vlaneseq
      %v1449 = vshrl.u32 %v1448, 7
      %v1450 = vsub.s32 %v1447, %v1449
      %v1451 = vrot.slane %v1423, %v1450
      %v1452 = vcombine.high %v1430, %v1430
      %v1453 = vcombine.high %v1437, %v1437
      %v1454 = vcombine.high %v1444, %v1444
      %v1455 = vcombine.high %v1451, %v1451
      %v1456 = vcombine.high %v1346, %v1346
      %v1458 = vunpack.c.l.s4 1966171168
      %v1459 = vunpack.c.0.s8 %v1458
      %v1460 = vlaneseq
      %v1461 = vshrl.u32 %v1460, 7
      %v1462 = vsub.s32 %v1459, %v1461
      %v1463 = vrot.slane %v1346, %v1462
      %v1465 = vunpack.c.l.s4 1966171168
      %v1466 = vunpack.c.0.s8 %v1465
      %v1467 = vlaneseq
      %v1468 = vshrl.u32 %v1467, 7
      %v1469 = vsub.s32 %v1466, %v1468
      %v1470 = vrot.slane %v1456, %v1469
      %v1471 = vcombine.high %v1463, %v1463
      %v1472 = vcombine.high %v1470, %v1470
      %v1474 = vunpack.c.l.s4 1966171168
      %v1475 = vunpack.c.0.s8 %v1474
      %v1476 = vlaneseq
      %v1477 = vshrl.u32 %v1476, 7
      %v1478 = vsub.s32 %v1475, %v1477
      %v1479 = vrot.slane %v1463, %v1478
      %v1481 = vunpack.c.l.s4 1966171168
      %v1482 = vunpack.c.0.s8 %v1481
      %v1483 = vlaneseq
      %v1484 = vshrl.u32 %v1483, 7
      %v1485 = vsub.s32 %v1482, %v1484
      %v1486 = vrot.slane %v1470, %v1485
      %v1488 = vunpack.c.l.s4 1966171168
      %v1489 = vunpack.c.0.s8 %v1488
      %v1490 = vlaneseq
      %v1491 = vshrl.u32 %v1490, 7
      %v1492 = vsub.s32 %v1489, %v1491
      %v1493 = vrot.slane %v1471, %v1492
      %v1495 = vunpack.c.l.s4 1966171168
      %v1496 = vunpack.c.0.s8 %v1495
      %v1497 = vlaneseq
      %v1498 = vshrl.u32 %v1497, 7
      %v1499 = vsub.s32 %v1496, %v1498
      %v1500 = vrot.slane %v1472, %v1499
      %v1501 = vcombine.high %v1479, %v1479
      %v1502 = vcombine.high %v1486, %v1486
      %v1503 = vcombine.high %v1493, %v1493
      %v1504 = vcombine.high %v1500, %v1500
      %v1505 = vcombine.high %v1347, %v1347
      %v1507 = vunpack.c.l.s4 1966171168
      %v1508 = vunpack.c.0.s8 %v1507
      %v1509 = vlaneseq
      %v1510 = vshrl.u32 %v1509, 7
      %v1511 = vsub.s32 %v1508, %v1510
      %v1512 = vrot.slane %v1347, %v1511
      %v1514 = vunpack.c.l.s4 1966171168
      %v1515 = vunpack.c.0.s8 %v1514
      %v1516 = vlaneseq
      %v1517 = vshrl.u32 %v1516, 7
      %v1518 = vsub.s32 %v1515, %v1517
      %v1519 = vrot.slane %v1505, %v1518
      %v1520 = vcombine.high %v1512, %v1512
      %v1521 = vcombine.high %v1519, %v1519
      %v1523 = vunpack.c.l.s4 1966171168
      %v1524 = vunpack.c.0.s8 %v1523
      %v1525 = vlaneseq
      %v1526 = vshrl.u32 %v1525, 7
      %v1527 = vsub.s32 %v1524, %v1526
      %v1528 = vrot.slane %v1512, %v1527
      %v1530 = vunpack.c.l.s4 1966171168
      %v1531 = vunpack.c.0.s8 %v1530
      %v1532 = vlaneseq
      %v1533 = vshrl.u32 %v1532, 7
      %v1534 = vsub.s32 %v1531, %v1533
      %v1535 = vrot.slane %v1519, %v1534
      %v1537 = vunpack.c.l.s4 1966171168
      %v1538 = vunpack.c.0.s8 %v1537
      %v1539 = vlaneseq
      %v1540 = vshrl.u32 %v1539, 7
      %v1541 = vsub.s32 %v1538, %v1540
      %v1542 = vrot.slane %v1520, %v1541
      %v1544 = vunpack.c.l.s4 1966171168
      %v1545 = vunpack.c.0.s8 %v1544
      %v1546 = vlaneseq
      %v1547 = vshrl.u32 %v1546, 7
      %v1548 = vsub.s32 %v1545, %v1547
      %v1549 = vrot.slane %v1521, %v1548
      %v1550 = vcombine.high %v1528, %v1528
      %v1551 = vcombine.high %v1535, %v1535
      %v1552 = vcombine.high %v1542, %v1542
      %v1553 = vcombine.high %v1549, %v1549
      %v1554 = vcombine.high %v1348, %v1348
      %v1556 = vunpack.c.l.s4 1966171168
      %v1557 = vunpack.c.0.s8 %v1556
      %v1558 = vlaneseq
      %v1559 = vshrl.u32 %v1558, 7
      %v1560 = vsub.s32 %v1557, %v1559
      %v1561 = vrot.slane %v1348, %v1560
      %v1563 = vunpack.c.l.s4 1966171168
      %v1564 = vunpack.c.0.s8 %v1563
      %v1565 = vlaneseq
      %v1566 = vshrl.u32 %v1565, 7
      %v1567 = vsub.s32 %v1564, %v1566
      %v1568 = vrot.slane %v1554, %v1567
      %v1569 = vcombine.high %v1561, %v1561
      %v1570 = vcombine.high %v1568, %v1568
      %v1572 = vunpack.c.l.s4 1966171168
      %v1573 = vunpack.c.0.s8 %v1572
      %v1574 = vlaneseq
      %v1575 = vshrl.u32 %v1574, 7
      %v1576 = vsub.s32 %v1573, %v1575
      %v1577 = vrot.slane %v1561, %v1576
      %v1579 = vunpack.c.l.s4 1966171168
      %v1580 = vunpack.c.0.s8 %v1579
      %v1581 = vlaneseq
      %v1582 = vshrl.u32 %v1581, 7
      %v1583 = vsub.s32 %v1580, %v1582
      %v1584 = vrot.slane %v1568, %v1583
      %v1586 = vunpack.c.l.s4 1966171168
      %v1587 = vunpack.c.0.s8 %v1586
      %v1588 = vlaneseq
      %v1589 = vshrl.u32 %v1588, 7
      %v1590 = vsub.s32 %v1587, %v1589
      %v1591 = vrot.slane %v1569, %v1590
      %v1593 = vunpack.c.l.s4 1966171168
      %v1594 = vunpack.c.0.s8 %v1593
      %v1595 = vlaneseq
      %v1596 = vshrl.u32 %v1595, 7
      %v1597 = vsub.s32 %v1594, %v1596
      %v1598 = vrot.slane %v1570, %v1597
      %v1599 = vcombine.high %v1577, %v1577
      %v1600 = vcombine.high %v1584, %v1584
      %v1601 = vcombine.high %v1591, %v1591
      %v1602 = vcombine.high %v1598, %v1598
      %v1603 = vcombine.high %v1349, %v1349
      %v1605 = vunpack.c.l.s4 1966171168
      %v1606 = vunpack.c.0.s8 %v1605
      %v1607 = vlaneseq
      %v1608 = vshrl.u32 %v1607, 7
      %v1609 = vsub.s32 %v1606, %v1608
      %v1610 = vrot.slane %v1349, %v1609
      %v1612 = vunpack.c.l.s4 1966171168
      %v1613 = vunpack.c.0.s8 %v1612
      %v1614 = vlaneseq
      %v1615 = vshrl.u32 %v1614, 7
      %v1616 = vsub.s32 %v1613, %v1615
      %v1617 = vrot.slane %v1603, %v1616
      %v1618 = vcombine.high %v1610, %v1610
      %v1619 = vcombine.high %v1617, %v1617
      %v1621 = vunpack.c.l.s4 1966171168
      %v1622 = vunpack.c.0.s8 %v1621
      %v1623 = vlaneseq
      %v1624 = vshrl.u32 %v1623, 7
      %v1625 = vsub.s32 %v1622, %v1624
      %v1626 = vrot.slane %v1610, %v1625
      %v1628 = vunpack.c.l.s4 1966171168
      %v1629 = vunpack.c.0.s8 %v1628
      %v1630 = vlaneseq
      %v1631 = vshrl.u32 %v1630, 7
      %v1632 = vsub.s32 %v1629, %v1631
      %v1633 = vrot.slane %v1617, %v1632
      %v1635 = vunpack.c.l.s4 1966171168
      %v1636 = vunpack.c.0.s8 %v1635
      %v1637 = vlaneseq
      %v1638 = vshrl.u32 %v1637, 7
      %v1639 = vsub.s32 %v1636, %v1638
      %v1640 = vrot.slane %v1618, %v1639
      %v1642 = vunpack.c.l.s4 1966171168
      %v1643 = vunpack.c.0.s8 %v1642
      %v1644 = vlaneseq
      %v1645 = vshrl.u32 %v1644, 7
      %v1646 = vsub.s32 %v1643, %v1645
      %v1647 = vrot.slane %v1619, %v1646
      %v1648 = vcombine.high %v1626, %v1626
      %v1649 = vcombine.high %v1633, %v1633
      %v1650 = vcombine.high %v1640, %v1640
      %v1651 = vcombine.high %v1647, %v1647
      %v1653 = vunpack.c.l.s4 1966171168
      %v1654 = vunpack.c.0.s8 %v1653
      %v1655 = vlaneseq
      %v1656 = vshrl.u32 %v1655, 7
      %v1657 = vsub.s32 %v1654, %v1656
      %v1658 = vrot.slane %v1350, %v1657
      %v1660 = vunpack.c.l.s4 1966171168
      %v1661 = vunpack.c.0.s8 %v1660
      %v1662 = vlaneseq
      %v1663 = vshrl.u32 %v1662, 7
      %v1664 = vsub.s32 %v1661, %v1663
      %v1665 = vrot.slane %v1658, %v1664
      %v1666 = vcombine.low %v1381, %v1395
      %v1667 = vcombine.low %v1403, %v1405
      %v1668 = vcombine.low %v1388, %v1402
      %v1670 = vunpack.c.l.s4 1966171168
      %v1671 = vunpack.c.0.s8 %v1670
      %v1672 = vlaneseq
      %v1673 = vshrl.u32 %v1672, 7
      %v1674 = vsub.s32 %v1671, %v1673
      %v1675 = vrot.slane %v1666, %v1674
      %v1677 = vunpack.c.l.s4 1966171168
      %v1678 = vunpack.c.0.s8 %v1677
      %v1679 = vlaneseq
      %v1680 = vshrl.u32 %v1679, 7
      %v1681 = vsub.s32 %v1678, %v1680
      %v1682 = vrot.slane %v1667, %v1681
      %v1684 = vunpack.c.l.s4 1966171168
      %v1685 = vunpack.c.0.s8 %v1684
      %v1686 = vlaneseq
      %v1687 = vshrl.u32 %v1686, 7
      %v1688 = vsub.s32 %v1685, %v1687
      %v1689 = vrot.slane %v1668, %v1688
      %v1691 = vunpack.c.l.s4 1966171168
      %v1692 = vunpack.c.0.s8 %v1691
      %v1693 = vlaneseq
      %v1694 = vshrl.u32 %v1693, 7
      %v1695 = vsub.s32 %v1692, %v1694
      %v1696 = vrot.slane %v1404, %v1695
      %v1697 = vcombine.low %v1675, %v1682
      %v1698 = vcombine.low %v1689, %v1696
      %v1700 = vunpack.c.l.s4 1966171168
      %v1701 = vunpack.c.0.s8 %v1700
      %v1702 = vlaneseq
      %v1703 = vshrl.u32 %v1702, 7
      %v1704 = vsub.s32 %v1701, %v1703
      %v1705 = vrot.slane %v1697, %v1704
      %v1707 = vunpack.c.l.s4 1966171168
      %v1708 = vunpack.c.0.s8 %v1707
      %v1709 = vlaneseq
      %v1710 = vshrl.u32 %v1709, 7
      %v1711 = vsub.s32 %v1708, %v1710
      %v1712 = vrot.slane %v1698, %v1711
      %v1713 = vcombine.low %v1705, %v1712
      %v1714 = vcombine.low %v1406, %v1430
      %v1715 = vcombine.low %v1444, %v1452
      %v1716 = vcombine.low %v1454, %v1437
      %v1718 = vunpack.c.l.s4 1966171168
      %v1719 = vunpack.c.0.s8 %v1718
      %v1720 = vlaneseq
      %v1721 = vshrl.u32 %v1720, 7
      %v1722 = vsub.s32 %v1719, %v1721
      %v1723 = vrot.slane %v1714, %v1722
      %v1725 = vunpack.c.l.s4 1966171168
      %v1726 = vunpack.c.0.s8 %v1725
      %v1727 = vlaneseq
      %v1728 = vshrl.u32 %v1727, 7
      %v1729 = vsub.s32 %v1726, %v1728
      %v1730 = vrot.slane %v1715, %v1729
      %v1732 = vunpack.c.l.s4 1966171168
      %v1733 = vunpack.c.0.s8 %v1732
      %v1734 = vlaneseq
      %v1735 = vshrl.u32 %v1734, 7
      %v1736 = vsub.s32 %v1733, %v1735
      %v1737 = vrot.slane %v1716, %v1736
      %v1739 = vunpack.c.l.s4 1966171168
      %v1740 = vunpack.c.0.s8 %v1739
      %v1741 = vlaneseq
      %v1742 = vshrl.u32 %v1741, 7
      %v1743 = vsub.s32 %v1740, %v1742
      %v1744 = vrot.slane %v1451, %v1743
      %v1745 = vcombine.low %v1723, %v1730
      %v1746 = vcombine.low %v1737, %v1744
      %v1748 = vunpack.c.l.s4 1966171168
      %v1749 = vunpack.c.0.s8 %v1748
      %v1750 = vlaneseq
      %v1751 = vshrl.u32 %v1750, 7
      %v1752 = vsub.s32 %v1749, %v1751
      %v1753 = vrot.slane %v1745, %v1752
      %v1755 = vunpack.c.l.s4 1966171168
      %v1756 = vunpack.c.0.s8 %v1755
      %v1757 = vlaneseq
      %v1758 = vshrl.u32 %v1757, 7
      %v1759 = vsub.s32 %v1756, %v1758
      %v1760 = vrot.slane %v1746, %v1759
      %v1761 = vcombine.low %v1753, %v1760
      %v1762 = vcombine.low %v1453, %v1455
      %v1763 = vcombine.low %v1479, %v1493
      %v1764 = vcombine.low %v1501, %v1503
      %v1766 = vunpack.c.l.s4 1966171168
      %v1767 = vunpack.c.0.s8 %v1766
      %v1768 = vlaneseq
      %v1769 = vshrl.u32 %v1768, 7
      %v1770 = vsub.s32 %v1767, %v1769
      %v1771 = vrot.slane %v1762, %v1770
      %v1773 = vunpack.c.l.s4 1966171168
      %v1774 = vunpack.c.0.s8 %v1773
      %v1775 = vlaneseq
      %v1776 = vshrl.u32 %v1775, 7
      %v1777 = vsub.s32 %v1774, %v1776
      %v1778 = vrot.slane %v1763, %v1777
      %v1780 = vunpack.c.l.s4 1966171168
      %v1781 = vunpack.c.0.s8 %v1780
      %v1782 = vlaneseq
      %v1783 = vshrl.u32 %v1782, 7
      %v1784 = vsub.s32 %v1781, %v1783
      %v1785 = vrot.slane %v1764, %v1784
      %v1787 = vunpack.c.l.s4 1966171168
      %v1788 = vunpack.c.0.s8 %v1787
      %v1789 = vlaneseq
      %v1790 = vshrl.u32 %v1789, 7
      %v1791 = vsub.s32 %v1788, %v1790
      %v1792 = vrot.slane %v1486, %v1791
      %v1793 = vcombine.low %v1771, %v1778
      %v1794 = vcombine.low %v1785, %v1792
      %v1796 = vunpack.c.l.s4 1966171168
      %v1797 = vunpack.c.0.s8 %v1796
      %v1798 = vlaneseq
      %v1799 = vshrl.u32 %v1798, 7
      %v1800 = vsub.s32 %v1797, %v1799
      %v1801 = vrot.slane %v1793, %v1800
      %v1803 = vunpack.c.l.s4 1966171168
      %v1804 = vunpack.c.0.s8 %v1803
      %v1805 = vlaneseq
      %v1806 = vshrl.u32 %v1805, 7
      %v1807 = vsub.s32 %v1804, %v1806
      %v1808 = vrot.slane %v1794, %v1807
      %v1809 = vcombine.low %v1801, %v1808
      %v1810 = vcombine.low %v1500, %v1502
      %v1811 = vcombine.low %v1504, %v1528
      %v1812 = vcombine.low %v1542, %v1550
      %v1814 = vunpack.c.l.s4 1966171168
      %v1815 = vunpack.c.0.s8 %v1814
      %v1816 = vlaneseq
      %v1817 = vshrl.u32 %v1816, 7
      %v1818 = vsub.s32 %v1815, %v1817
      %v1819 = vrot.slane %v1810, %v1818
      %v1821 = vunpack.c.l.s4 1966171168
      %v1822 = vunpack.c.0.s8 %v1821
      %v1823 = vlaneseq
      %v1824 = vshrl.u32 %v1823, 7
      %v1825 = vsub.s32 %v1822, %v1824
      %v1826 = vrot.slane %v1811, %v1825
      %v1828 = vunpack.c.l.s4 1966171168
      %v1829 = vunpack.c.0.s8 %v1828
      %v1830 = vlaneseq
      %v1831 = vshrl.u32 %v1830, 7
      %v1832 = vsub.s32 %v1829, %v1831
      %v1833 = vrot.slane %v1812, %v1832
      %v1835 = vunpack.c.l.s4 1966171168
      %v1836 = vunpack.c.0.s8 %v1835
      %v1837 = vlaneseq
      %v1838 = vshrl.u32 %v1837, 7
      %v1839 = vsub.s32 %v1836, %v1838
      %v1840 = vrot.slane %v1552, %v1839
      %v1841 = vcombine.low %v1819, %v1826
      %v1842 = vcombine.low %v1833, %v1840
      %v1844 = vunpack.c.l.s4 1966171168
      %v1845 = vunpack.c.0.s8 %v1844
      %v1846 = vlaneseq
      %v1847 = vshrl.u32 %v1846, 7
      %v1848 = vsub.s32 %v1845, %v1847
      %v1849 = vrot.slane %v1841, %v1848
      %v1851 = vunpack.c.l.s4 1966171168
      %v1852 = vunpack.c.0.s8 %v1851
      %v1853 = vlaneseq
      %v1854 = vshrl.u32 %v1853, 7
      %v1855 = vsub.s32 %v1852, %v1854
      %v1856 = vrot.slane %v1842, %v1855
      %v1857 = vcombine.low %v1849, %v1856
      %v1858 = vcombine.low %v1535, %v1549
      %v1859 = vcombine.low %v1551, %v1553
      %v1860 = vcombine.low %v1577, %v1591
      %v1862 = vunpack.c.l.s4 1966171168
      %v1863 = vunpack.c.0.s8 %v1862
      %v1864 = vlaneseq
      %v1865 = vshrl.u32 %v1864, 7
      %v1866 = vsub.s32 %v1863, %v1865
      %v1867 = vrot.slane %v1858, %v1866
      %v1869 = vunpack.c.l.s4 1966171168
      %v1870 = vunpack.c.0.s8 %v1869
      %v1871 = vlaneseq
      %v1872 = vshrl.u32 %v1871, 7
      %v1873 = vsub.s32 %v1870, %v1872
      %v1874 = vrot.slane %v1859, %v1873
      %v1876 = vunpack.c.l.s4 1966171168
      %v1877 = vunpack.c.0.s8 %v1876
      %v1878 = vlaneseq
      %v1879 = vshrl.u32 %v1878, 7
      %v1880 = vsub.s32 %v1877, %v1879
      %v1881 = vrot.slane %v1860, %v1880
      %v1883 = vunpack.c.l.s4 1966171168
      %v1884 = vunpack.c.0.s8 %v1883
      %v1885 = vlaneseq
      %v1886 = vshrl.u32 %v1885, 7
      %v1887 = vsub.s32 %v1884, %v1886
      %v1888 = vrot.slane %v1599, %v1887
      %v1889 = vcombine.low %v1867, %v1874
      %v1890 = vcombine.low %v1881, %v1888
      %v1892 = vunpack.c.l.s4 1966171168
      %v1893 = vunpack.c.0.s8 %v1892
      %v1894 = vlaneseq
      %v1895 = vshrl.u32 %v1894, 7
      %v1896 = vsub.s32 %v1893, %v1895
      %v1897 = vrot.slane %v1889, %v1896
      %v1899 = vunpack.c.l.s4 1966171168
      %v1900 = vunpack.c.0.s8 %v1899
      %v1901 = vlaneseq
      %v1902 = vshrl.u32 %v1901, 7
      %v1903 = vsub.s32 %v1900, %v1902
      %v1904 = vrot.slane %v1890, %v1903
      %v1905 = vcombine.low %v1897, %v1904
      %v1906 = vcombine.low %v1601, %v1584
      %v1907 = vcombine.low %v1598, %v1600
      %v1908 = vcombine.low %v1602, %v1626
      %v1910 = vunpack.c.l.s4 1966171168
      %v1911 = vunpack.c.0.s8 %v1910
      %v1912 = vlaneseq
      %v1913 = vshrl.u32 %v1912, 7
      %v1914 = vsub.s32 %v1911, %v1913
      %v1915 = vrot.slane %v1906, %v1914
      %v1917 = vunpack.c.l.s4 1966171168
      %v1918 = vunpack.c.0.s8 %v1917
      %v1919 = vlaneseq
      %v1920 = vshrl.u32 %v1919, 7
      %v1921 = vsub.s32 %v1918, %v1920
      %v1922 = vrot.slane %v1907, %v1921
      %v1924 = vunpack.c.l.s4 1966171168
      %v1925 = vunpack.c.0.s8 %v1924
      %v1926 = vlaneseq
      %v1927 = vshrl.u32 %v1926, 7
      %v1928 = vsub.s32 %v1925, %v1927
      %v1929 = vrot.slane %v1908, %v1928
      %v1931 = vunpack.c.l.s4 1966171168
      %v1932 = vunpack.c.0.s8 %v1931
      %v1933 = vlaneseq
      %v1934 = vshrl.u32 %v1933, 7
      %v1935 = vsub.s32 %v1932, %v1934
      %v1936 = vrot.slane %v1640, %v1935
      %v1937 = vcombine.low %v1915, %v1922
      %v1938 = vcombine.low %v1929, %v1936
      %v1940 = vunpack.c.l.s4 1966171168
      %v1941 = vunpack.c.0.s8 %v1940
      %v1942 = vlaneseq
      %v1943 = vshrl.u32 %v1942, 7
      %v1944 = vsub.s32 %v1941, %v1943
      %v1945 = vrot.slane %v1937, %v1944
      %v1947 = vunpack.c.l.s4 1966171168
      %v1948 = vunpack.c.0.s8 %v1947
      %v1949 = vlaneseq
      %v1950 = vshrl.u32 %v1949, 7
      %v1951 = vsub.s32 %v1948, %v1950
      %v1952 = vrot.slane %v1938, %v1951
      %v1953 = vcombine.low %v1945, %v1952
      %v1954 = vcombine.low %v1648, %v1650
      %v1955 = vcombine.low %v1633, %v1647
      %v1956 = vcombine.low %v1649, %v1651
      %v1958 = vunpack.c.l.s4 1966171168
      %v1959 = vunpack.c.0.s8 %v1958
      %v1960 = vlaneseq
      %v1961 = vshrl.u32 %v1960, 7
      %v1962 = vsub.s32 %v1959, %v1961
      %v1963 = vrot.slane %v1954, %v1962
      %v1965 = vunpack.c.l.s4 1966171168
      %v1966 = vunpack.c.0.s8 %v1965
      %v1967 = vlaneseq
      %v1968 = vshrl.u32 %v1967, 7
      %v1969 = vsub.s32 %v1966, %v1968
      %v1970 = vrot.slane %v1955, %v1969
      %v1972 = vunpack.c.l.s4 1966171168
      %v1973 = vunpack.c.0.s8 %v1972
      %v1974 = vlaneseq
      %v1975 = vshrl.u32 %v1974, 7
      %v1976 = vsub.s32 %v1973, %v1975
      %v1977 = vrot.slane %v1956, %v1976
      %v1979 = vunpack.c.l.s4 1966171168
      %v1980 = vunpack.c.0.s8 %v1979
      %v1981 = vlaneseq
      %v1982 = vshrl.u32 %v1981, 7
      %v1983 = vsub.s32 %v1980, %v1982
      %v1984 = vrot.slane %v1665, %v1983
      %v1985 = vcombine.low %v1963, %v1970
      %v1986 = vcombine.low %v1977, %v1984
      %v1988 = vunpack.c.l.s4 1966171168
      %v1989 = vunpack.c.0.s8 %v1988
      %v1990 = vlaneseq
      %v1991 = vshrl.u32 %v1990, 7
      %v1992 = vsub.s32 %v1989, %v1991
      %v1993 = vrot.slane %v1985, %v1992
      %v1995 = vunpack.c.l.s4 1966171168
      %v1996 = vunpack.c.0.s8 %v1995
      %v1997 = vlaneseq
      %v1998 = vshrl.u32 %v1997, 7
      %v1999 = vsub.s32 %v1996, %v1998
      %v2000 = vrot.slane %v1986, %v1999
      %v2001 = vcombine.low %v1993, %v2000
      %v2009 = vpack.c.bf16 %v1713, %v1713
      %v2010 = vpack.c.bf16 %v1761, %v1761
      %v2011 = vpack.c.bf16 %v1809, %v1809
      %v2012 = vpack.c.bf16 %v1857, %v1857
      %v2013 = vpack.c.bf16 %v1905, %v1905
      %v2014 = vpack.c.bf16 %v1953, %v1953
      %v2015 = vpack.c.bf16 %v2001, %v2001
      %vm2016 = vcmask 1043456
      %vm2017 = vsmask.f32 3328
      %vm2018 = vmand %vm2016, %vm2017
      %v2019 = vld [vmem:[%s170] sm:$0xf]
      %v2020 = vsel %vm2018, %v2009, %v2019
      %2021 = vst [vmem:[%s170] sm:$0xf] %v2020
      %v2022 = vld [vmem:[%s170 + $0x4] sm:$0xf]
      %v2023 = vsel %vm2018, %v2010, %v2022
      %2024 = vst [vmem:[%s170 + $0x4] sm:$0xf] %v2023
      %v2025 = vld [vmem:[%s170 + $0x8] sm:$0xf]
      %v2026 = vsel %vm2018, %v2011, %v2025
      %2027 = vst [vmem:[%s170 + $0x8] sm:$0xf] %v2026
      %v2028 = vld [vmem:[%s170 + $0xc] sm:$0xf]
      %v2029 = vsel %vm2018, %v2012, %v2028
      %2030 = vst [vmem:[%s170 + $0xc] sm:$0xf] %v2029
      %v2031 = vld [vmem:[%s170 + $0x10] sm:$0xf]
      %v2032 = vsel %vm2018, %v2013, %v2031
      %2033 = vst [vmem:[%s170 + $0x10] sm:$0xf] %v2032
      %v2034 = vld [vmem:[%s170 + $0x14] sm:$0xf]
      %v2035 = vsel %vm2018, %v2014, %v2034
      %2036 = vst [vmem:[%s170 + $0x14] sm:$0xf] %v2035
      %v2037 = vld [vmem:[%s170 + $0x18] sm:$0xf]
      %v2038 = vsel %vm2018, %v2015, %v2037
      %2039 = vst [vmem:[%s170 + $0x18] sm:$0xf] %v2038
      %p2040 = scmp.lt.s32.totalorder %s14, 1
      %s2041 = scalar_select %p2040, %s14, 1
      %s2042 = smul.addr %s2041, 7
      %s2043 = smul.addr %s2042, 4
      %s2044 = scalar_lea.vmem %s3, %s2043
      // Predicated region
      $region33: #{cnn_fashion_mnist_forward.3} parent=31 // pred_check
        %p2045 = pneg %p100
      $region34: #{cnn_fashion_mnist_forward.3} parent=31 // pred_check_branch
        %2047 = sbr.rel (%p2045) target = $region36
      $region35: #{cnn_fashion_mnist_forward.3} parent=31 // pred_region
        _
      $region36: #{cnn_fashion_mnist_forward.3} parent=31 // pred_fallthru
        _
    $region32: #{cnn_fashion_mnist_forward.3} parent=5 // pred_fallthru
      _
    %p2048 = scmp.le.s32.totalorder 2, %s9
    // Predicated region
    $region37: #{cnn_fashion_mnist_forward.3} parent=5 // pred_check
      %p2049 = pneg %p2048
    $region38: #{cnn_fashion_mnist_forward.3} parent=5 // pred_check_branch
      %2051 = sbr.rel (%p2049) target = $region40
    $region39: #{cnn_fashion_mnist_forward.3} parent=5 // pred_region
      %s2052 = ssub.s32 %s9, 2
      // Predicated region
      $region41: #{cnn_fashion_mnist_forward.3} parent=39 // pred_check
        %p2053 = pneg %p106
      $region42: #{cnn_fashion_mnist_forward.3} parent=39 // pred_check_branch
        %2055 = sbr.rel (%p2053) target = $region44
      $region43: #{cnn_fashion_mnist_forward.3} parent=39 // pred_region
        %p2056 = scmp.lt.s32.totalorder %s15, 1
        %s2057 = scalar_select %p2056, %s15, 1
        %s2058 = smul.addr %s2057, 7
        %s2059 = smul.addr %s2058, 4
        %s2060 = scalar_lea.vmem %s3, %s2059
      $region44: #{cnn_fashion_mnist_forward.3} parent=39 // pred_fallthru
        _
    $region40: #{cnn_fashion_mnist_forward.3} parent=5 // pred_fallthru
      _
  $region6: #{cnn_fashion_mnist_forward.3} parent=0 // loop_footer
    %s13 = sadd.s32 1, %s9
  $region7: #{cnn_fashion_mnist_forward.3} parent=0 // loop_footer_branch
    %8 = sbr.rel target = $region3
  $region8: #{cnn_fashion_mnist_forward.3} parent=0 // loop_exit
    _

</llo_original>
